<compile_context>
chip_gen: v7x
topology: tpu7x:2x2x1
jax: 0.10.0
libtpu: 0.0.40
codegen_flags: <defaults>
</compile_context>

<pallas_src>
import functools

import jax
import jax.numpy as jnp
import numpy as np
from jax import lax
from jax.experimental import pallas as pl
from jax.experimental.pallas import tpu as pltpu


def _round_up(x, m):
    return ((x + m - 1) // m) * m


def _pick_mat(n_rows, n_cols, mode):
    """Tiny 0/1 f32 matrix built from iota (O(W^2), reused across rows).

    mode='decimate': M[s, k] = 1 iff s == 2k  (right-mult keeps every other col)
    mode='dilate'  : M[j, d] = 1 iff d == 2j  (right-mult spreads cols with 0s)
    """
    r = lax.broadcasted_iota(jnp.int32, (n_rows, n_cols), 0)
    c = lax.broadcasted_iota(jnp.int32, (n_rows, n_cols), 1)
    m = (r == 2 * c) if mode == "decimate" else (c == 2 * r)
    return m.astype(jnp.float32)


# ---------------------------------------------------------------------------
# Fused Pallas kernel (whole forward pass for a block of Bt images)
# ---------------------------------------------------------------------------
def _radar_ae2_kernel(x_ref, w_ref, rec_ref, h1_ref, h2_ref,
                      f1, f2, f3, f4, f5, f6,
                      *, H, W, Cin, l2, Cpad, Bt):
    H2, W2, H4, W4 = H // 2, W // 2, H // 4, W // 4
    Wp, Wp2, Wp4 = W + 2, W2 + 2, W4 + 2
    Lp, Lp2, Lp4 = (H + 2) * Wp, (H2 + 2) * Wp2, (H4 + 2) * Wp4

    def conv(Fv, layer, h, w, stride, relu):
        """Fused 3x3 conv over a channel-major zero-padded flat buffer.

        Fv: (Cpad, Bt*stride) f32.  One MXU matmul with K = 9*Cpad.
        Returns the f32 'wide' output (Cpad, m); wrap/pad columns are garbage
        and are never read by the consumers below.
        """
        wp = w + 2
        m = (Bt - 1) * stride + (h - 1) * wp + w
        offs = [dy * wp + dx for dy in range(3) for dx in range(3)]
        # 9 shifted slices stacked on the contracting axis (8-row aligned).
        lhs = jnp.concatenate([Fv[:, o:o + m] for o in offs], axis=0)
        lhs = lhs.astype(jnp.bfloat16)                       # one cast per conv
        out = jnp.dot(w_ref[layer], lhs, preferred_element_type=jnp.float32)
        return jnp.maximum(out, 0.0) if relu else out

    def pool_into(ow, h_src, w_src, stride_src, dst_ref, stride_dst):
        """2x2 max-pool a wide conv output into the next padded buffer."""
        wp_s, w_d = w_src + 2, w_src // 2
        wp_d = w_d + 2
        dec = _pick_mat(w_src - 1, w_d, "decimate")          # (w_src-1, w_d)
        for bt in range(Bt):
            for y in range(h_src // 2):
                s0 = bt * stride_src + 2 * y * wp_s
                a = ow[:, s0:s0 + w_src]
                b = ow[:, s0 + wp_s:s0 + wp_s + w_src]
                v = jnp.maximum(a, b)                        # vertical pair max
                hp = jnp.maximum(v[:, :w_src - 1], v[:, 1:])  # + horizontal
                pooled = jnp.dot(hp, dec, preferred_element_type=jnp.float32)
                d0 = bt * stride_dst + (y + 1) * wp_d + 1
                dst_ref[:, d0:d0 + w_d] = pooled.astype(dst_ref.dtype)

    def dilate_into(ow, h_src, w_src, stride_src, dst_ref, stride_dst):
        """Zero-dilate (stride-2 ConvTranspose input) into a padded buffer."""
        wp_s, w_d = w_src + 2, 2 * w_src
        wp_d = w_d + 2
        up = _pick_mat(w_src, w_d, "dilate")                 # (w_src, w_d)
        for bt in range(Bt):
            for i in range(h_src):
                s0 = bt * stride_src + i * wp_s
                row = ow[:, s0:s0 + w_src]
                drow = jnp.dot(row, up, preferred_element_type=jnp.float32)
                d0 = bt * stride_dst + (2 * i + 1) * wp_d + 1
                dst_ref[:, d0:d0 + w_d] = drow.astype(dst_ref.dtype)

    def pad_and_emit(ow, h_src, w_src, stride_src, dst_ref, stride_dst,
                     out_ref, out_rows):
        """Copy conv rows into the next padded buffer and/or a lane-dense
        (Bt, C, h*w) output block."""
        wp_s = w_src + 2
        for bt in range(Bt):
            for y in range(h_src):
                s0 = bt * stride_src + y * wp_s
                row = ow[:, s0:s0 + w_src]
                if dst_ref is not None:
                    d0 = bt * stride_dst + (y + 1) * wp_s + 1
                    dst_ref[:, d0:d0 + w_src] = row.astype(dst_ref.dtype)
                if out_ref is not None:
                    out_ref[bt, :, y * w_src:(y + 1) * w_src] = row[:out_rows, :]

    # Padding borders / dilation holes / unused channel rows must be zero.
    for f in (f1, f2, f3, f4, f5, f6):
        f[...] = jnp.zeros(f.shape, f.dtype)

    xv = x_ref[0]                                            # (Cpad, Bt*Lp) f32

    # encoder1: Conv+ReLU -> MaxPool(2,2) -> Conv+ReLU
    ow1 = conv(xv, 0, H, W, Lp, relu=True)
    pool_into(ow1, H, W, Lp, f1, Lp2)
    ow2 = conv(f1[...], 1, H2, W2, Lp2, relu=True)           # h1
    pad_and_emit(ow2, H2, W2, Lp2, f2, Lp2, h1_ref, l2)

    # encoder2: Conv+ReLU -> MaxPool(2,2) -> Conv+ReLU
    ow3 = conv(f2[...], 2, H2, W2, Lp2, relu=True)
    pool_into(ow3, H2, W2, Lp2, f3, Lp4)
    ow4 = conv(f3[...], 3, H4, W4, Lp4, relu=True)           # encoded image

    # decoder1: ConvTranspose(stride=2, pad=1, out_pad=1) + ReLU
    dilate_into(ow4, H4, W4, Lp4, f4, Lp2)
    ow5 = conv(f4[...], 4, H2, W2, Lp2, relu=True)           # h2
    pad_and_emit(ow5, H2, W2, Lp2, f5, Lp2, h2_ref, l2)

    # decoder2: ConvTranspose(stride=1)+ReLU -> ConvTranspose(stride=2)
    ow6 = conv(f5[...], 5, H2, W2, Lp2, relu=True)
    dilate_into(ow6, H2, W2, Lp2, f6, Lp)
    ow7 = conv(f6[...], 6, H, W, Lp, relu=False)
    pad_and_emit(ow7, H, W, Lp, None, None, rec_ref, Cin)


# ---------------------------------------------------------------------------
# Parameters + public forward
# ---------------------------------------------------------------------------
def init_params(key, in_channels):
    l1, l2, l3, l4 = (in_channels - 1, in_channels - 2,
                      in_channels - 3, in_channels - 4)

    def conv_w(k, cout, cin):   # PyTorch Conv2d weight layout: OIHW
        return jax.random.normal(k, (cout, cin, 3, 3), jnp.float32) / np.sqrt(9 * cin)

    def convt_w(k, cin, cout):  # PyTorch ConvTranspose2d weight layout: IOHW
        return jax.random.normal(k, (cin, cout, 3, 3), jnp.float32) / np.sqrt(9 * cin)

    ks = jax.random.split(key, 7)
    return dict(
        e1c1=conv_w(ks[0], l1, in_channels),
        e1c2=conv_w(ks[1], l2, l1),
        e2c1=conv_w(ks[2], l3, l2),
        e2c2=conv_w(ks[3], l4, l3),
        d1t1=convt_w(ks[4], l4, l2),
        d2t1=convt_w(ks[5], l2, l1),
        d2t2=convt_w(ks[6], l1, in_channels),
    )


def radar_ae2_forward(x_nchw, params, *, block_batch=1):
    """Returns (reconstructed_img, h1, h2) in NCHW, matching the torch module."""
    B, Cin, H, W = x_nchw.shape
    assert H % 4 == 0 and W % 4 == 0, "two 2x2 maxpools require H, W % 4 == 0"
    assert Cin >= 5, "module uses in_channels - 4 bottleneck channels"
    Bt = block_batch
    assert B % Bt == 0
    G = B // Bt

    l2 = Cin - 2
    H2, W2, H4, W4 = H // 2, W // 2, H // 4, W // 4
    Wp, Wp2, Wp4 = W + 2, W2 + 2, W4 + 2
    Lp, Lp2, Lp4 = (H + 2) * Wp, (H2 + 2) * Wp2, (H4 + 2) * Wp4
    Cpad = _round_up(Cin, 8)

    # ---- pack all 7 kernels into ONE (7, Cpad, 9*Cpad) bf16 array -----------
    def conv_taps(w_oihw):      # Conv2d OIHW -> (Cout_pad, 9*Cin_pad)
        cout, cin = w_oihw.shape[0], w_oihw.shape[1]
        t = jnp.transpose(w_oihw, (2, 3, 1, 0))              # (3,3,cin,cout)
        t = jnp.pad(t, ((0, 0), (0, 0), (0, Cpad - cin), (0, Cpad - cout)))
        return jnp.transpose(t, (3, 0, 1, 2)).reshape(Cpad, 9 * Cpad)

    def deconv_taps(w_iohw):    # ConvTranspose2d IOHW, spatially flipped
        cin, cout = w_iohw.shape[0], w_iohw.shape[1]
        t = jnp.transpose(w_iohw[:, :, ::-1, ::-1], (2, 3, 0, 1))
        t = jnp.pad(t, ((0, 0), (0, 0), (0, Cpad - cin), (0, Cpad - cout)))
        return jnp.transpose(t, (3, 0, 1, 2)).reshape(Cpad, 9 * Cpad)

    w_all = jnp.stack([
        conv_taps(params["e1c1"]), conv_taps(params["e1c2"]),
        conv_taps(params["e2c1"]), conv_taps(params["e2c2"]),
        deconv_taps(params["d1t1"]), deconv_taps(params["d2t1"]),
        deconv_taps(params["d2t2"]),
    ]).astype(jnp.bfloat16)

    # ---- layout plumbing: channel-major, zero-padded flat spatial ----------
    x_p = jnp.pad(x_nchw, ((0, 0), (0, Cpad - Cin), (1, 1), (1, 1)))
    x_flat = x_p.reshape(B, Cpad, Lp)
    x_g = (x_flat.reshape(G, Bt, Cpad, Lp)
           .transpose(0, 2, 1, 3)
           .reshape(G, Cpad, Bt * Lp))                       # Bt images stacked

    out_shapes = (
        jax.ShapeDtypeStruct((B, Cin, H * W), jnp.float32),
        jax.ShapeDtypeStruct((B, l2, H2 * W2), jnp.float32),
        jax.ShapeDtypeStruct((B, l2, H2 * W2), jnp.float32),
    )
    out_specs = [
        pl.BlockSpec((Bt, Cin, H * W), lambda g: (g, 0, 0)),
        pl.BlockSpec((Bt, l2, H2 * W2), lambda g: (g, 0, 0)),
        pl.BlockSpec((Bt, l2, H2 * W2), lambda g: (g, 0, 0)),
    ]
    scratch_shapes = [
        pltpu.VMEM((Cpad, Bt * Lp2), jnp.float32),   # f1: pooled (l1 ch)
        pltpu.VMEM((Cpad, Bt * Lp2), jnp.float32),   # f2: padded h1
        pltpu.VMEM((Cpad, Bt * Lp4), jnp.float32),   # f3: pooled (l3 ch)
        pltpu.VMEM((Cpad, Bt * Lp2), jnp.float32),   # f4: dilated encoded
        pltpu.VMEM((Cpad, Bt * Lp2), jnp.float32),   # f5: padded h2
        pltpu.VMEM((Cpad, Bt * Lp), jnp.float32),    # f6: dilated decoder2
    ]

    # vmem budget: (double-buffered) I/O + scratch + generous temp slack
    est = (2 * (Cpad * Bt * Lp * 4 + 7 * Cpad * 9 * Cpad * 2)
           + 2 * Bt * (Cin * H * W + 2 * l2 * H2 * W2) * 4
           + Cpad * Bt * (2 * Lp + 4 * Lp2 + Lp4) * 4
           + 24 * Cpad * Bt * Lp * 4)
    vmem_limit = int(min(64 * 2**20, max(32 * 2**20, 4 * est)))

    kernel = functools.partial(
        _radar_ae2_kernel, H=H, W=W, Cin=Cin, l2=l2, Cpad=Cpad, Bt=Bt)

    rec, h1, h2 = pl.pallas_call(
        kernel,
        out_shape=out_shapes,
        grid_spec=pltpu.PrefetchScalarGridSpec(
            num_scalar_prefetch=0,
            grid=(G,),
            in_specs=[
                pl.BlockSpec((1, Cpad, Bt * Lp), lambda g: (g, 0, 0)),
                pl.BlockSpec((7, Cpad, 9 * Cpad), lambda g: (0, 0, 0)),
            ],
            out_specs=out_specs,
            scratch_shapes=scratch_shapes,
        ),
        compiler_params=pltpu.CompilerParams(
            dimension_semantics=("parallel",),
            vmem_limit_bytes=vmem_limit),
    )(x_g, w_all)

    # lane-dense (B, C, H*W) kernel outputs -> NCHW via free reshapes
    return (rec.reshape(B, Cin, H, W),
            h1.reshape(B, l2, H2, W2),
            h2.reshape(B, l2, H2, W2))


# ---------------------------------------------------------------------------
# Pure-JAX reference (XLA f32 convs) for correctness checking
# ---------------------------------------------------------------------------
def _ref_forward(x_nchw, params):
    dn = ("NHWC", "HWIO", "NHWC")

    def conv(x, w_oihw, relu):
        w = jnp.transpose(w_oihw, (2, 3, 1, 0))
        y = lax.conv_general_dilated(
            x, w, (1, 1), ((1, 1), (1, 1)), dimension_numbers=dn,
            precision=lax.Precision.HIGHEST)
        return jnp.maximum(y, 0.0) if relu else y

    def convt(x, w_iohw, stride, relu):
        w = jnp.transpose(w_iohw[:, :, ::-1, ::-1], (2, 3, 0, 1))
        y = lax.conv_general_dilated(
            x, w, (1, 1), ((1, stride), (1, stride)),
            lhs_dilation=(stride, stride), dimension_numbers=dn,
            precision=lax.Precision.HIGHEST)
        return jnp.maximum(y, 0.0) if relu else y

    def pool(x):
        B, H, W, C = x.shape
        return jnp.max(x.reshape(B, H // 2, 2, W // 2, 2, C), axis=(2, 4))

    x = jnp.transpose(x_nchw, (0, 2, 3, 1))
    h = conv(x, params["e1c1"], True)
    h = pool(h)
    h1 = conv(h, params["e1c2"], True)
    h = conv(h1, params["e2c1"], True)
    h = pool(h)
    enc = conv(h, params["e2c2"], True)
    h2 = convt(enc, params["d1t1"], 2, True)
    h = convt(h2, params["d2t1"], 1, True)
    rec = convt(h, params["d2t2"], 2, False)
    nchw = lambda a: jnp.transpose(a, (0, 3, 1, 2))
    return nchw(rec), nchw(h1), nchw(h2)


if __name__ == "__main__":
    # in_channels must be >= 5 (module uses in_channels - 4 bottleneck channels)
    in_channels, B, H, W = 8, 2, 16, 16
    key = jax.random.PRNGKey(0)
    k_x, k_p = jax.random.split(key)
    x = jax.random.normal(k_x, (B, in_channels, H, W), jnp.float32)
    params = init_params(k_p, in_channels)

    ref_rec, ref_h1, ref_h2 = _ref_forward(x, params)

    # --- block_batch=1: grid=(2,), batch axis sharded across cores (megacore)
    fwd1 = jax.jit(functools.partial(radar_ae2_forward, block_batch=1))
    rec, h1, h2 = fwd1(x, params)
    jax.block_until_ready((rec, h1, h2))

    assert rec.shape == (B, in_channels, H, W)
    assert h1.shape == (B, in_channels - 2, H // 2, W // 2)
    assert h2.shape == (B, in_channels - 2, H // 2, W // 2)

    # Tolerance accounts for bf16 MXU operands (f32 accumulation) vs f32 ref.
    np.testing.assert_allclose(np.asarray(rec), np.asarray(ref_rec), rtol=4e-2, atol=4e-2)
    np.testing.assert_allclose(np.asarray(h1), np.asarray(ref_h1), rtol=4e-2, atol=4e-2)
    np.testing.assert_allclose(np.asarray(h2), np.asarray(ref_h2), rtol=4e-2, atol=4e-2)

    # --- block_batch=2: both images stacked along the lane axis of one grid
    # step (larger-M matmuls); must match the reference too.
    fwd2 = jax.jit(functools.partial(radar_ae2_forward, block_batch=2))
    rec2, h12, h22 = fwd2(x, params)
    jax.block_until_ready((rec2, h12, h22))
    np.testing.assert_allclose(np.asarray(rec2), np.asarray(ref_rec), rtol=4e-2, atol=4e-2)
    np.testing.assert_allclose(np.asarray(h12), np.asarray(ref_h1), rtol=4e-2, atol=4e-2)
    np.testing.assert_allclose(np.asarray(h22), np.asarray(ref_h2), rtol=4e-2, atol=4e-2)

    print("KERNEL_OK")
</pallas_src>

<mosaic_0001>
module attributes {stable_mosaic.version = 11 : i64} {
  func.func @_radar_ae2_kernel(%arg0: i32, %arg1: memref<1x8x324xf32, #tpu.memory_space<vmem>>, %arg2: memref<7x8x72xbf16, #tpu.memory_space<vmem>>, %arg3: memref<1x8x256xf32, #tpu.memory_space<vmem>>, %arg4: memref<1x6x64xf32, #tpu.memory_space<vmem>>, %arg5: memref<1x6x64xf32, #tpu.memory_space<vmem>>, %arg6: memref<8x100xf32, #tpu.memory_space<vmem>>, %arg7: memref<8x100xf32, #tpu.memory_space<vmem>>, %arg8: memref<8x36xf32, #tpu.memory_space<vmem>>, %arg9: memref<8x100xf32, #tpu.memory_space<vmem>>, %arg10: memref<8x100xf32, #tpu.memory_space<vmem>>, %arg11: memref<8x324xf32, #tpu.memory_space<vmem>>) attributes {dimension_semantics = [#tpu.dimension_semantics<parallel>], iteration_bounds = array<i64: 2>, scalar_prefetch = 0 : i64, scratch_operands = 6 : i64, tpu.core_type = #tpu.core_type<tc>, window_params = [{transform_indices = @transform_0, window_bounds = array<i64: 1, 8, 324>}, {pipeline_mode = #tpu.pipeline_mode<synchronous>, transform_indices = @transform_1, window_bounds = array<i64: 7, 8, 72>}, {transform_indices = @transform_2, window_bounds = array<i64: 1, 8, 256>}, {transform_indices = @transform_3, window_bounds = array<i64: 1, 6, 64>}, {transform_indices = @transform_4, window_bounds = array<i64: 1, 6, 64>}]} {
    %cst = arith.constant 0.000000e+00 : f32
    %0 = vector.broadcast %cst : f32 to vector<8x100xf32>
    %c0 = arith.constant 0 : index
    %c0_0 = arith.constant 0 : index
    %1 = vector.load %arg6[%c0, %c0_0] : memref<8x100xf32, #tpu.memory_space<vmem>>, vector<8x100xf32>
    tpu.vector_store %arg6[%c0, %c0_0], %0 {strides = array<i32>} : memref<8x100xf32, #tpu.memory_space<vmem>>, vector<8x100xf32>,
    %cst_1 = arith.constant 0.000000e+00 : f32
    %2 = vector.broadcast %cst_1 : f32 to vector<8x100xf32>
    %c0_2 = arith.constant 0 : index
    %c0_3 = arith.constant 0 : index
    %3 = vector.load %arg7[%c0_2, %c0_3] : memref<8x100xf32, #tpu.memory_space<vmem>>, vector<8x100xf32>
    tpu.vector_store %arg7[%c0_2, %c0_3], %2 {strides = array<i32>} : memref<8x100xf32, #tpu.memory_space<vmem>>, vector<8x100xf32>,
    %cst_4 = arith.constant 0.000000e+00 : f32
    %4 = vector.broadcast %cst_4 : f32 to vector<8x36xf32>
    %c0_5 = arith.constant 0 : index
    %c0_6 = arith.constant 0 : index
    %5 = vector.load %arg8[%c0_5, %c0_6] : memref<8x36xf32, #tpu.memory_space<vmem>>, vector<8x36xf32>
    tpu.vector_store %arg8[%c0_5, %c0_6], %4 {strides = array<i32>} : memref<8x36xf32, #tpu.memory_space<vmem>>, vector<8x36xf32>,
    %cst_7 = arith.constant 0.000000e+00 : f32
    %6 = vector.broadcast %cst_7 : f32 to vector<8x100xf32>
    %c0_8 = arith.constant 0 : index
    %c0_9 = arith.constant 0 : index
    %7 = vector.load %arg9[%c0_8, %c0_9] : memref<8x100xf32, #tpu.memory_space<vmem>>, vector<8x100xf32>
    tpu.vector_store %arg9[%c0_8, %c0_9], %6 {strides = array<i32>} : memref<8x100xf32, #tpu.memory_space<vmem>>, vector<8x100xf32>,
    %cst_10 = arith.constant 0.000000e+00 : f32
    %8 = vector.broadcast %cst_10 : f32 to vector<8x100xf32>
    %c0_11 = arith.constant 0 : index
    %c0_12 = arith.constant 0 : index
    %9 = vector.load %arg10[%c0_11, %c0_12] : memref<8x100xf32, #tpu.memory_space<vmem>>, vector<8x100xf32>
    tpu.vector_store %arg10[%c0_11, %c0_12], %8 {strides = array<i32>} : memref<8x100xf32, #tpu.memory_space<vmem>>, vector<8x100xf32>,
    %cst_13 = arith.constant 0.000000e+00 : f32
    %10 = vector.broadcast %cst_13 : f32 to vector<8x324xf32>
    %c0_14 = arith.constant 0 : index
    %c0_15 = arith.constant 0 : index
    %11 = vector.load %arg11[%c0_14, %c0_15] : memref<8x324xf32, #tpu.memory_space<vmem>>, vector<8x324xf32>
    tpu.vector_store %arg11[%c0_14, %c0_15], %10 {strides = array<i32>} : memref<8x324xf32, #tpu.memory_space<vmem>>, vector<8x324xf32>,
    %c0_16 = arith.constant 0 : index
    %c0_17 = arith.constant 0 : index
    %c0_18 = arith.constant 0 : index
    %12 = vector.load %arg1[%c0_16, %c0_17, %c0_18] : memref<1x8x324xf32, #tpu.memory_space<vmem>>, vector<1x8x324xf32>
    %13 = vector.shape_cast %12 : vector<1x8x324xf32> to vector<8x324xf32>
    %14 = vector.extract_strided_slice %13 {offsets = [0, 0], sizes = [8, 286], strides = [1, 1]} : vector<8x324xf32> to vector<8x286xf32>
    %15 = vector.extract_strided_slice %13 {offsets = [0, 1], sizes = [8, 286], strides = [1, 1]} : vector<8x324xf32> to vector<8x286xf32>
    %16 = vector.extract_strided_slice %13 {offsets = [0, 2], sizes = [8, 286], strides = [1, 1]} : vector<8x324xf32> to vector<8x286xf32>
    %17 = vector.extract_strided_slice %13 {offsets = [0, 18], sizes = [8, 286], strides = [1, 1]} : vector<8x324xf32> to vector<8x286xf32>
    %18 = vector.extract_strided_slice %13 {offsets = [0, 19], sizes = [8, 286], strides = [1, 1]} : vector<8x324xf32> to vector<8x286xf32>
    %19 = vector.extract_strided_slice %13 {offsets = [0, 20], sizes = [8, 286], strides = [1, 1]} : vector<8x324xf32> to vector<8x286xf32>
    %20 = vector.extract_strided_slice %13 {offsets = [0, 36], sizes = [8, 286], strides = [1, 1]} : vector<8x324xf32> to vector<8x286xf32>
    %21 = vector.extract_strided_slice %13 {offsets = [0, 37], sizes = [8, 286], strides = [1, 1]} : vector<8x324xf32> to vector<8x286xf32>
    %22 = vector.extract_strided_slice %13 {offsets = [0, 38], sizes = [8, 286], strides = [1, 1]} : vector<8x324xf32> to vector<8x286xf32>
    %23 = tpu.concatenate %14, %15, %16, %17, %18, %19, %20, %21, %22 in 0 : vector<8x286xf32>, vector<8x286xf32>, vector<8x286xf32>, vector<8x286xf32>, vector<8x286xf32>, vector<8x286xf32>, vector<8x286xf32>, vector<8x286xf32>, vector<8x286xf32> -> vector<72x286xf32>
    %24 = arith.truncf %23 : vector<72x286xf32> to vector<72x286xbf16>
    %c0_19 = arith.constant 0 : index
    %c0_20 = arith.constant 0 : index
    %c0_21 = arith.constant 0 : index
    %25 = vector.load %arg2[%c0_19, %c0_20, %c0_21] : memref<7x8x72xbf16, #tpu.memory_space<vmem>>, vector<1x8x72xbf16>
    %26 = vector.shape_cast %25 : vector<1x8x72xbf16> to vector<8x72xbf16>
    %cst_22 = arith.constant dense<0.000000e+00> : vector<8x286xf32>
    %27 = tpu.matmul %26, %24, %cst_22 {dimension_numbers = #tpu.dot_dimension_numbers<[1], [0], [0], [1], [0, 0, 1, 1], [], []>} : vector<8x72xbf16>, vector<72x286xbf16>, vector<8x286xf32> -> vector<8x286xf32>
    %cst_23 = arith.constant 0.000000e+00 : f32
    %28 = vector.broadcast %cst_23 : f32 to vector<8x286xf32>
    %29 = arith.maximumf %27, %28 : vector<8x286xf32>
    %30 = tpu.iota {dimensions = array<i32: 0>} : vector<15x8xi32>
    %31 = tpu.iota {dimensions = array<i32: 1>} : vector<15x8xi32>
    %c2_i32 = arith.constant 2 : i32
    %32 = vector.broadcast %c2_i32 : i32 to vector<15x8xi32>
    %33 = arith.muli %32, %31 : vector<15x8xi32>
    %34 = arith.cmpi eq, %30, %33 : vector<15x8xi32>
    %35 = arith.extui %34 : vector<15x8xi1> to vector<15x8xi32>
    %36 = arith.sitofp %35 : vector<15x8xi32> to vector<15x8xf32>
    %37 = vector.extract_strided_slice %29 {offsets = [0, 0], sizes = [8, 16], strides = [1, 1]} : vector<8x286xf32> to vector<8x16xf32>
    %38 = vector.extract_strided_slice %29 {offsets = [0, 18], sizes = [8, 16], strides = [1, 1]} : vector<8x286xf32> to vector<8x16xf32>
    %39 = arith.maximumf %37, %38 : vector<8x16xf32>
    %40 = vector.extract_strided_slice %39 {offsets = [0, 0], sizes = [8, 15], strides = [1, 1]} : vector<8x16xf32> to vector<8x15xf32>
    %41 = vector.extract_strided_slice %39 {offsets = [0, 1], sizes = [8, 15], strides = [1, 1]} : vector<8x16xf32> to vector<8x15xf32>
    %42 = arith.maximumf %40, %41 : vector<8x15xf32>
    %cst_24 = arith.constant dense<0.000000e+00> : vector<8x8xf32>
    %43 = tpu.matmul %42, %36, %cst_24 {dimension_numbers = #tpu.dot_dimension_numbers<[1], [0], [0], [1], [0, 0, 1, 1], [], []>} : vector<8x15xf32>, vector<15x8xf32>, vector<8x8xf32> -> vector<8x8xf32>
    %c0_25 = arith.constant 0 : index
    %c11 = arith.constant 11 : index
    %44 = vector.load %arg6[%c0_25, %c11] : memref<8x100xf32, #tpu.memory_space<vmem>>, vector<8x8xf32>
    tpu.vector_store %arg6[%c0_25, %c11], %43 {strides = array<i32>} : memref<8x100xf32, #tpu.memory_space<vmem>>, vector<8x8xf32>,
    %45 = vector.extract_strided_slice %29 {offsets = [0, 36], sizes = [8, 16], strides = [1, 1]} : vector<8x286xf32> to vector<8x16xf32>
    %46 = vector.extract_strided_slice %29 {offsets = [0, 54], sizes = [8, 16], strides = [1, 1]} : vector<8x286xf32> to vector<8x16xf32>
    %47 = arith.maximumf %45, %46 : vector<8x16xf32>
    %48 = vector.extract_strided_slice %47 {offsets = [0, 0], sizes = [8, 15], strides = [1, 1]} : vector<8x16xf32> to vector<8x15xf32>
    %49 = vector.extract_strided_slice %47 {offsets = [0, 1], sizes = [8, 15], strides = [1, 1]} : vector<8x16xf32> to vector<8x15xf32>
    %50 = arith.maximumf %48, %49 : vector<8x15xf32>
    %cst_26 = arith.constant dense<0.000000e+00> : vector<8x8xf32>
    %51 = tpu.matmul %50, %36, %cst_26 {dimension_numbers = #tpu.dot_dimension_numbers<[1], [0], [0], [1], [0, 0, 1, 1], [], []>} : vector<8x15xf32>, vector<15x8xf32>, vector<8x8xf32> -> vector<8x8xf32>
    %c0_27 = arith.constant 0 : index
    %c21 = arith.constant 21 : index
    %52 = vector.load %arg6[%c0_27, %c21] : memref<8x100xf32, #tpu.memory_space<vmem>>, vector<8x8xf32>
    tpu.vector_store %arg6[%c0_27, %c21], %51 {strides = array<i32>} : memref<8x100xf32, #tpu.memory_space<vmem>>, vector<8x8xf32>,
    %53 = vector.extract_strided_slice %29 {offsets = [0, 72], sizes = [8, 16], strides = [1, 1]} : vector<8x286xf32> to vector<8x16xf32>
    %54 = vector.extract_strided_slice %29 {offsets = [0, 90], sizes = [8, 16], strides = [1, 1]} : vector<8x286xf32> to vector<8x16xf32>
    %55 = arith.maximumf %53, %54 : vector<8x16xf32>
    %56 = vector.extract_strided_slice %55 {offsets = [0, 0], sizes = [8, 15], strides = [1, 1]} : vector<8x16xf32> to vector<8x15xf32>
    %57 = vector.extract_strided_slice %55 {offsets = [0, 1], sizes = [8, 15], strides = [1, 1]} : vector<8x16xf32> to vector<8x15xf32>
    %58 = arith.maximumf %56, %57 : vector<8x15xf32>
    %cst_28 = arith.constant dense<0.000000e+00> : vector<8x8xf32>
    %59 = tpu.matmul %58, %36, %cst_28 {dimension_numbers = #tpu.dot_dimension_numbers<[1], [0], [0], [1], [0, 0, 1, 1], [], []>} : vector<8x15xf32>, vector<15x8xf32>, vector<8x8xf32> -> vector<8x8xf32>
    %c0_29 = arith.constant 0 : index
    %c31 = arith.constant 31 : index
    %60 = vector.load %arg6[%c0_29, %c31] : memref<8x100xf32, #tpu.memory_space<vmem>>, vector<8x8xf32>
    tpu.vector_store %arg6[%c0_29, %c31], %59 {strides = array<i32>} : memref<8x100xf32, #tpu.memory_space<vmem>>, vector<8x8xf32>,
    %61 = vector.extract_strided_slice %29 {offsets = [0, 108], sizes = [8, 16], strides = [1, 1]} : vector<8x286xf32> to vector<8x16xf32>
    %62 = vector.extract_strided_slice %29 {offsets = [0, 126], sizes = [8, 16], strides = [1, 1]} : vector<8x286xf32> to vector<8x16xf32>
    %63 = arith.maximumf %61, %62 : vector<8x16xf32>
    %64 = vector.extract_strided_slice %63 {offsets = [0, 0], sizes = [8, 15], strides = [1, 1]} : vector<8x16xf32> to vector<8x15xf32>
    %65 = vector.extract_strided_slice %63 {offsets = [0, 1], sizes = [8, 15], strides = [1, 1]} : vector<8x16xf32> to vector<8x15xf32>
    %66 = arith.maximumf %64, %65 : vector<8x15xf32>
    %cst_30 = arith.constant dense<0.000000e+00> : vector<8x8xf32>
    %67 = tpu.matmul %66, %36, %cst_30 {dimension_numbers = #tpu.dot_dimension_numbers<[1], [0], [0], [1], [0, 0, 1, 1], [], []>} : vector<8x15xf32>, vector<15x8xf32>, vector<8x8xf32> -> vector<8x8xf32>
    %c0_31 = arith.constant 0 : index
    %c41 = arith.constant 41 : index
    %68 = vector.load %arg6[%c0_31, %c41] : memref<8x100xf32, #tpu.memory_space<vmem>>, vector<8x8xf32>
    tpu.vector_store %arg6[%c0_31, %c41], %67 {strides = array<i32>} : memref<8x100xf32, #tpu.memory_space<vmem>>, vector<8x8xf32>,
    %69 = vector.extract_strided_slice %29 {offsets = [0, 144], sizes = [8, 16], strides = [1, 1]} : vector<8x286xf32> to vector<8x16xf32>
    %70 = vector.extract_strided_slice %29 {offsets = [0, 162], sizes = [8, 16], strides = [1, 1]} : vector<8x286xf32> to vector<8x16xf32>
    %71 = arith.maximumf %69, %70 : vector<8x16xf32>
    %72 = vector.extract_strided_slice %71 {offsets = [0, 0], sizes = [8, 15], strides = [1, 1]} : vector<8x16xf32> to vector<8x15xf32>
    %73 = vector.extract_strided_slice %71 {offsets = [0, 1], sizes = [8, 15], strides = [1, 1]} : vector<8x16xf32> to vector<8x15xf32>
    %74 = arith.maximumf %72, %73 : vector<8x15xf32>
    %cst_32 = arith.constant dense<0.000000e+00> : vector<8x8xf32>
    %75 = tpu.matmul %74, %36, %cst_32 {dimension_numbers = #tpu.dot_dimension_numbers<[1], [0], [0], [1], [0, 0, 1, 1], [], []>} : vector<8x15xf32>, vector<15x8xf32>, vector<8x8xf32> -> vector<8x8xf32>
    %c0_33 = arith.constant 0 : index
    %c51 = arith.constant 51 : index
    %76 = vector.load %arg6[%c0_33, %c51] : memref<8x100xf32, #tpu.memory_space<vmem>>, vector<8x8xf32>
    tpu.vector_store %arg6[%c0_33, %c51], %75 {strides = array<i32>} : memref<8x100xf32, #tpu.memory_space<vmem>>, vector<8x8xf32>,
    %77 = vector.extract_strided_slice %29 {offsets = [0, 180], sizes = [8, 16], strides = [1, 1]} : vector<8x286xf32> to vector<8x16xf32>
    %78 = vector.extract_strided_slice %29 {offsets = [0, 198], sizes = [8, 16], strides = [1, 1]} : vector<8x286xf32> to vector<8x16xf32>
    %79 = arith.maximumf %77, %78 : vector<8x16xf32>
    %80 = vector.extract_strided_slice %79 {offsets = [0, 0], sizes = [8, 15], strides = [1, 1]} : vector<8x16xf32> to vector<8x15xf32>
    %81 = vector.extract_strided_slice %79 {offsets = [0, 1], sizes = [8, 15], strides = [1, 1]} : vector<8x16xf32> to vector<8x15xf32>
    %82 = arith.maximumf %80, %81 : vector<8x15xf32>
    %cst_34 = arith.constant dense<0.000000e+00> : vector<8x8xf32>
    %83 = tpu.matmul %82, %36, %cst_34 {dimension_numbers = #tpu.dot_dimension_numbers<[1], [0], [0], [1], [0, 0, 1, 1], [], []>} : vector<8x15xf32>, vector<15x8xf32>, vector<8x8xf32> -> vector<8x8xf32>
    %c0_35 = arith.constant 0 : index
    %c61 = arith.constant 61 : index
    %84 = vector.load %arg6[%c0_35, %c61] : memref<8x100xf32, #tpu.memory_space<vmem>>, vector<8x8xf32>
    tpu.vector_store %arg6[%c0_35, %c61], %83 {strides = array<i32>} : memref<8x100xf32, #tpu.memory_space<vmem>>, vector<8x8xf32>,
    %85 = vector.extract_strided_slice %29 {offsets = [0, 216], sizes = [8, 16], strides = [1, 1]} : vector<8x286xf32> to vector<8x16xf32>
    %86 = vector.extract_strided_slice %29 {offsets = [0, 234], sizes = [8, 16], strides = [1, 1]} : vector<8x286xf32> to vector<8x16xf32>
    %87 = arith.maximumf %85, %86 : vector<8x16xf32>
    %88 = vector.extract_strided_slice %87 {offsets = [0, 0], sizes = [8, 15], strides = [1, 1]} : vector<8x16xf32> to vector<8x15xf32>
    %89 = vector.extract_strided_slice %87 {offsets = [0, 1], sizes = [8, 15], strides = [1, 1]} : vector<8x16xf32> to vector<8x15xf32>
    %90 = arith.maximumf %88, %89 : vector<8x15xf32>
    %cst_36 = arith.constant dense<0.000000e+00> : vector<8x8xf32>
    %91 = tpu.matmul %90, %36, %cst_36 {dimension_numbers = #tpu.dot_dimension_numbers<[1], [0], [0], [1], [0, 0, 1, 1], [], []>} : vector<8x15xf32>, vector<15x8xf32>, vector<8x8xf32> -> vector<8x8xf32>
    %c0_37 = arith.constant 0 : index
    %c71 = arith.constant 71 : index
    %92 = vector.load %arg6[%c0_37, %c71] : memref<8x100xf32, #tpu.memory_space<vmem>>, vector<8x8xf32>
    tpu.vector_store %arg6[%c0_37, %c71], %91 {strides = array<i32>} : memref<8x100xf32, #tpu.memory_space<vmem>>, vector<8x8xf32>,
    %93 = vector.extract_strided_slice %29 {offsets = [0, 252], sizes = [8, 16], strides = [1, 1]} : vector<8x286xf32> to vector<8x16xf32>
    %94 = vector.extract_strided_slice %29 {offsets = [0, 270], sizes = [8, 16], strides = [1, 1]} : vector<8x286xf32> to vector<8x16xf32>
    %95 = arith.maximumf %93, %94 : vector<8x16xf32>
    %96 = vector.extract_strided_slice %95 {offsets = [0, 0], sizes = [8, 15], strides = [1, 1]} : vector<8x16xf32> to vector<8x15xf32>
    %97 = vector.extract_strided_slice %95 {offsets = [0, 1], sizes = [8, 15], strides = [1, 1]} : vector<8x16xf32> to vector<8x15xf32>
    %98 = arith.maximumf %96, %97 : vector<8x15xf32>
    %cst_38 = arith.constant dense<0.000000e+00> : vector<8x8xf32>
    %99 = tpu.matmul %98, %36, %cst_38 {dimension_numbers = #tpu.dot_dimension_numbers<[1], [0], [0], [1], [0, 0, 1, 1], [], []>} : vector<8x15xf32>, vector<15x8xf32>, vector<8x8xf32> -> vector<8x8xf32>
    %c0_39 = arith.constant 0 : index
    %c81 = arith.constant 81 : index
    %100 = vector.load %arg6[%c0_39, %c81] : memref<8x100xf32, #tpu.memory_space<vmem>>, vector<8x8xf32>
    tpu.vector_store %arg6[%c0_39, %c81], %99 {strides = array<i32>} : memref<8x100xf32, #tpu.memory_space<vmem>>, vector<8x8xf32>,
    %c0_40 = arith.constant 0 : index
    %c0_41 = arith.constant 0 : index
    %101 = vector.load %arg6[%c0_40, %c0_41] : memref<8x100xf32, #tpu.memory_space<vmem>>, vector<8x100xf32>
    %102 = vector.extract_strided_slice %101 {offsets = [0, 0], sizes = [8, 78], strides = [1, 1]} : vector<8x100xf32> to vector<8x78xf32>
    %103 = vector.extract_strided_slice %101 {offsets = [0, 1], sizes = [8, 78], strides = [1, 1]} : vector<8x100xf32> to vector<8x78xf32>
    %104 = vector.extract_strided_slice %101 {offsets = [0, 2], sizes = [8, 78], strides = [1, 1]} : vector<8x100xf32> to vector<8x78xf32>
    %105 = vector.extract_strided_slice %101 {offsets = [0, 10], sizes = [8, 78], strides = [1, 1]} : vector<8x100xf32> to vector<8x78xf32>
    %106 = vector.extract_strided_slice %101 {offsets = [0, 11], sizes = [8, 78], strides = [1, 1]} : vector<8x100xf32> to vector<8x78xf32>
    %107 = vector.extract_strided_slice %101 {offsets = [0, 12], sizes = [8, 78], strides = [1, 1]} : vector<8x100xf32> to vector<8x78xf32>
    %108 = vector.extract_strided_slice %101 {offsets = [0, 20], sizes = [8, 78], strides = [1, 1]} : vector<8x100xf32> to vector<8x78xf32>
    %109 = vector.extract_strided_slice %101 {offsets = [0, 21], sizes = [8, 78], strides = [1, 1]} : vector<8x100xf32> to vector<8x78xf32>
    %110 = vector.extract_strided_slice %101 {offsets = [0, 22], sizes = [8, 78], strides = [1, 1]} : vector<8x100xf32> to vector<8x78xf32>
    %111 = tpu.concatenate %102, %103, %104, %105, %106, %107, %108, %109, %110 in 0 : vector<8x78xf32>, vector<8x78xf32>, vector<8x78xf32>, vector<8x78xf32>, vector<8x78xf32>, vector<8x78xf32>, vector<8x78xf32>, vector<8x78xf32>, vector<8x78xf32> -> vector<72x78xf32>
    %112 = arith.truncf %111 : vector<72x78xf32> to vector<72x78xbf16>
    %c1 = arith.constant 1 : index
    %c0_42 = arith.constant 0 : index
    %c0_43 = arith.constant 0 : index
    %113 = vector.load %arg2[%c1, %c0_42, %c0_43] : memref<7x8x72xbf16, #tpu.memory_space<vmem>>, vector<1x8x72xbf16>
    %114 = vector.shape_cast %113 : vector<1x8x72xbf16> to vector<8x72xbf16>
    %cst_44 = arith.constant dense<0.000000e+00> : vector<8x78xf32>
    %115 = tpu.matmul %114, %112, %cst_44 {dimension_numbers = #tpu.dot_dimension_numbers<[1], [0], [0], [1], [0, 0, 1, 1], [], []>} : vector<8x72xbf16>, vector<72x78xbf16>, vector<8x78xf32> -> vector<8x78xf32>
    %cst_45 = arith.constant 0.000000e+00 : f32
    %116 = vector.broadcast %cst_45 : f32 to vector<8x78xf32>
    %117 = arith.maximumf %115, %116 : vector<8x78xf32>
    %118 = vector.extract_strided_slice %117 {offsets = [0, 0], sizes = [8, 8], strides = [1, 1]} : vector<8x78xf32> to vector<8x8xf32>
    %c0_46 = arith.constant 0 : index
    %c11_47 = arith.constant 11 : index
    %119 = vector.load %arg7[%c0_46, %c11_47] : memref<8x100xf32, #tpu.memory_space<vmem>>, vector<8x8xf32>
    tpu.vector_store %arg7[%c0_46, %c11_47], %118 {strides = array<i32>} : memref<8x100xf32, #tpu.memory_space<vmem>>, vector<8x8xf32>,
    %120 = vector.extract_strided_slice %118 {offsets = [0, 0], sizes = [6, 8], strides = [1, 1]} : vector<8x8xf32> to vector<6x8xf32>
    %c0_48 = arith.constant 0 : index
    %c0_49 = arith.constant 0 : index
    %c0_50 = arith.constant 0 : index
    %121 = vector.load %arg4[%c0_48, %c0_49, %c0_50] : memref<1x6x64xf32, #tpu.memory_space<vmem>>, vector<1x6x8xf32>
    %122 = vector.shape_cast %121 : vector<1x6x8xf32> to vector<6x8xf32>
    %123 = vector.shape_cast %120 : vector<6x8xf32> to vector<1x6x8xf32>
    tpu.vector_store %arg4[%c0_48, %c0_49, %c0_50], %123 {strides = array<i32>} : memref<1x6x64xf32, #tpu.memory_space<vmem>>, vector<1x6x8xf32>,
    %124 = vector.extract_strided_slice %117 {offsets = [0, 10], sizes = [8, 8], strides = [1, 1]} : vector<8x78xf32> to vector<8x8xf32>
    %c0_51 = arith.constant 0 : index
    %c21_52 = arith.constant 21 : index
    %125 = vector.load %arg7[%c0_51, %c21_52] : memref<8x100xf32, #tpu.memory_space<vmem>>, vector<8x8xf32>
    tpu.vector_store %arg7[%c0_51, %c21_52], %124 {strides = array<i32>} : memref<8x100xf32, #tpu.memory_space<vmem>>, vector<8x8xf32>,
    %126 = vector.extract_strided_slice %124 {offsets = [0, 0], sizes = [6, 8], strides = [1, 1]} : vector<8x8xf32> to vector<6x8xf32>
    %c0_53 = arith.constant 0 : index
    %c0_54 = arith.constant 0 : index
    %c8 = arith.constant 8 : index
    %127 = vector.load %arg4[%c0_53, %c0_54, %c8] : memref<1x6x64xf32, #tpu.memory_space<vmem>>, vector<1x6x8xf32>
    %128 = vector.shape_cast %127 : vector<1x6x8xf32> to vector<6x8xf32>
    %129 = vector.shape_cast %126 : vector<6x8xf32> to vector<1x6x8xf32>
    tpu.vector_store %arg4[%c0_53, %c0_54, %c8], %129 {strides = array<i32>} : memref<1x6x64xf32, #tpu.memory_space<vmem>>, vector<1x6x8xf32>,
    %130 = vector.extract_strided_slice %117 {offsets = [0, 20], sizes = [8, 8], strides = [1, 1]} : vector<8x78xf32> to vector<8x8xf32>
    %c0_55 = arith.constant 0 : index
    %c31_56 = arith.constant 31 : index
    %131 = vector.load %arg7[%c0_55, %c31_56] : memref<8x100xf32, #tpu.memory_space<vmem>>, vector<8x8xf32>
    tpu.vector_store %arg7[%c0_55, %c31_56], %130 {strides = array<i32>} : memref<8x100xf32, #tpu.memory_space<vmem>>, vector<8x8xf32>,
    %132 = vector.extract_strided_slice %130 {offsets = [0, 0], sizes = [6, 8], strides = [1, 1]} : vector<8x8xf32> to vector<6x8xf32>
    %c0_57 = arith.constant 0 : index
    %c0_58 = arith.constant 0 : index
    %c16 = arith.constant 16 : index
    %133 = vector.load %arg4[%c0_57, %c0_58, %c16] : memref<1x6x64xf32, #tpu.memory_space<vmem>>, vector<1x6x8xf32>
    %134 = vector.shape_cast %133 : vector<1x6x8xf32> to vector<6x8xf32>
    %135 = vector.shape_cast %132 : vector<6x8xf32> to vector<1x6x8xf32>
    tpu.vector_store %arg4[%c0_57, %c0_58, %c16], %135 {strides = array<i32>} : memref<1x6x64xf32, #tpu.memory_space<vmem>>, vector<1x6x8xf32>,
    %136 = vector.extract_strided_slice %117 {offsets = [0, 30], sizes = [8, 8], strides = [1, 1]} : vector<8x78xf32> to vector<8x8xf32>
    %c0_59 = arith.constant 0 : index
    %c41_60 = arith.constant 41 : index
    %137 = vector.load %arg7[%c0_59, %c41_60] : memref<8x100xf32, #tpu.memory_space<vmem>>, vector<8x8xf32>
    tpu.vector_store %arg7[%c0_59, %c41_60], %136 {strides = array<i32>} : memref<8x100xf32, #tpu.memory_space<vmem>>, vector<8x8xf32>,
    %138 = vector.extract_strided_slice %136 {offsets = [0, 0], sizes = [6, 8], strides = [1, 1]} : vector<8x8xf32> to vector<6x8xf32>
    %c0_61 = arith.constant 0 : index
    %c0_62 = arith.constant 0 : index
    %c24 = arith.constant 24 : index
    %139 = vector.load %arg4[%c0_61, %c0_62, %c24] : memref<1x6x64xf32, #tpu.memory_space<vmem>>, vector<1x6x8xf32>
    %140 = vector.shape_cast %139 : vector<1x6x8xf32> to vector<6x8xf32>
    %141 = vector.shape_cast %138 : vector<6x8xf32> to vector<1x6x8xf32>
    tpu.vector_store %arg4[%c0_61, %c0_62, %c24], %141 {strides = array<i32>} : memref<1x6x64xf32, #tpu.memory_space<vmem>>, vector<1x6x8xf32>,
    %142 = vector.extract_strided_slice %117 {offsets = [0, 40], sizes = [8, 8], strides = [1, 1]} : vector<8x78xf32> to vector<8x8xf32>
    %c0_63 = arith.constant 0 : index
    %c51_64 = arith.constant 51 : index
    %143 = vector.load %arg7[%c0_63, %c51_64] : memref<8x100xf32, #tpu.memory_space<vmem>>, vector<8x8xf32>
    tpu.vector_store %arg7[%c0_63, %c51_64], %142 {strides = array<i32>} : memref<8x100xf32, #tpu.memory_space<vmem>>, vector<8x8xf32>,
    %144 = vector.extract_strided_slice %142 {offsets = [0, 0], sizes = [6, 8], strides = [1, 1]} : vector<8x8xf32> to vector<6x8xf32>
    %c0_65 = arith.constant 0 : index
    %c0_66 = arith.constant 0 : index
    %c32 = arith.constant 32 : index
    %145 = vector.load %arg4[%c0_65, %c0_66, %c32] : memref<1x6x64xf32, #tpu.memory_space<vmem>>, vector<1x6x8xf32>
    %146 = vector.shape_cast %145 : vector<1x6x8xf32> to vector<6x8xf32>
    %147 = vector.shape_cast %144 : vector<6x8xf32> to vector<1x6x8xf32>
    tpu.vector_store %arg4[%c0_65, %c0_66, %c32], %147 {strides = array<i32>} : memref<1x6x64xf32, #tpu.memory_space<vmem>>, vector<1x6x8xf32>,
    %148 = vector.extract_strided_slice %117 {offsets = [0, 50], sizes = [8, 8], strides = [1, 1]} : vector<8x78xf32> to vector<8x8xf32>
    %c0_67 = arith.constant 0 : index
    %c61_68 = arith.constant 61 : index
    %149 = vector.load %arg7[%c0_67, %c61_68] : memref<8x100xf32, #tpu.memory_space<vmem>>, vector<8x8xf32>
    tpu.vector_store %arg7[%c0_67, %c61_68], %148 {strides = array<i32>} : memref<8x100xf32, #tpu.memory_space<vmem>>, vector<8x8xf32>,
    %150 = vector.extract_strided_slice %148 {offsets = [0, 0], sizes = [6, 8], strides = [1, 1]} : vector<8x8xf32> to vector<6x8xf32>
    %c0_69 = arith.constant 0 : index
    %c0_70 = arith.constant 0 : index
    %c40 = arith.constant 40 : index
    %151 = vector.load %arg4[%c0_69, %c0_70, %c40] : memref<1x6x64xf32, #tpu.memory_space<vmem>>, vector<1x6x8xf32>
    %152 = vector.shape_cast %151 : vector<1x6x8xf32> to vector<6x8xf32>
    %153 = vector.shape_cast %150 : vector<6x8xf32> to vector<1x6x8xf32>
    tpu.vector_store %arg4[%c0_69, %c0_70, %c40], %153 {strides = array<i32>} : memref<1x6x64xf32, #tpu.memory_space<vmem>>, vector<1x6x8xf32>,
    %154 = vector.extract_strided_slice %117 {offsets = [0, 60], sizes = [8, 8], strides = [1, 1]} : vector<8x78xf32> to vector<8x8xf32>
    %c0_71 = arith.constant 0 : index
    %c71_72 = arith.constant 71 : index
    %155 = vector.load %arg7[%c0_71, %c71_72] : memref<8x100xf32, #tpu.memory_space<vmem>>, vector<8x8xf32>
    tpu.vector_store %arg7[%c0_71, %c71_72], %154 {strides = array<i32>} : memref<8x100xf32, #tpu.memory_space<vmem>>, vector<8x8xf32>,
    %156 = vector.extract_strided_slice %154 {offsets = [0, 0], sizes = [6, 8], strides = [1, 1]} : vector<8x8xf32> to vector<6x8xf32>
    %c0_73 = arith.constant 0 : index
    %c0_74 = arith.constant 0 : index
    %c48 = arith.constant 48 : index
    %157 = vector.load %arg4[%c0_73, %c0_74, %c48] : memref<1x6x64xf32, #tpu.memory_space<vmem>>, vector<1x6x8xf32>
    %158 = vector.shape_cast %157 : vector<1x6x8xf32> to vector<6x8xf32>
    %159 = vector.shape_cast %156 : vector<6x8xf32> to vector<1x6x8xf32>
    tpu.vector_store %arg4[%c0_73, %c0_74, %c48], %159 {strides = array<i32>} : memref<1x6x64xf32, #tpu.memory_space<vmem>>, vector<1x6x8xf32>,
    %160 = vector.extract_strided_slice %117 {offsets = [0, 70], sizes = [8, 8], strides = [1, 1]} : vector<8x78xf32> to vector<8x8xf32>
    %c0_75 = arith.constant 0 : index
    %c81_76 = arith.constant 81 : index
    %161 = vector.load %arg7[%c0_75, %c81_76] : memref<8x100xf32, #tpu.memory_space<vmem>>, vector<8x8xf32>
    tpu.vector_store %arg7[%c0_75, %c81_76], %160 {strides = array<i32>} : memref<8x100xf32, #tpu.memory_space<vmem>>, vector<8x8xf32>,
    %162 = vector.extract_strided_slice %160 {offsets = [0, 0], sizes = [6, 8], strides = [1, 1]} : vector<8x8xf32> to vector<6x8xf32>
    %c0_77 = arith.constant 0 : index
    %c0_78 = arith.constant 0 : index
    %c56 = arith.constant 56 : index
    %163 = vector.load %arg4[%c0_77, %c0_78, %c56] : memref<1x6x64xf32, #tpu.memory_space<vmem>>, vector<1x6x8xf32>
    %164 = vector.shape_cast %163 : vector<1x6x8xf32> to vector<6x8xf32>
    %165 = vector.shape_cast %162 : vector<6x8xf32> to vector<1x6x8xf32>
    tpu.vector_store %arg4[%c0_77, %c0_78, %c56], %165 {strides = array<i32>} : memref<1x6x64xf32, #tpu.memory_space<vmem>>, vector<1x6x8xf32>,
    %c0_79 = arith.constant 0 : index
    %c0_80 = arith.constant 0 : index
    %166 = vector.load %arg7[%c0_79, %c0_80] : memref<8x100xf32, #tpu.memory_space<vmem>>, vector<8x100xf32>
    %167 = vector.extract_strided_slice %166 {offsets = [0, 0], sizes = [8, 78], strides = [1, 1]} : vector<8x100xf32> to vector<8x78xf32>
    %168 = vector.extract_strided_slice %166 {offsets = [0, 1], sizes = [8, 78], strides = [1, 1]} : vector<8x100xf32> to vector<8x78xf32>
    %169 = vector.extract_strided_slice %166 {offsets = [0, 2], sizes = [8, 78], strides = [1, 1]} : vector<8x100xf32> to vector<8x78xf32>
    %170 = vector.extract_strided_slice %166 {offsets = [0, 10], sizes = [8, 78], strides = [1, 1]} : vector<8x100xf32> to vector<8x78xf32>
    %171 = vector.extract_strided_slice %166 {offsets = [0, 11], sizes = [8, 78], strides = [1, 1]} : vector<8x100xf32> to vector<8x78xf32>
    %172 = vector.extract_strided_slice %166 {offsets = [0, 12], sizes = [8, 78], strides = [1, 1]} : vector<8x100xf32> to vector<8x78xf32>
    %173 = vector.extract_strided_slice %166 {offsets = [0, 20], sizes = [8, 78], strides = [1, 1]} : vector<8x100xf32> to vector<8x78xf32>
    %174 = vector.extract_strided_slice %166 {offsets = [0, 21], sizes = [8, 78], strides = [1, 1]} : vector<8x100xf32> to vector<8x78xf32>
    %175 = vector.extract_strided_slice %166 {offsets = [0, 22], sizes = [8, 78], strides = [1, 1]} : vector<8x100xf32> to vector<8x78xf32>
    %176 = tpu.concatenate %167, %168, %169, %170, %171, %172, %173, %174, %175 in 0 : vector<8x78xf32>, vector<8x78xf32>, vector<8x78xf32>, vector<8x78xf32>, vector<8x78xf32>, vector<8x78xf32>, vector<8x78xf32>, vector<8x78xf32>, vector<8x78xf32> -> vector<72x78xf32>
    %177 = arith.truncf %176 : vector<72x78xf32> to vector<72x78xbf16>
    %c2 = arith.constant 2 : index
    %c0_81 = arith.constant 0 : index
    %c0_82 = arith.constant 0 : index
    %178 = vector.load %arg2[%c2, %c0_81, %c0_82] : memref<7x8x72xbf16, #tpu.memory_space<vmem>>, vector<1x8x72xbf16>
    %179 = vector.shape_cast %178 : vector<1x8x72xbf16> to vector<8x72xbf16>
    %cst_83 = arith.constant dense<0.000000e+00> : vector<8x78xf32>
    %180 = tpu.matmul %179, %177, %cst_83 {dimension_numbers = #tpu.dot_dimension_numbers<[1], [0], [0], [1], [0, 0, 1, 1], [], []>} : vector<8x72xbf16>, vector<72x78xbf16>, vector<8x78xf32> -> vector<8x78xf32>
    %cst_84 = arith.constant 0.000000e+00 : f32
    %181 = vector.broadcast %cst_84 : f32 to vector<8x78xf32>
    %182 = arith.maximumf %180, %181 : vector<8x78xf32>
    %183 = tpu.iota {dimensions = array<i32: 0>} : vector<7x4xi32>
    %184 = tpu.iota {dimensions = array<i32: 1>} : vector<7x4xi32>
    %c2_i32_85 = arith.constant 2 : i32
    %185 = vector.broadcast %c2_i32_85 : i32 to vector<7x4xi32>
    %186 = arith.muli %185, %184 : vector<7x4xi32>
    %187 = arith.cmpi eq, %183, %186 : vector<7x4xi32>
    %188 = arith.extui %187 : vector<7x4xi1> to vector<7x4xi32>
    %189 = arith.sitofp %188 : vector<7x4xi32> to vector<7x4xf32>
    %190 = vector.extract_strided_slice %182 {offsets = [0, 0], sizes = [8, 8], strides = [1, 1]} : vector<8x78xf32> to vector<8x8xf32>
    %191 = vector.extract_strided_slice %182 {offsets = [0, 10], sizes = [8, 8], strides = [1, 1]} : vector<8x78xf32> to vector<8x8xf32>
    %192 = arith.maximumf %190, %191 : vector<8x8xf32>
    %193 = vector.extract_strided_slice %192 {offsets = [0, 0], sizes = [8, 7], strides = [1, 1]} : vector<8x8xf32> to vector<8x7xf32>
    %194 = vector.extract_strided_slice %192 {offsets = [0, 1], sizes = [8, 7], strides = [1, 1]} : vector<8x8xf32> to vector<8x7xf32>
    %195 = arith.maximumf %193, %194 : vector<8x7xf32>
    %cst_86 = arith.constant dense<0.000000e+00> : vector<8x4xf32>
    %196 = tpu.matmul %195, %189, %cst_86 {dimension_numbers = #tpu.dot_dimension_numbers<[1], [0], [0], [1], [0, 0, 1, 1], [], []>} : vector<8x7xf32>, vector<7x4xf32>, vector<8x4xf32> -> vector<8x4xf32>
    %c0_87 = arith.constant 0 : index
    %c7 = arith.constant 7 : index
    %197 = vector.load %arg8[%c0_87, %c7] : memref<8x36xf32, #tpu.memory_space<vmem>>, vector<8x4xf32>
    tpu.vector_store %arg8[%c0_87, %c7], %196 {strides = array<i32>} : memref<8x36xf32, #tpu.memory_space<vmem>>, vector<8x4xf32>,
    %198 = vector.extract_strided_slice %182 {offsets = [0, 20], sizes = [8, 8], strides = [1, 1]} : vector<8x78xf32> to vector<8x8xf32>
    %199 = vector.extract_strided_slice %182 {offsets = [0, 30], sizes = [8, 8], strides = [1, 1]} : vector<8x78xf32> to vector<8x8xf32>
    %200 = arith.maximumf %198, %199 : vector<8x8xf32>
    %201 = vector.extract_strided_slice %200 {offsets = [0, 0], sizes = [8, 7], strides = [1, 1]} : vector<8x8xf32> to vector<8x7xf32>
    %202 = vector.extract_strided_slice %200 {offsets = [0, 1], sizes = [8, 7], strides = [1, 1]} : vector<8x8xf32> to vector<8x7xf32>
    %203 = arith.maximumf %201, %202 : vector<8x7xf32>
    %cst_88 = arith.constant dense<0.000000e+00> : vector<8x4xf32>
    %204 = tpu.matmul %203, %189, %cst_88 {dimension_numbers = #tpu.dot_dimension_numbers<[1], [0], [0], [1], [0, 0, 1, 1], [], []>} : vector<8x7xf32>, vector<7x4xf32>, vector<8x4xf32> -> vector<8x4xf32>
    %c0_89 = arith.constant 0 : index
    %c13 = arith.constant 13 : index
    %205 = vector.load %arg8[%c0_89, %c13] : memref<8x36xf32, #tpu.memory_space<vmem>>, vector<8x4xf32>
    tpu.vector_store %arg8[%c0_89, %c13], %204 {strides = array<i32>} : memref<8x36xf32, #tpu.memory_space<vmem>>, vector<8x4xf32>,
    %206 = vector.extract_strided_slice %182 {offsets = [0, 40], sizes = [8, 8], strides = [1, 1]} : vector<8x78xf32> to vector<8x8xf32>
    %207 = vector.extract_strided_slice %182 {offsets = [0, 50], sizes = [8, 8], strides = [1, 1]} : vector<8x78xf32> to vector<8x8xf32>
    %208 = arith.maximumf %206, %207 : vector<8x8xf32>
    %209 = vector.extract_strided_slice %208 {offsets = [0, 0], sizes = [8, 7], strides = [1, 1]} : vector<8x8xf32> to vector<8x7xf32>
    %210 = vector.extract_strided_slice %208 {offsets = [0, 1], sizes = [8, 7], strides = [1, 1]} : vector<8x8xf32> to vector<8x7xf32>
    %211 = arith.maximumf %209, %210 : vector<8x7xf32>
    %cst_90 = arith.constant dense<0.000000e+00> : vector<8x4xf32>
    %212 = tpu.matmul %211, %189, %cst_90 {dimension_numbers = #tpu.dot_dimension_numbers<[1], [0], [0], [1], [0, 0, 1, 1], [], []>} : vector<8x7xf32>, vector<7x4xf32>, vector<8x4xf32> -> vector<8x4xf32>
    %c0_91 = arith.constant 0 : index
    %c19 = arith.constant 19 : index
    %213 = vector.load %arg8[%c0_91, %c19] : memref<8x36xf32, #tpu.memory_space<vmem>>, vector<8x4xf32>
    tpu.vector_store %arg8[%c0_91, %c19], %212 {strides = array<i32>} : memref<8x36xf32, #tpu.memory_space<vmem>>, vector<8x4xf32>,
    %214 = vector.extract_strided_slice %182 {offsets = [0, 60], sizes = [8, 8], strides = [1, 1]} : vector<8x78xf32> to vector<8x8xf32>
    %215 = vector.extract_strided_slice %182 {offsets = [0, 70], sizes = [8, 8], strides = [1, 1]} : vector<8x78xf32> to vector<8x8xf32>
    %216 = arith.maximumf %214, %215 : vector<8x8xf32>
    %217 = vector.extract_strided_slice %216 {offsets = [0, 0], sizes = [8, 7], strides = [1, 1]} : vector<8x8xf32> to vector<8x7xf32>
    %218 = vector.extract_strided_slice %216 {offsets = [0, 1], sizes = [8, 7], strides = [1, 1]} : vector<8x8xf32> to vector<8x7xf32>
    %219 = arith.maximumf %217, %218 : vector<8x7xf32>
    %cst_92 = arith.constant dense<0.000000e+00> : vector<8x4xf32>
    %220 = tpu.matmul %219, %189, %cst_92 {dimension_numbers = #tpu.dot_dimension_numbers<[1], [0], [0], [1], [0, 0, 1, 1], [], []>} : vector<8x7xf32>, vector<7x4xf32>, vector<8x4xf32> -> vector<8x4xf32>
    %c0_93 = arith.constant 0 : index
    %c25 = arith.constant 25 : index
    %221 = vector.load %arg8[%c0_93, %c25] : memref<8x36xf32, #tpu.memory_space<vmem>>, vector<8x4xf32>
    tpu.vector_store %arg8[%c0_93, %c25], %220 {strides = array<i32>} : memref<8x36xf32, #tpu.memory_space<vmem>>, vector<8x4xf32>,
    %c0_94 = arith.constant 0 : index
    %c0_95 = arith.constant 0 : index
    %222 = vector.load %arg8[%c0_94, %c0_95] : memref<8x36xf32, #tpu.memory_space<vmem>>, vector<8x36xf32>
    %223 = vector.extract_strided_slice %222 {offsets = [0, 0], sizes = [8, 22], strides = [1, 1]} : vector<8x36xf32> to vector<8x22xf32>
    %224 = vector.extract_strided_slice %222 {offsets = [0, 1], sizes = [8, 22], strides = [1, 1]} : vector<8x36xf32> to vector<8x22xf32>
    %225 = vector.extract_strided_slice %222 {offsets = [0, 2], sizes = [8, 22], strides = [1, 1]} : vector<8x36xf32> to vector<8x22xf32>
    %226 = vector.extract_strided_slice %222 {offsets = [0, 6], sizes = [8, 22], strides = [1, 1]} : vector<8x36xf32> to vector<8x22xf32>
    %227 = vector.extract_strided_slice %222 {offsets = [0, 7], sizes = [8, 22], strides = [1, 1]} : vector<8x36xf32> to vector<8x22xf32>
    %228 = vector.extract_strided_slice %222 {offsets = [0, 8], sizes = [8, 22], strides = [1, 1]} : vector<8x36xf32> to vector<8x22xf32>
    %229 = vector.extract_strided_slice %222 {offsets = [0, 12], sizes = [8, 22], strides = [1, 1]} : vector<8x36xf32> to vector<8x22xf32>
    %230 = vector.extract_strided_slice %222 {offsets = [0, 13], sizes = [8, 22], strides = [1, 1]} : vector<8x36xf32> to vector<8x22xf32>
    %231 = vector.extract_strided_slice %222 {offsets = [0, 14], sizes = [8, 22], strides = [1, 1]} : vector<8x36xf32> to vector<8x22xf32>
    %232 = tpu.concatenate %223, %224, %225, %226, %227, %228, %229, %230, %231 in 0 : vector<8x22xf32>, vector<8x22xf32>, vector<8x22xf32>, vector<8x22xf32>, vector<8x22xf32>, vector<8x22xf32>, vector<8x22xf32>, vector<8x22xf32>, vector<8x22xf32> -> vector<72x22xf32>
    %233 = arith.truncf %232 : vector<72x22xf32> to vector<72x22xbf16>
    %c3 = arith.constant 3 : index
    %c0_96 = arith.constant 0 : index
    %c0_97 = arith.constant 0 : index
    %234 = vector.load %arg2[%c3, %c0_96, %c0_97] : memref<7x8x72xbf16, #tpu.memory_space<vmem>>, vector<1x8x72xbf16>
    %235 = vector.shape_cast %234 : vector<1x8x72xbf16> to vector<8x72xbf16>
    %cst_98 = arith.constant dense<0.000000e+00> : vector<8x22xf32>
    %236 = tpu.matmul %235, %233, %cst_98 {dimension_numbers = #tpu.dot_dimension_numbers<[1], [0], [0], [1], [0, 0, 1, 1], [], []>} : vector<8x72xbf16>, vector<72x22xbf16>, vector<8x22xf32> -> vector<8x22xf32>
    %cst_99 = arith.constant 0.000000e+00 : f32
    %237 = vector.broadcast %cst_99 : f32 to vector<8x22xf32>
    %238 = arith.maximumf %236, %237 : vector<8x22xf32>
    %239 = tpu.iota {dimensions = array<i32: 0>} : vector<4x8xi32>
    %240 = tpu.iota {dimensions = array<i32: 1>} : vector<4x8xi32>
    %c2_i32_100 = arith.constant 2 : i32
    %241 = vector.broadcast %c2_i32_100 : i32 to vector<4x8xi32>
    %242 = arith.muli %241, %239 : vector<4x8xi32>
    %243 = arith.cmpi eq, %240, %242 : vector<4x8xi32>
    %244 = arith.extui %243 : vector<4x8xi1> to vector<4x8xi32>
    %245 = arith.sitofp %244 : vector<4x8xi32> to vector<4x8xf32>
    %246 = vector.extract_strided_slice %238 {offsets = [0, 0], sizes = [8, 4], strides = [1, 1]} : vector<8x22xf32> to vector<8x4xf32>
    %cst_101 = arith.constant dense<0.000000e+00> : vector<8x8xf32>
    %247 = tpu.matmul %246, %245, %cst_101 {dimension_numbers = #tpu.dot_dimension_numbers<[1], [0], [0], [1], [0, 0, 1, 1], [], []>} : vector<8x4xf32>, vector<4x8xf32>, vector<8x8xf32> -> vector<8x8xf32>
    %c0_102 = arith.constant 0 : index
    %c11_103 = arith.constant 11 : index
    %248 = vector.load %arg9[%c0_102, %c11_103] : memref<8x100xf32, #tpu.memory_space<vmem>>, vector<8x8xf32>
    tpu.vector_store %arg9[%c0_102, %c11_103], %247 {strides = array<i32>} : memref<8x100xf32, #tpu.memory_space<vmem>>, vector<8x8xf32>,
    %249 = vector.extract_strided_slice %238 {offsets = [0, 6], sizes = [8, 4], strides = [1, 1]} : vector<8x22xf32> to vector<8x4xf32>
    %cst_104 = arith.constant dense<0.000000e+00> : vector<8x8xf32>
    %250 = tpu.matmul %249, %245, %cst_104 {dimension_numbers = #tpu.dot_dimension_numbers<[1], [0], [0], [1], [0, 0, 1, 1], [], []>} : vector<8x4xf32>, vector<4x8xf32>, vector<8x8xf32> -> vector<8x8xf32>
    %c0_105 = arith.constant 0 : index
    %c31_106 = arith.constant 31 : index
    %251 = vector.load %arg9[%c0_105, %c31_106] : memref<8x100xf32, #tpu.memory_space<vmem>>, vector<8x8xf32>
    tpu.vector_store %arg9[%c0_105, %c31_106], %250 {strides = array<i32>} : memref<8x100xf32, #tpu.memory_space<vmem>>, vector<8x8xf32>,
    %252 = vector.extract_strided_slice %238 {offsets = [0, 12], sizes = [8, 4], strides = [1, 1]} : vector<8x22xf32> to vector<8x4xf32>
    %cst_107 = arith.constant dense<0.000000e+00> : vector<8x8xf32>
    %253 = tpu.matmul %252, %245, %cst_107 {dimension_numbers = #tpu.dot_dimension_numbers<[1], [0], [0], [1], [0, 0, 1, 1], [], []>} : vector<8x4xf32>, vector<4x8xf32>, vector<8x8xf32> -> vector<8x8xf32>
    %c0_108 = arith.constant 0 : index
    %c51_109 = arith.constant 51 : index
    %254 = vector.load %arg9[%c0_108, %c51_109] : memref<8x100xf32, #tpu.memory_space<vmem>>, vector<8x8xf32>
    tpu.vector_store %arg9[%c0_108, %c51_109], %253 {strides = array<i32>} : memref<8x100xf32, #tpu.memory_space<vmem>>, vector<8x8xf32>,
    %255 = vector.extract_strided_slice %238 {offsets = [0, 18], sizes = [8, 4], strides = [1, 1]} : vector<8x22xf32> to vector<8x4xf32>
    %cst_110 = arith.constant dense<0.000000e+00> : vector<8x8xf32>
    %256 = tpu.matmul %255, %245, %cst_110 {dimension_numbers = #tpu.dot_dimension_numbers<[1], [0], [0], [1], [0, 0, 1, 1], [], []>} : vector<8x4xf32>, vector<4x8xf32>, vector<8x8xf32> -> vector<8x8xf32>
    %c0_111 = arith.constant 0 : index
    %c71_112 = arith.constant 71 : index
    %257 = vector.load %arg9[%c0_111, %c71_112] : memref<8x100xf32, #tpu.memory_space<vmem>>, vector<8x8xf32>
    tpu.vector_store %arg9[%c0_111, %c71_112], %256 {strides = array<i32>} : memref<8x100xf32, #tpu.memory_space<vmem>>, vector<8x8xf32>,
    %c0_113 = arith.constant 0 : index
    %c0_114 = arith.constant 0 : index
    %258 = vector.load %arg9[%c0_113, %c0_114] : memref<8x100xf32, #tpu.memory_space<vmem>>, vector<8x100xf32>
    %259 = vector.extract_strided_slice %258 {offsets = [0, 0], sizes = [8, 78], strides = [1, 1]} : vector<8x100xf32> to vector<8x78xf32>
    %260 = vector.extract_strided_slice %258 {offsets = [0, 1], sizes = [8, 78], strides = [1, 1]} : vector<8x100xf32> to vector<8x78xf32>
    %261 = vector.extract_strided_slice %258 {offsets = [0, 2], sizes = [8, 78], strides = [1, 1]} : vector<8x100xf32> to vector<8x78xf32>
    %262 = vector.extract_strided_slice %258 {offsets = [0, 10], sizes = [8, 78], strides = [1, 1]} : vector<8x100xf32> to vector<8x78xf32>
    %263 = vector.extract_strided_slice %258 {offsets = [0, 11], sizes = [8, 78], strides = [1, 1]} : vector<8x100xf32> to vector<8x78xf32>
    %264 = vector.extract_strided_slice %258 {offsets = [0, 12], sizes = [8, 78], strides = [1, 1]} : vector<8x100xf32> to vector<8x78xf32>
    %265 = vector.extract_strided_slice %258 {offsets = [0, 20], sizes = [8, 78], strides = [1, 1]} : vector<8x100xf32> to vector<8x78xf32>
    %266 = vector.extract_strided_slice %258 {offsets = [0, 21], sizes = [8, 78], strides = [1, 1]} : vector<8x100xf32> to vector<8x78xf32>
    %267 = vector.extract_strided_slice %258 {offsets = [0, 22], sizes = [8, 78], strides = [1, 1]} : vector<8x100xf32> to vector<8x78xf32>
    %268 = tpu.concatenate %259, %260, %261, %262, %263, %264, %265, %266, %267 in 0 : vector<8x78xf32>, vector<8x78xf32>, vector<8x78xf32>, vector<8x78xf32>, vector<8x78xf32>, vector<8x78xf32>, vector<8x78xf32>, vector<8x78xf32>, vector<8x78xf32> -> vector<72x78xf32>
    %269 = arith.truncf %268 : vector<72x78xf32> to vector<72x78xbf16>
    %c4 = arith.constant 4 : index
    %c0_115 = arith.constant 0 : index
    %c0_116 = arith.constant 0 : index
    %270 = vector.load %arg2[%c4, %c0_115, %c0_116] : memref<7x8x72xbf16, #tpu.memory_space<vmem>>, vector<1x8x72xbf16>
    %271 = vector.shape_cast %270 : vector<1x8x72xbf16> to vector<8x72xbf16>
    %cst_117 = arith.constant dense<0.000000e+00> : vector<8x78xf32>
    %272 = tpu.matmul %271, %269, %cst_117 {dimension_numbers = #tpu.dot_dimension_numbers<[1], [0], [0], [1], [0, 0, 1, 1], [], []>} : vector<8x72xbf16>, vector<72x78xbf16>, vector<8x78xf32> -> vector<8x78xf32>
    %cst_118 = arith.constant 0.000000e+00 : f32
    %273 = vector.broadcast %cst_118 : f32 to vector<8x78xf32>
    %274 = arith.maximumf %272, %273 : vector<8x78xf32>
    %275 = vector.extract_strided_slice %274 {offsets = [0, 0], sizes = [8, 8], strides = [1, 1]} : vector<8x78xf32> to vector<8x8xf32>
    %c0_119 = arith.constant 0 : index
    %c11_120 = arith.constant 11 : index
    %276 = vector.load %arg10[%c0_119, %c11_120] : memref<8x100xf32, #tpu.memory_space<vmem>>, vector<8x8xf32>
    tpu.vector_store %arg10[%c0_119, %c11_120], %275 {strides = array<i32>} : memref<8x100xf32, #tpu.memory_space<vmem>>, vector<8x8xf32>,
    %277 = vector.extract_strided_slice %275 {offsets = [0, 0], sizes = [6, 8], strides = [1, 1]} : vector<8x8xf32> to vector<6x8xf32>
    %c0_121 = arith.constant 0 : index
    %c0_122 = arith.constant 0 : index
    %c0_123 = arith.constant 0 : index
    %278 = vector.load %arg5[%c0_121, %c0_122, %c0_123] : memref<1x6x64xf32, #tpu.memory_space<vmem>>, vector<1x6x8xf32>
    %279 = vector.shape_cast %278 : vector<1x6x8xf32> to vector<6x8xf32>
    %280 = vector.shape_cast %277 : vector<6x8xf32> to vector<1x6x8xf32>
    tpu.vector_store %arg5[%c0_121, %c0_122, %c0_123], %280 {strides = array<i32>} : memref<1x6x64xf32, #tpu.memory_space<vmem>>, vector<1x6x8xf32>,
    %281 = vector.extract_strided_slice %274 {offsets = [0, 10], sizes = [8, 8], strides = [1, 1]} : vector<8x78xf32> to vector<8x8xf32>
    %c0_124 = arith.constant 0 : index
    %c21_125 = arith.constant 21 : index
    %282 = vector.load %arg10[%c0_124, %c21_125] : memref<8x100xf32, #tpu.memory_space<vmem>>, vector<8x8xf32>
    tpu.vector_store %arg10[%c0_124, %c21_125], %281 {strides = array<i32>} : memref<8x100xf32, #tpu.memory_space<vmem>>, vector<8x8xf32>,
    %283 = vector.extract_strided_slice %281 {offsets = [0, 0], sizes = [6, 8], strides = [1, 1]} : vector<8x8xf32> to vector<6x8xf32>
    %c0_126 = arith.constant 0 : index
    %c0_127 = arith.constant 0 : index
    %c8_128 = arith.constant 8 : index
    %284 = vector.load %arg5[%c0_126, %c0_127, %c8_128] : memref<1x6x64xf32, #tpu.memory_space<vmem>>, vector<1x6x8xf32>
    %285 = vector.shape_cast %284 : vector<1x6x8xf32> to vector<6x8xf32>
    %286 = vector.shape_cast %283 : vector<6x8xf32> to vector<1x6x8xf32>
    tpu.vector_store %arg5[%c0_126, %c0_127, %c8_128], %286 {strides = array<i32>} : memref<1x6x64xf32, #tpu.memory_space<vmem>>, vector<1x6x8xf32>,
    %287 = vector.extract_strided_slice %274 {offsets = [0, 20], sizes = [8, 8], strides = [1, 1]} : vector<8x78xf32> to vector<8x8xf32>
    %c0_129 = arith.constant 0 : index
    %c31_130 = arith.constant 31 : index
    %288 = vector.load %arg10[%c0_129, %c31_130] : memref<8x100xf32, #tpu.memory_space<vmem>>, vector<8x8xf32>
    tpu.vector_store %arg10[%c0_129, %c31_130], %287 {strides = array<i32>} : memref<8x100xf32, #tpu.memory_space<vmem>>, vector<8x8xf32>,
    %289 = vector.extract_strided_slice %287 {offsets = [0, 0], sizes = [6, 8], strides = [1, 1]} : vector<8x8xf32> to vector<6x8xf32>
    %c0_131 = arith.constant 0 : index
    %c0_132 = arith.constant 0 : index
    %c16_133 = arith.constant 16 : index
    %290 = vector.load %arg5[%c0_131, %c0_132, %c16_133] : memref<1x6x64xf32, #tpu.memory_space<vmem>>, vector<1x6x8xf32>
    %291 = vector.shape_cast %290 : vector<1x6x8xf32> to vector<6x8xf32>
    %292 = vector.shape_cast %289 : vector<6x8xf32> to vector<1x6x8xf32>
    tpu.vector_store %arg5[%c0_131, %c0_132, %c16_133], %292 {strides = array<i32>} : memref<1x6x64xf32, #tpu.memory_space<vmem>>, vector<1x6x8xf32>,
    %293 = vector.extract_strided_slice %274 {offsets = [0, 30], sizes = [8, 8], strides = [1, 1]} : vector<8x78xf32> to vector<8x8xf32>
    %c0_134 = arith.constant 0 : index
    %c41_135 = arith.constant 41 : index
    %294 = vector.load %arg10[%c0_134, %c41_135] : memref<8x100xf32, #tpu.memory_space<vmem>>, vector<8x8xf32>
    tpu.vector_store %arg10[%c0_134, %c41_135], %293 {strides = array<i32>} : memref<8x100xf32, #tpu.memory_space<vmem>>, vector<8x8xf32>,
    %295 = vector.extract_strided_slice %293 {offsets = [0, 0], sizes = [6, 8], strides = [1, 1]} : vector<8x8xf32> to vector<6x8xf32>
    %c0_136 = arith.constant 0 : index
    %c0_137 = arith.constant 0 : index
    %c24_138 = arith.constant 24 : index
    %296 = vector.load %arg5[%c0_136, %c0_137, %c24_138] : memref<1x6x64xf32, #tpu.memory_space<vmem>>, vector<1x6x8xf32>
    %297 = vector.shape_cast %296 : vector<1x6x8xf32> to vector<6x8xf32>
    %298 = vector.shape_cast %295 : vector<6x8xf32> to vector<1x6x8xf32>
    tpu.vector_store %arg5[%c0_136, %c0_137, %c24_138], %298 {strides = array<i32>} : memref<1x6x64xf32, #tpu.memory_space<vmem>>, vector<1x6x8xf32>,
    %299 = vector.extract_strided_slice %274 {offsets = [0, 40], sizes = [8, 8], strides = [1, 1]} : vector<8x78xf32> to vector<8x8xf32>
    %c0_139 = arith.constant 0 : index
    %c51_140 = arith.constant 51 : index
    %300 = vector.load %arg10[%c0_139, %c51_140] : memref<8x100xf32, #tpu.memory_space<vmem>>, vector<8x8xf32>
    tpu.vector_store %arg10[%c0_139, %c51_140], %299 {strides = array<i32>} : memref<8x100xf32, #tpu.memory_space<vmem>>, vector<8x8xf32>,
    %301 = vector.extract_strided_slice %299 {offsets = [0, 0], sizes = [6, 8], strides = [1, 1]} : vector<8x8xf32> to vector<6x8xf32>
    %c0_141 = arith.constant 0 : index
    %c0_142 = arith.constant 0 : index
    %c32_143 = arith.constant 32 : index
    %302 = vector.load %arg5[%c0_141, %c0_142, %c32_143] : memref<1x6x64xf32, #tpu.memory_space<vmem>>, vector<1x6x8xf32>
    %303 = vector.shape_cast %302 : vector<1x6x8xf32> to vector<6x8xf32>
    %304 = vector.shape_cast %301 : vector<6x8xf32> to vector<1x6x8xf32>
    tpu.vector_store %arg5[%c0_141, %c0_142, %c32_143], %304 {strides = array<i32>} : memref<1x6x64xf32, #tpu.memory_space<vmem>>, vector<1x6x8xf32>,
    %305 = vector.extract_strided_slice %274 {offsets = [0, 50], sizes = [8, 8], strides = [1, 1]} : vector<8x78xf32> to vector<8x8xf32>
    %c0_144 = arith.constant 0 : index
    %c61_145 = arith.constant 61 : index
    %306 = vector.load %arg10[%c0_144, %c61_145] : memref<8x100xf32, #tpu.memory_space<vmem>>, vector<8x8xf32>
    tpu.vector_store %arg10[%c0_144, %c61_145], %305 {strides = array<i32>} : memref<8x100xf32, #tpu.memory_space<vmem>>, vector<8x8xf32>,
    %307 = vector.extract_strided_slice %305 {offsets = [0, 0], sizes = [6, 8], strides = [1, 1]} : vector<8x8xf32> to vector<6x8xf32>
    %c0_146 = arith.constant 0 : index
    %c0_147 = arith.constant 0 : index
    %c40_148 = arith.constant 40 : index
    %308 = vector.load %arg5[%c0_146, %c0_147, %c40_148] : memref<1x6x64xf32, #tpu.memory_space<vmem>>, vector<1x6x8xf32>
    %309 = vector.shape_cast %308 : vector<1x6x8xf32> to vector<6x8xf32>
    %310 = vector.shape_cast %307 : vector<6x8xf32> to vector<1x6x8xf32>
    tpu.vector_store %arg5[%c0_146, %c0_147, %c40_148], %310 {strides = array<i32>} : memref<1x6x64xf32, #tpu.memory_space<vmem>>, vector<1x6x8xf32>,
    %311 = vector.extract_strided_slice %274 {offsets = [0, 60], sizes = [8, 8], strides = [1, 1]} : vector<8x78xf32> to vector<8x8xf32>
    %c0_149 = arith.constant 0 : index
    %c71_150 = arith.constant 71 : index
    %312 = vector.load %arg10[%c0_149, %c71_150] : memref<8x100xf32, #tpu.memory_space<vmem>>, vector<8x8xf32>
    tpu.vector_store %arg10[%c0_149, %c71_150], %311 {strides = array<i32>} : memref<8x100xf32, #tpu.memory_space<vmem>>, vector<8x8xf32>,
    %313 = vector.extract_strided_slice %311 {offsets = [0, 0], sizes = [6, 8], strides = [1, 1]} : vector<8x8xf32> to vector<6x8xf32>
    %c0_151 = arith.constant 0 : index
    %c0_152 = arith.constant 0 : index
    %c48_153 = arith.constant 48 : index
    %314 = vector.load %arg5[%c0_151, %c0_152, %c48_153] : memref<1x6x64xf32, #tpu.memory_space<vmem>>, vector<1x6x8xf32>
    %315 = vector.shape_cast %314 : vector<1x6x8xf32> to vector<6x8xf32>
    %316 = vector.shape_cast %313 : vector<6x8xf32> to vector<1x6x8xf32>
    tpu.vector_store %arg5[%c0_151, %c0_152, %c48_153], %316 {strides = array<i32>} : memref<1x6x64xf32, #tpu.memory_space<vmem>>, vector<1x6x8xf32>,
    %317 = vector.extract_strided_slice %274 {offsets = [0, 70], sizes = [8, 8], strides = [1, 1]} : vector<8x78xf32> to vector<8x8xf32>
    %c0_154 = arith.constant 0 : index
    %c81_155 = arith.constant 81 : index
    %318 = vector.load %arg10[%c0_154, %c81_155] : memref<8x100xf32, #tpu.memory_space<vmem>>, vector<8x8xf32>
    tpu.vector_store %arg10[%c0_154, %c81_155], %317 {strides = array<i32>} : memref<8x100xf32, #tpu.memory_space<vmem>>, vector<8x8xf32>,
    %319 = vector.extract_strided_slice %317 {offsets = [0, 0], sizes = [6, 8], strides = [1, 1]} : vector<8x8xf32> to vector<6x8xf32>
    %c0_156 = arith.constant 0 : index
    %c0_157 = arith.constant 0 : index
    %c56_158 = arith.constant 56 : index
    %320 = vector.load %arg5[%c0_156, %c0_157, %c56_158] : memref<1x6x64xf32, #tpu.memory_space<vmem>>, vector<1x6x8xf32>
    %321 = vector.shape_cast %320 : vector<1x6x8xf32> to vector<6x8xf32>
    %322 = vector.shape_cast %319 : vector<6x8xf32> to vector<1x6x8xf32>
    tpu.vector_store %arg5[%c0_156, %c0_157, %c56_158], %322 {strides = array<i32>} : memref<1x6x64xf32, #tpu.memory_space<vmem>>, vector<1x6x8xf32>,
    %c0_159 = arith.constant 0 : index
    %c0_160 = arith.constant 0 : index
    %323 = vector.load %arg10[%c0_159, %c0_160] : memref<8x100xf32, #tpu.memory_space<vmem>>, vector<8x100xf32>
    %324 = vector.extract_strided_slice %323 {offsets = [0, 0], sizes = [8, 78], strides = [1, 1]} : vector<8x100xf32> to vector<8x78xf32>
    %325 = vector.extract_strided_slice %323 {offsets = [0, 1], sizes = [8, 78], strides = [1, 1]} : vector<8x100xf32> to vector<8x78xf32>
    %326 = vector.extract_strided_slice %323 {offsets = [0, 2], sizes = [8, 78], strides = [1, 1]} : vector<8x100xf32> to vector<8x78xf32>
    %327 = vector.extract_strided_slice %323 {offsets = [0, 10], sizes = [8, 78], strides = [1, 1]} : vector<8x100xf32> to vector<8x78xf32>
    %328 = vector.extract_strided_slice %323 {offsets = [0, 11], sizes = [8, 78], strides = [1, 1]} : vector<8x100xf32> to vector<8x78xf32>
    %329 = vector.extract_strided_slice %323 {offsets = [0, 12], sizes = [8, 78], strides = [1, 1]} : vector<8x100xf32> to vector<8x78xf32>
    %330 = vector.extract_strided_slice %323 {offsets = [0, 20], sizes = [8, 78], strides = [1, 1]} : vector<8x100xf32> to vector<8x78xf32>
    %331 = vector.extract_strided_slice %323 {offsets = [0, 21], sizes = [8, 78], strides = [1, 1]} : vector<8x100xf32> to vector<8x78xf32>
    %332 = vector.extract_strided_slice %323 {offsets = [0, 22], sizes = [8, 78], strides = [1, 1]} : vector<8x100xf32> to vector<8x78xf32>
    %333 = tpu.concatenate %324, %325, %326, %327, %328, %329, %330, %331, %332 in 0 : vector<8x78xf32>, vector<8x78xf32>, vector<8x78xf32>, vector<8x78xf32>, vector<8x78xf32>, vector<8x78xf32>, vector<8x78xf32>, vector<8x78xf32>, vector<8x78xf32> -> vector<72x78xf32>
    %334 = arith.truncf %333 : vector<72x78xf32> to vector<72x78xbf16>
    %c5 = arith.constant 5 : index
    %c0_161 = arith.constant 0 : index
    %c0_162 = arith.constant 0 : index
    %335 = vector.load %arg2[%c5, %c0_161, %c0_162] : memref<7x8x72xbf16, #tpu.memory_space<vmem>>, vector<1x8x72xbf16>
    %336 = vector.shape_cast %335 : vector<1x8x72xbf16> to vector<8x72xbf16>
    %cst_163 = arith.constant dense<0.000000e+00> : vector<8x78xf32>
    %337 = tpu.matmul %336, %334, %cst_163 {dimension_numbers = #tpu.dot_dimension_numbers<[1], [0], [0], [1], [0, 0, 1, 1], [], []>} : vector<8x72xbf16>, vector<72x78xbf16>, vector<8x78xf32> -> vector<8x78xf32>
    %cst_164 = arith.constant 0.000000e+00 : f32
    %338 = vector.broadcast %cst_164 : f32 to vector<8x78xf32>
    %339 = arith.maximumf %337, %338 : vector<8x78xf32>
    %340 = tpu.iota {dimensions = array<i32: 0>} : vector<8x16xi32>
    %341 = tpu.iota {dimensions = array<i32: 1>} : vector<8x16xi32>
    %c2_i32_165 = arith.constant 2 : i32
    %342 = vector.broadcast %c2_i32_165 : i32 to vector<8x16xi32>
    %343 = arith.muli %342, %340 : vector<8x16xi32>
    %344 = arith.cmpi eq, %341, %343 : vector<8x16xi32>
    %345 = arith.extui %344 : vector<8x16xi1> to vector<8x16xi32>
    %346 = arith.sitofp %345 : vector<8x16xi32> to vector<8x16xf32>
    %347 = vector.extract_strided_slice %339 {offsets = [0, 0], sizes = [8, 8], strides = [1, 1]} : vector<8x78xf32> to vector<8x8xf32>
    %cst_166 = arith.constant dense<0.000000e+00> : vector<8x16xf32>
    %348 = tpu.matmul %347, %346, %cst_166 {dimension_numbers = #tpu.dot_dimension_numbers<[1], [0], [0], [1], [0, 0, 1, 1], [], []>} : vector<8x8xf32>, vector<8x16xf32>, vector<8x16xf32> -> vector<8x16xf32>
    %c0_167 = arith.constant 0 : index
    %c19_168 = arith.constant 19 : index
    %349 = vector.load %arg11[%c0_167, %c19_168] : memref<8x324xf32, #tpu.memory_space<vmem>>, vector<8x16xf32>
    tpu.vector_store %arg11[%c0_167, %c19_168], %348 {strides = array<i32>} : memref<8x324xf32, #tpu.memory_space<vmem>>, vector<8x16xf32>,
    %350 = vector.extract_strided_slice %339 {offsets = [0, 10], sizes = [8, 8], strides = [1, 1]} : vector<8x78xf32> to vector<8x8xf32>
    %cst_169 = arith.constant dense<0.000000e+00> : vector<8x16xf32>
    %351 = tpu.matmul %350, %346, %cst_169 {dimension_numbers = #tpu.dot_dimension_numbers<[1], [0], [0], [1], [0, 0, 1, 1], [], []>} : vector<8x8xf32>, vector<8x16xf32>, vector<8x16xf32> -> vector<8x16xf32>
    %c0_170 = arith.constant 0 : index
    %c55 = arith.constant 55 : index
    %352 = vector.load %arg11[%c0_170, %c55] : memref<8x324xf32, #tpu.memory_space<vmem>>, vector<8x16xf32>
    tpu.vector_store %arg11[%c0_170, %c55], %351 {strides = array<i32>} : memref<8x324xf32, #tpu.memory_space<vmem>>, vector<8x16xf32>,
    %353 = vector.extract_strided_slice %339 {offsets = [0, 20], sizes = [8, 8], strides = [1, 1]} : vector<8x78xf32> to vector<8x8xf32>
    %cst_171 = arith.constant dense<0.000000e+00> : vector<8x16xf32>
    %354 = tpu.matmul %353, %346, %cst_171 {dimension_numbers = #tpu.dot_dimension_numbers<[1], [0], [0], [1], [0, 0, 1, 1], [], []>} : vector<8x8xf32>, vector<8x16xf32>, vector<8x16xf32> -> vector<8x16xf32>
    %c0_172 = arith.constant 0 : index
    %c91 = arith.constant 91 : index
    %355 = vector.load %arg11[%c0_172, %c91] : memref<8x324xf32, #tpu.memory_space<vmem>>, vector<8x16xf32>
    tpu.vector_store %arg11[%c0_172, %c91], %354 {strides = array<i32>} : memref<8x324xf32, #tpu.memory_space<vmem>>, vector<8x16xf32>,
    %356 = vector.extract_strided_slice %339 {offsets = [0, 30], sizes = [8, 8], strides = [1, 1]} : vector<8x78xf32> to vector<8x8xf32>
    %cst_173 = arith.constant dense<0.000000e+00> : vector<8x16xf32>
    %357 = tpu.matmul %356, %346, %cst_173 {dimension_numbers = #tpu.dot_dimension_numbers<[1], [0], [0], [1], [0, 0, 1, 1], [], []>} : vector<8x8xf32>, vector<8x16xf32>, vector<8x16xf32> -> vector<8x16xf32>
    %c0_174 = arith.constant 0 : index
    %c127 = arith.constant 127 : index
    %358 = vector.load %arg11[%c0_174, %c127] : memref<8x324xf32, #tpu.memory_space<vmem>>, vector<8x16xf32>
    tpu.vector_store %arg11[%c0_174, %c127], %357 {strides = array<i32>} : memref<8x324xf32, #tpu.memory_space<vmem>>, vector<8x16xf32>,
    %359 = vector.extract_strided_slice %339 {offsets = [0, 40], sizes = [8, 8], strides = [1, 1]} : vector<8x78xf32> to vector<8x8xf32>
    %cst_175 = arith.constant dense<0.000000e+00> : vector<8x16xf32>
    %360 = tpu.matmul %359, %346, %cst_175 {dimension_numbers = #tpu.dot_dimension_numbers<[1], [0], [0], [1], [0, 0, 1, 1], [], []>} : vector<8x8xf32>, vector<8x16xf32>, vector<8x16xf32> -> vector<8x16xf32>
    %c0_176 = arith.constant 0 : index
    %c163 = arith.constant 163 : index
    %361 = vector.load %arg11[%c0_176, %c163] : memref<8x324xf32, #tpu.memory_space<vmem>>, vector<8x16xf32>
    tpu.vector_store %arg11[%c0_176, %c163], %360 {strides = array<i32>} : memref<8x324xf32, #tpu.memory_space<vmem>>, vector<8x16xf32>,
    %362 = vector.extract_strided_slice %339 {offsets = [0, 50], sizes = [8, 8], strides = [1, 1]} : vector<8x78xf32> to vector<8x8xf32>
    %cst_177 = arith.constant dense<0.000000e+00> : vector<8x16xf32>
    %363 = tpu.matmul %362, %346, %cst_177 {dimension_numbers = #tpu.dot_dimension_numbers<[1], [0], [0], [1], [0, 0, 1, 1], [], []>} : vector<8x8xf32>, vector<8x16xf32>, vector<8x16xf32> -> vector<8x16xf32>
    %c0_178 = arith.constant 0 : index
    %c199 = arith.constant 199 : index
    %364 = vector.load %arg11[%c0_178, %c199] : memref<8x324xf32, #tpu.memory_space<vmem>>, vector<8x16xf32>
    tpu.vector_store %arg11[%c0_178, %c199], %363 {strides = array<i32>} : memref<8x324xf32, #tpu.memory_space<vmem>>, vector<8x16xf32>,
    %365 = vector.extract_strided_slice %339 {offsets = [0, 60], sizes = [8, 8], strides = [1, 1]} : vector<8x78xf32> to vector<8x8xf32>
    %cst_179 = arith.constant dense<0.000000e+00> : vector<8x16xf32>
    %366 = tpu.matmul %365, %346, %cst_179 {dimension_numbers = #tpu.dot_dimension_numbers<[1], [0], [0], [1], [0, 0, 1, 1], [], []>} : vector<8x8xf32>, vector<8x16xf32>, vector<8x16xf32> -> vector<8x16xf32>
    %c0_180 = arith.constant 0 : index
    %c235 = arith.constant 235 : index
    %367 = vector.load %arg11[%c0_180, %c235] : memref<8x324xf32, #tpu.memory_space<vmem>>, vector<8x16xf32>
    tpu.vector_store %arg11[%c0_180, %c235], %366 {strides = array<i32>} : memref<8x324xf32, #tpu.memory_space<vmem>>, vector<8x16xf32>,
    %368 = vector.extract_strided_slice %339 {offsets = [0, 70], sizes = [8, 8], strides = [1, 1]} : vector<8x78xf32> to vector<8x8xf32>
    %cst_181 = arith.constant dense<0.000000e+00> : vector<8x16xf32>
    %369 = tpu.matmul %368, %346, %cst_181 {dimension_numbers = #tpu.dot_dimension_numbers<[1], [0], [0], [1], [0, 0, 1, 1], [], []>} : vector<8x8xf32>, vector<8x16xf32>, vector<8x16xf32> -> vector<8x16xf32>
    %c0_182 = arith.constant 0 : index
    %c271 = arith.constant 271 : index
    %370 = vector.load %arg11[%c0_182, %c271] : memref<8x324xf32, #tpu.memory_space<vmem>>, vector<8x16xf32>
    tpu.vector_store %arg11[%c0_182, %c271], %369 {strides = array<i32>} : memref<8x324xf32, #tpu.memory_space<vmem>>, vector<8x16xf32>,
    %c0_183 = arith.constant 0 : index
    %c0_184 = arith.constant 0 : index
    %371 = vector.load %arg11[%c0_183, %c0_184] : memref<8x324xf32, #tpu.memory_space<vmem>>, vector<8x324xf32>
    %372 = vector.extract_strided_slice %371 {offsets = [0, 0], sizes = [8, 286], strides = [1, 1]} : vector<8x324xf32> to vector<8x286xf32>
    %373 = vector.extract_strided_slice %371 {offsets = [0, 1], sizes = [8, 286], strides = [1, 1]} : vector<8x324xf32> to vector<8x286xf32>
    %374 = vector.extract_strided_slice %371 {offsets = [0, 2], sizes = [8, 286], strides = [1, 1]} : vector<8x324xf32> to vector<8x286xf32>
    %375 = vector.extract_strided_slice %371 {offsets = [0, 18], sizes = [8, 286], strides = [1, 1]} : vector<8x324xf32> to vector<8x286xf32>
    %376 = vector.extract_strided_slice %371 {offsets = [0, 19], sizes = [8, 286], strides = [1, 1]} : vector<8x324xf32> to vector<8x286xf32>
    %377 = vector.extract_strided_slice %371 {offsets = [0, 20], sizes = [8, 286], strides = [1, 1]} : vector<8x324xf32> to vector<8x286xf32>
    %378 = vector.extract_strided_slice %371 {offsets = [0, 36], sizes = [8, 286], strides = [1, 1]} : vector<8x324xf32> to vector<8x286xf32>
    %379 = vector.extract_strided_slice %371 {offsets = [0, 37], sizes = [8, 286], strides = [1, 1]} : vector<8x324xf32> to vector<8x286xf32>
    %380 = vector.extract_strided_slice %371 {offsets = [0, 38], sizes = [8, 286], strides = [1, 1]} : vector<8x324xf32> to vector<8x286xf32>
    %381 = tpu.concatenate %372, %373, %374, %375, %376, %377, %378, %379, %380 in 0 : vector<8x286xf32>, vector<8x286xf32>, vector<8x286xf32>, vector<8x286xf32>, vector<8x286xf32>, vector<8x286xf32>, vector<8x286xf32>, vector<8x286xf32>, vector<8x286xf32> -> vector<72x286xf32>
    %382 = arith.truncf %381 : vector<72x286xf32> to vector<72x286xbf16>
    %c6 = arith.constant 6 : index
    %c0_185 = arith.constant 0 : index
    %c0_186 = arith.constant 0 : index
    %383 = vector.load %arg2[%c6, %c0_185, %c0_186] : memref<7x8x72xbf16, #tpu.memory_space<vmem>>, vector<1x8x72xbf16>
    %384 = vector.shape_cast %383 : vector<1x8x72xbf16> to vector<8x72xbf16>
    %cst_187 = arith.constant dense<0.000000e+00> : vector<8x286xf32>
    %385 = tpu.matmul %384, %382, %cst_187 {dimension_numbers = #tpu.dot_dimension_numbers<[1], [0], [0], [1], [0, 0, 1, 1], [], []>} : vector<8x72xbf16>, vector<72x286xbf16>, vector<8x286xf32> -> vector<8x286xf32>
    %386 = vector.extract_strided_slice %385 {offsets = [0, 0], sizes = [8, 16], strides = [1, 1]} : vector<8x286xf32> to vector<8x16xf32>
    %c0_188 = arith.constant 0 : index
    %c0_189 = arith.constant 0 : index
    %c0_190 = arith.constant 0 : index
    %387 = vector.load %arg3[%c0_188, %c0_189, %c0_190] : memref<1x8x256xf32, #tpu.memory_space<vmem>>, vector<1x8x16xf32>
    %388 = vector.shape_cast %387 : vector<1x8x16xf32> to vector<8x16xf32>
    %389 = vector.shape_cast %386 : vector<8x16xf32> to vector<1x8x16xf32>
    tpu.vector_store %arg3[%c0_188, %c0_189, %c0_190], %389 {strides = array<i32>} : memref<1x8x256xf32, #tpu.memory_space<vmem>>, vector<1x8x16xf32>,
    %390 = vector.extract_strided_slice %385 {offsets = [0, 18], sizes = [8, 16], strides = [1, 1]} : vector<8x286xf32> to vector<8x16xf32>
    %c0_191 = arith.constant 0 : index
    %c0_192 = arith.constant 0 : index
    %c16_193 = arith.constant 16 : index
    %391 = vector.load %arg3[%c0_191, %c0_192, %c16_193] : memref<1x8x256xf32, #tpu.memory_space<vmem>>, vector<1x8x16xf32>
    %392 = vector.shape_cast %391 : vector<1x8x16xf32> to vector<8x16xf32>
    %393 = vector.shape_cast %390 : vector<8x16xf32> to vector<1x8x16xf32>
    tpu.vector_store %arg3[%c0_191, %c0_192, %c16_193], %393 {strides = array<i32>} : memref<1x8x256xf32, #tpu.memory_space<vmem>>, vector<1x8x16xf32>,
    %394 = vector.extract_strided_slice %385 {offsets = [0, 36], sizes = [8, 16], strides = [1, 1]} : vector<8x286xf32> to vector<8x16xf32>
    %c0_194 = arith.constant 0 : index
    %c0_195 = arith.constant 0 : index
    %c32_196 = arith.constant 32 : index
    %395 = vector.load %arg3[%c0_194, %c0_195, %c32_196] : memref<1x8x256xf32, #tpu.memory_space<vmem>>, vector<1x8x16xf32>
    %396 = vector.shape_cast %395 : vector<1x8x16xf32> to vector<8x16xf32>
    %397 = vector.shape_cast %394 : vector<8x16xf32> to vector<1x8x16xf32>
    tpu.vector_store %arg3[%c0_194, %c0_195, %c32_196], %397 {strides = array<i32>} : memref<1x8x256xf32, #tpu.memory_space<vmem>>, vector<1x8x16xf32>,
    %398 = vector.extract_strided_slice %385 {offsets = [0, 54], sizes = [8, 16], strides = [1, 1]} : vector<8x286xf32> to vector<8x16xf32>
    %c0_197 = arith.constant 0 : index
    %c0_198 = arith.constant 0 : index
    %c48_199 = arith.constant 48 : index
    %399 = vector.load %arg3[%c0_197, %c0_198, %c48_199] : memref<1x8x256xf32, #tpu.memory_space<vmem>>, vector<1x8x16xf32>
    %400 = vector.shape_cast %399 : vector<1x8x16xf32> to vector<8x16xf32>
    %401 = vector.shape_cast %398 : vector<8x16xf32> to vector<1x8x16xf32>
    tpu.vector_store %arg3[%c0_197, %c0_198, %c48_199], %401 {strides = array<i32>} : memref<1x8x256xf32, #tpu.memory_space<vmem>>, vector<1x8x16xf32>,
    %402 = vector.extract_strided_slice %385 {offsets = [0, 72], sizes = [8, 16], strides = [1, 1]} : vector<8x286xf32> to vector<8x16xf32>
    %c0_200 = arith.constant 0 : index
    %c0_201 = arith.constant 0 : index
    %c64 = arith.constant 64 : index
    %403 = vector.load %arg3[%c0_200, %c0_201, %c64] : memref<1x8x256xf32, #tpu.memory_space<vmem>>, vector<1x8x16xf32>
    %404 = vector.shape_cast %403 : vector<1x8x16xf32> to vector<8x16xf32>
    %405 = vector.shape_cast %402 : vector<8x16xf32> to vector<1x8x16xf32>
    tpu.vector_store %arg3[%c0_200, %c0_201, %c64], %405 {strides = array<i32>} : memref<1x8x256xf32, #tpu.memory_space<vmem>>, vector<1x8x16xf32>,
    %406 = vector.extract_strided_slice %385 {offsets = [0, 90], sizes = [8, 16], strides = [1, 1]} : vector<8x286xf32> to vector<8x16xf32>
    %c0_202 = arith.constant 0 : index
    %c0_203 = arith.constant 0 : index
    %c80 = arith.constant 80 : index
    %407 = vector.load %arg3[%c0_202, %c0_203, %c80] : memref<1x8x256xf32, #tpu.memory_space<vmem>>, vector<1x8x16xf32>
    %408 = vector.shape_cast %407 : vector<1x8x16xf32> to vector<8x16xf32>
    %409 = vector.shape_cast %406 : vector<8x16xf32> to vector<1x8x16xf32>
    tpu.vector_store %arg3[%c0_202, %c0_203, %c80], %409 {strides = array<i32>} : memref<1x8x256xf32, #tpu.memory_space<vmem>>, vector<1x8x16xf32>,
    %410 = vector.extract_strided_slice %385 {offsets = [0, 108], sizes = [8, 16], strides = [1, 1]} : vector<8x286xf32> to vector<8x16xf32>
    %c0_204 = arith.constant 0 : index
    %c0_205 = arith.constant 0 : index
    %c96 = arith.constant 96 : index
    %411 = vector.load %arg3[%c0_204, %c0_205, %c96] : memref<1x8x256xf32, #tpu.memory_space<vmem>>, vector<1x8x16xf32>
    %412 = vector.shape_cast %411 : vector<1x8x16xf32> to vector<8x16xf32>
    %413 = vector.shape_cast %410 : vector<8x16xf32> to vector<1x8x16xf32>
    tpu.vector_store %arg3[%c0_204, %c0_205, %c96], %413 {strides = array<i32>} : memref<1x8x256xf32, #tpu.memory_space<vmem>>, vector<1x8x16xf32>,
    %414 = vector.extract_strided_slice %385 {offsets = [0, 126], sizes = [8, 16], strides = [1, 1]} : vector<8x286xf32> to vector<8x16xf32>
    %c0_206 = arith.constant 0 : index
    %c0_207 = arith.constant 0 : index
    %c112 = arith.constant 112 : index
    %415 = vector.load %arg3[%c0_206, %c0_207, %c112] : memref<1x8x256xf32, #tpu.memory_space<vmem>>, vector<1x8x16xf32>
    %416 = vector.shape_cast %415 : vector<1x8x16xf32> to vector<8x16xf32>
    %417 = vector.shape_cast %414 : vector<8x16xf32> to vector<1x8x16xf32>
    tpu.vector_store %arg3[%c0_206, %c0_207, %c112], %417 {strides = array<i32>} : memref<1x8x256xf32, #tpu.memory_space<vmem>>, vector<1x8x16xf32>,
    %418 = vector.extract_strided_slice %385 {offsets = [0, 144], sizes = [8, 16], strides = [1, 1]} : vector<8x286xf32> to vector<8x16xf32>
    %c0_208 = arith.constant 0 : index
    %c0_209 = arith.constant 0 : index
    %c128 = arith.constant 128 : index
    %419 = vector.load %arg3[%c0_208, %c0_209, %c128] : memref<1x8x256xf32, #tpu.memory_space<vmem>>, vector<1x8x16xf32>
    %420 = vector.shape_cast %419 : vector<1x8x16xf32> to vector<8x16xf32>
    %421 = vector.shape_cast %418 : vector<8x16xf32> to vector<1x8x16xf32>
    tpu.vector_store %arg3[%c0_208, %c0_209, %c128], %421 {strides = array<i32>} : memref<1x8x256xf32, #tpu.memory_space<vmem>>, vector<1x8x16xf32>,
    %422 = vector.extract_strided_slice %385 {offsets = [0, 162], sizes = [8, 16], strides = [1, 1]} : vector<8x286xf32> to vector<8x16xf32>
    %c0_210 = arith.constant 0 : index
    %c0_211 = arith.constant 0 : index
    %c144 = arith.constant 144 : index
    %423 = vector.load %arg3[%c0_210, %c0_211, %c144] : memref<1x8x256xf32, #tpu.memory_space<vmem>>, vector<1x8x16xf32>
    %424 = vector.shape_cast %423 : vector<1x8x16xf32> to vector<8x16xf32>
    %425 = vector.shape_cast %422 : vector<8x16xf32> to vector<1x8x16xf32>
    tpu.vector_store %arg3[%c0_210, %c0_211, %c144], %425 {strides = array<i32>} : memref<1x8x256xf32, #tpu.memory_space<vmem>>, vector<1x8x16xf32>,
    %426 = vector.extract_strided_slice %385 {offsets = [0, 180], sizes = [8, 16], strides = [1, 1]} : vector<8x286xf32> to vector<8x16xf32>
    %c0_212 = arith.constant 0 : index
    %c0_213 = arith.constant 0 : index
    %c160 = arith.constant 160 : index
    %427 = vector.load %arg3[%c0_212, %c0_213, %c160] : memref<1x8x256xf32, #tpu.memory_space<vmem>>, vector<1x8x16xf32>
    %428 = vector.shape_cast %427 : vector<1x8x16xf32> to vector<8x16xf32>
    %429 = vector.shape_cast %426 : vector<8x16xf32> to vector<1x8x16xf32>
    tpu.vector_store %arg3[%c0_212, %c0_213, %c160], %429 {strides = array<i32>} : memref<1x8x256xf32, #tpu.memory_space<vmem>>, vector<1x8x16xf32>,
    %430 = vector.extract_strided_slice %385 {offsets = [0, 198], sizes = [8, 16], strides = [1, 1]} : vector<8x286xf32> to vector<8x16xf32>
    %c0_214 = arith.constant 0 : index
    %c0_215 = arith.constant 0 : index
    %c176 = arith.constant 176 : index
    %431 = vector.load %arg3[%c0_214, %c0_215, %c176] : memref<1x8x256xf32, #tpu.memory_space<vmem>>, vector<1x8x16xf32>
    %432 = vector.shape_cast %431 : vector<1x8x16xf32> to vector<8x16xf32>
    %433 = vector.shape_cast %430 : vector<8x16xf32> to vector<1x8x16xf32>
    tpu.vector_store %arg3[%c0_214, %c0_215, %c176], %433 {strides = array<i32>} : memref<1x8x256xf32, #tpu.memory_space<vmem>>, vector<1x8x16xf32>,
    %434 = vector.extract_strided_slice %385 {offsets = [0, 216], sizes = [8, 16], strides = [1, 1]} : vector<8x286xf32> to vector<8x16xf32>
    %c0_216 = arith.constant 0 : index
    %c0_217 = arith.constant 0 : index
    %c192 = arith.constant 192 : index
    %435 = vector.load %arg3[%c0_216, %c0_217, %c192] : memref<1x8x256xf32, #tpu.memory_space<vmem>>, vector<1x8x16xf32>
    %436 = vector.shape_cast %435 : vector<1x8x16xf32> to vector<8x16xf32>
    %437 = vector.shape_cast %434 : vector<8x16xf32> to vector<1x8x16xf32>
    tpu.vector_store %arg3[%c0_216, %c0_217, %c192], %437 {strides = array<i32>} : memref<1x8x256xf32, #tpu.memory_space<vmem>>, vector<1x8x16xf32>,
    %438 = vector.extract_strided_slice %385 {offsets = [0, 234], sizes = [8, 16], strides = [1, 1]} : vector<8x286xf32> to vector<8x16xf32>
    %c0_218 = arith.constant 0 : index
    %c0_219 = arith.constant 0 : index
    %c208 = arith.constant 208 : index
    %439 = vector.load %arg3[%c0_218, %c0_219, %c208] : memref<1x8x256xf32, #tpu.memory_space<vmem>>, vector<1x8x16xf32>
    %440 = vector.shape_cast %439 : vector<1x8x16xf32> to vector<8x16xf32>
    %441 = vector.shape_cast %438 : vector<8x16xf32> to vector<1x8x16xf32>
    tpu.vector_store %arg3[%c0_218, %c0_219, %c208], %441 {strides = array<i32>} : memref<1x8x256xf32, #tpu.memory_space<vmem>>, vector<1x8x16xf32>,
    %442 = vector.extract_strided_slice %385 {offsets = [0, 252], sizes = [8, 16], strides = [1, 1]} : vector<8x286xf32> to vector<8x16xf32>
    %c0_220 = arith.constant 0 : index
    %c0_221 = arith.constant 0 : index
    %c224 = arith.constant 224 : index
    %443 = vector.load %arg3[%c0_220, %c0_221, %c224] : memref<1x8x256xf32, #tpu.memory_space<vmem>>, vector<1x8x16xf32>
    %444 = vector.shape_cast %443 : vector<1x8x16xf32> to vector<8x16xf32>
    %445 = vector.shape_cast %442 : vector<8x16xf32> to vector<1x8x16xf32>
    tpu.vector_store %arg3[%c0_220, %c0_221, %c224], %445 {strides = array<i32>} : memref<1x8x256xf32, #tpu.memory_space<vmem>>, vector<1x8x16xf32>,
    %446 = vector.extract_strided_slice %385 {offsets = [0, 270], sizes = [8, 16], strides = [1, 1]} : vector<8x286xf32> to vector<8x16xf32>
    %c0_222 = arith.constant 0 : index
    %c0_223 = arith.constant 0 : index
    %c240 = arith.constant 240 : index
    %447 = vector.load %arg3[%c0_222, %c0_223, %c240] : memref<1x8x256xf32, #tpu.memory_space<vmem>>, vector<1x8x16xf32>
    %448 = vector.shape_cast %447 : vector<1x8x16xf32> to vector<8x16xf32>
    %449 = vector.shape_cast %446 : vector<8x16xf32> to vector<1x8x16xf32>
    tpu.vector_store %arg3[%c0_222, %c0_223, %c240], %449 {strides = array<i32>} : memref<1x8x256xf32, #tpu.memory_space<vmem>>, vector<1x8x16xf32>,
    return
  }
  func.func @transform_0(%arg0: i32) -> (i32, i32, i32) {
    %c0_i32 = arith.constant 0 : i32
    %c0_i32_0 = arith.constant 0 : i32
    %c0_i32_1 = arith.constant 0 : i32
    return %arg0, %c0_i32, %c0_i32_0 : i32, i32, i32
  }
  func.func @transform_1(%arg0: i32) -> (i32, i32, i32) {
    %c0_i32 = arith.constant 0 : i32
    %c0_i32_0 = arith.constant 0 : i32
    %c0_i32_1 = arith.constant 0 : i32
    %c0_i32_2 = arith.constant 0 : i32
    return %c0_i32, %c0_i32_0, %c0_i32_1 : i32, i32, i32
  }
  func.func @transform_2(%arg0: i32) -> (i32, i32, i32) {
    %c0_i32 = arith.constant 0 : i32
    %c0_i32_0 = arith.constant 0 : i32
    %c0_i32_1 = arith.constant 0 : i32
    return %arg0, %c0_i32, %c0_i32_0 : i32, i32, i32
  }
  func.func @transform_3(%arg0: i32) -> (i32, i32, i32) {
    %c0_i32 = arith.constant 0 : i32
    %c0_i32_0 = arith.constant 0 : i32
    %c0_i32_1 = arith.constant 0 : i32
    return %arg0, %c0_i32, %c0_i32_0 : i32, i32, i32
  }
  func.func @transform_4(%arg0: i32) -> (i32, i32, i32) {
    %c0_i32 = arith.constant 0 : i32
    %c0_i32_0 = arith.constant 0 : i32
    %c0_i32_1 = arith.constant 0 : i32
    return %arg0, %c0_i32, %c0_i32_0 : i32, i32, i32
  }
}

</mosaic_0001>

<llo_original>
// kernel: radar_ae2_forward.1
$region0: #{radar_ae2_forward.1}
  #allocation0 [shape = 'u32[]', space=smem, size = 0x4, offset = 0x4, fixed_abs, tag = 'smem constant byte address 0x4 - core index']
  #allocation1 [shape = 'u32[144,128]{1,0:T(1,128)}', space=vmem, size = 0x12000, scoped, tag = 'internal scratch']
  #allocation2 [shape = 'f32[8,100]{1,0:T(8,128)}', space=vmem, size = 0x1000, scoped, tag = 'scratch operand']
  #allocation3 [shape = 'f32[8,100]{1,0:T(8,128)}', space=vmem, size = 0x1000, scoped, tag = 'scratch operand']
  #allocation4 [shape = 'f32[8,36]{1,0:T(8,128)}', space=vmem, size = 0x1000, scoped, tag = 'scratch operand']
  #allocation5 [shape = 'f32[8,100]{1,0:T(8,128)}', space=vmem, size = 0x1000, scoped, tag = 'scratch operand']
  #allocation6 [shape = 'f32[8,100]{1,0:T(8,128)}', space=vmem, size = 0x1000, scoped, tag = 'scratch operand']
  #allocation7 [shape = 'f32[8,324]{1,0:T(8,128)}', space=vmem, size = 0x3000, scoped, tag = 'scratch operand']
  %s0 = inlined_call_operand.vmem [shape: f32[2,8,324], index: 0, kind: input, shape index: {}]
  %s1 = inlined_call_operand.vmem [shape: bf16[7,8,72], index: 1, kind: input, shape index: {}]
  %s2 = inlined_call_operand.vmem [shape: f32[2,8,256], index: 2, kind: output, shape index: {0}]
  %s3 = inlined_call_operand.vmem [shape: f32[2,6,64], index: 3, kind: output, shape index: {1}]
  %s4 = inlined_call_operand.vmem [shape: f32[2,6,64], index: 4, kind: output, shape index: {2}]
  %5 = xla_tuple %s2, %s3, %s4
  %s6 = sld [smem:[#allocation0]]
  $region57: #{radar_ae2_forward.1} parent=0
    _
  %s8 = ssub.s32 1, %s6
  %s9 = scalar_select 0, %s8, %s6
  loop: start=0, step=1, limit=4
  $region2: #{radar_ae2_forward.1} parent=0 // loop_pre_header
    _
  $region3: #{radar_ae2_forward.1} parent=0 // loop_header
    %s11 = sphi 0, %s15
    %p12 = scmp.ge.s32.totalorder %s11, 4
    %s21 = sphi 0, %s23
    %s24 = sphi 0, %s21
    %s25 = sphi 0, %s24
    %s41 = sphi 0, %s25
    %s45 = sphi 0, %s45
    %s47 = sphi 0, %s45
    %s48 = sphi 0, %s47
    %s62 = sphi 0, %s48
    %s68 = sphi 0, %s70
    %s71 = sphi 0, %s68
    %s72 = sphi 0, %s71
    %s88 = sphi 0, %s72
    %s94 = sphi 0, %s96
    %s97 = sphi 0, %s94
    %s98 = sphi 0, %s97
    %s114 = sphi 0, %s98
    %s120 = sphi 0, %s122
    %s123 = sphi 0, %s120
    %s124 = sphi 0, %s123
    %s140 = sphi 0, %s124
  $region4: #{radar_ae2_forward.1} parent=0 // loop_header_branch
    %14 = sbr.rel (%p12) target = $region8
  $region5: #{radar_ae2_forward.1} parent=0 // loop_body
    %s16 = ssub.s32 %s11, 1
    %s17 = ssub.s32 %s11, 2
    %s18 = sadd.s32 %s11, 1
    %s19 = ssub.s32 %s11, %s18
    %p20 = scmp.eq.s32.totalorder %s19, 0
    %s22 = sadd.s32 %s21, 1
    %s23 = scalar_select %p20, %s21, %s22
    %p26 = pneg %p20
    %p27 = scmp.eq.s32.totalorder %s11, 1
    %p28 = por %p26, %p27
    %p29 = scmp.ne.s32.totalorder %s21, %s24
    %p30 = scmp.eq.s32.totalorder %s11, 0
    %p31 = por %p29, %p30
    %p32 = scmp.ne.s32.totalorder %s21, %s24
    %p33 = scmp.eq.s32.totalorder %s16, 1
    %p34 = por %p32, %p33
    %p35 = scmp.ne.s32.totalorder %s24, %s25
    %p36 = scmp.eq.s32.totalorder %s16, 0
    %p37 = por %p35, %p36
    %p38 = scmp.ne.s32.totalorder %s24, %s25
    %p39 = scmp.eq.s32.totalorder %s17, 1
    %p40 = por %p38, %p39
    %p42 = scmp.ne.s32.totalorder %s25, %s41
    %p43 = scmp.eq.s32.totalorder %s17, 0
    %p44 = por %p42, %p43
    %s46 = sadd.s32 %s45, 1
    %p49 = scmp.eq.s32.totalorder %s11, 1
    %p50 = scmp.ne.s32.totalorder %s45, %s47
    %p51 = scmp.eq.s32.totalorder %s11, 0
    %p52 = por %p50, %p51
    %p53 = scmp.ne.s32.totalorder %s45, %s47
    %p54 = scmp.eq.s32.totalorder %s16, 1
    %p55 = por %p53, %p54
    %p56 = scmp.ne.s32.totalorder %s47, %s48
    %p57 = scmp.eq.s32.totalorder %s16, 0
    %p58 = por %p56, %p57
    %p59 = scmp.ne.s32.totalorder %s47, %s48
    %p60 = scmp.eq.s32.totalorder %s17, 1
    %p61 = por %p59, %p60
    %p63 = scmp.ne.s32.totalorder %s48, %s62
    %p64 = scmp.eq.s32.totalorder %s17, 0
    %p65 = por %p63, %p64
    %s66 = ssub.s32 %s11, %s18
    %p67 = scmp.eq.s32.totalorder %s66, 0
    %s69 = sadd.s32 %s68, 1
    %s70 = scalar_select %p67, %s68, %s69
    %p73 = pneg %p67
    %p74 = scmp.eq.s32.totalorder %s11, 1
    %p75 = por %p73, %p74
    %p76 = scmp.ne.s32.totalorder %s68, %s71
    %p77 = scmp.eq.s32.totalorder %s11, 0
    %p78 = por %p76, %p77
    %p79 = scmp.ne.s32.totalorder %s68, %s71
    %p80 = scmp.eq.s32.totalorder %s16, 1
    %p81 = por %p79, %p80
    %p82 = scmp.ne.s32.totalorder %s71, %s72
    %p83 = scmp.eq.s32.totalorder %s16, 0
    %p84 = por %p82, %p83
    %p85 = scmp.ne.s32.totalorder %s71, %s72
    %p86 = scmp.eq.s32.totalorder %s17, 1
    %p87 = por %p85, %p86
    %p89 = scmp.ne.s32.totalorder %s72, %s88
    %p90 = scmp.eq.s32.totalorder %s17, 0
    %p91 = por %p89, %p90
    %s92 = ssub.s32 %s11, %s18
    %p93 = scmp.eq.s32.totalorder %s92, 0
    %s95 = sadd.s32 %s94, 1
    %s96 = scalar_select %p93, %s94, %s95
    %p99 = pneg %p93
    %p100 = scmp.eq.s32.totalorder %s11, 1
    %p101 = por %p99, %p100
    %p102 = scmp.ne.s32.totalorder %s94, %s97
    %p103 = scmp.eq.s32.totalorder %s11, 0
    %p104 = por %p102, %p103
    %p105 = scmp.ne.s32.totalorder %s94, %s97
    %p106 = scmp.eq.s32.totalorder %s16, 1
    %p107 = por %p105, %p106
    %p108 = scmp.ne.s32.totalorder %s97, %s98
    %p109 = scmp.eq.s32.totalorder %s16, 0
    %p110 = por %p108, %p109
    %p111 = scmp.ne.s32.totalorder %s97, %s98
    %p112 = scmp.eq.s32.totalorder %s17, 1
    %p113 = por %p111, %p112
    %p115 = scmp.ne.s32.totalorder %s98, %s114
    %p116 = scmp.eq.s32.totalorder %s17, 0
    %p117 = por %p115, %p116
    %s118 = ssub.s32 %s11, %s18
    %p119 = scmp.eq.s32.totalorder %s118, 0
    %s121 = sadd.s32 %s120, 1
    %s122 = scalar_select %p119, %s120, %s121
    %p125 = pneg %p119
    %p126 = scmp.eq.s32.totalorder %s11, 1
    %p127 = por %p125, %p126
    %p128 = scmp.ne.s32.totalorder %s120, %s123
    %p129 = scmp.eq.s32.totalorder %s11, 0
    %p130 = por %p128, %p129
    %p131 = scmp.ne.s32.totalorder %s120, %s123
    %p132 = scmp.eq.s32.totalorder %s16, 1
    %p133 = por %p131, %p132
    %p134 = scmp.ne.s32.totalorder %s123, %s124
    %p135 = scmp.eq.s32.totalorder %s16, 0
    %p136 = por %p134, %p135
    %p137 = scmp.ne.s32.totalorder %s123, %s124
    %p138 = scmp.eq.s32.totalorder %s17, 1
    %p139 = por %p137, %p138
    %p141 = scmp.ne.s32.totalorder %s124, %s140
    %p142 = scmp.eq.s32.totalorder %s17, 0
    %p143 = por %p141, %p142
    %p144 = scmp.le.s32.totalorder 1, %s11
    %p145 = scmp.lt.s32.totalorder %s11, 3
    %p146 = pnand %p144, %p145
    %p147 = pneg %p146
    // Predicated region
    $region9: #{radar_ae2_forward.1} parent=5 // pred_check
      _
    $region10: #{radar_ae2_forward.1} parent=5 // pred_check_branch
      %149 = sbr.rel (%p146) target = $region12
    $region11: #{radar_ae2_forward.1} parent=5 // pred_region
      %s150 = ssub.s32 %s11, 1
      // Predicated region
      $region13: #{radar_ae2_forward.1} parent=11 // pred_check
        %p151 = pneg %p58
      $region14: #{radar_ae2_forward.1} parent=11 // pred_check_branch
        %153 = sbr.rel (%p151) target = $region16
      $region15: #{radar_ae2_forward.1} parent=11 // pred_region
        _
      $region16: #{radar_ae2_forward.1} parent=11 // pred_fallthru
        _
    $region12: #{radar_ae2_forward.1} parent=5 // pred_fallthru
      _
    %p154 = scmp.lt.s32.totalorder %s11, 2
    // Predicated region
    $region17: #{radar_ae2_forward.1} parent=5 // pred_check
      %p155 = pneg %p154
    $region18: #{radar_ae2_forward.1} parent=5 // pred_check_branch
      %157 = sbr.rel (%p155) target = $region20
    $region19: #{radar_ae2_forward.1} parent=5 // pred_region
      // Predicated region
      $region21: #{radar_ae2_forward.1} parent=19 // pred_check
        %p158 = pneg %p31
      $region22: #{radar_ae2_forward.1} parent=19 // pred_check_branch
        %160 = sbr.rel (%p158) target = $region24
      $region23: #{radar_ae2_forward.1} parent=19 // pred_region
        %p161 = scmp.lt.s32.totalorder %s11, 1
        %s162 = scalar_select %p161, %s11, 1
        %s163 = smul.addr %s162, 3
        %s164 = smul.addr %s163, 8
        %s165 = scalar_lea.vmem %s0, %s164
      $region24: #{radar_ae2_forward.1} parent=19 // pred_fallthru
        _
    $region20: #{radar_ae2_forward.1} parent=5 // pred_fallthru
      _
    %p166 = scmp.le.s32.totalorder 1, %s11
    %p167 = scmp.lt.s32.totalorder %s11, 3
    %p168 = pnand %p166, %p167
    %p169 = pneg %p168
    // Predicated region
    $region25: #{radar_ae2_forward.1} parent=5 // pred_check
      _
    $region26: #{radar_ae2_forward.1} parent=5 // pred_check_branch
      %171 = sbr.rel (%p168) target = $region28
    $region27: #{radar_ae2_forward.1} parent=5 // pred_region
      %s172 = ssub.s32 %s11, 1
      %p173 = scmp.lt.s32.totalorder %s16, 1
      %s174 = scalar_select %p173, %s16, 1
      %s175 = smul.addr %s174, 3
      %s176 = smul.addr %s175, 8
      %s177 = scalar_lea.vmem %s0, %s176
      %p178 = pneg %p37
      %p179 = pneg %p34
      %p180 = pneg %p58
      %p181 = pneg %p55
      %p182 = pneg %p84
      %p183 = pneg %p81
      %p184 = scmp.lt.s32.totalorder %s16, 1
      %s185 = scalar_select %p184, %s16, 1
      %s186 = smul.addr %s185, 2
      %s187 = smul.addr %s186, 8
      %s188 = scalar_lea.vmem %s2, %s187
      %p189 = pneg %p110
      %p190 = pneg %p107
      %p191 = scmp.lt.s32.totalorder %s16, 1
      %s192 = scalar_select %p191, %s16, 1
      %s193 = smul.addr %s192, 8
      %s194 = scalar_lea.vmem %s3, %s193
      %p195 = pneg %p136
      %p196 = pneg %p133
      %p197 = scmp.lt.s32.totalorder %s16, 1
      %s198 = scalar_select %p197, %s16, 1
      %s199 = smul.addr %s198, 8
      %s200 = scalar_lea.vmem %s4, %s199
      %p201 = scmp.lt.s32.totalorder %s16, 1
      %s202 = scalar_select %p201, %s16, 1
      %s203 = smul.addr %s202, 3
      %s204 = smul.addr %s203, 8
      %s205 = scalar_lea.vmem %s0, %s204
      %p206 = scmp.lt.s32.totalorder %s16, 1
      %s207 = scalar_select %p206, %s16, 1
      %s208 = smul.addr %s207, 2
      %s209 = smul.addr %s208, 8
      %s210 = scalar_lea.vmem %s2, %s209
      %p211 = scmp.lt.s32.totalorder %s16, 1
      %s212 = scalar_select %p211, %s16, 1
      %s213 = smul.addr %s212, 8
      %s214 = scalar_lea.vmem %s3, %s213
      %p215 = scmp.lt.s32.totalorder %s16, 1
      %s216 = scalar_select %p215, %s16, 1
      %s217 = smul.addr %s216, 8
      %s218 = scalar_lea.vmem %s4, %s217
      %vm220 = vcmask 818176
      %221 = vst.msk [vmem:[#allocation2] sm:$0xff] %vm220, 0.0
      %222 = vst.msk [vmem:[#allocation3] sm:$0xff] %vm220, 0.0
      %vm223 = vcmask 293888
      %224 = vst.msk [vmem:[#allocation4] sm:$0xff] %vm223, 0.0
      %225 = vst.msk [vmem:[#allocation5] sm:$0xff] %vm220, 0.0
      %226 = vst.msk [vmem:[#allocation6] sm:$0xff] %vm220, 0.0
      %227 = vst [vmem:[#allocation7] sm:$0xff] 0.0
      %228 = vst [vmem:[#allocation7 + $0x8] sm:$0xff] 0.0
      %vm229 = vcmask 556032
      %230 = vst.msk [vmem:[#allocation7 + $0x10] sm:$0xff] %vm229, 0.0
      %v231 = vld [vmem:[%s205] sm:$0xff]
      %v232 = vld [vmem:[%s205 + $0x8] sm:$0xff]
      %v233 = vld [vmem:[%s205 + $0x10] sm:$0xff]
      %237 = vrot.lane.b32.xlu0 %v231, 127
      %v238 = vpop.permute.xlu0 %237
      %239 = vrot.lane.b32.xlu0 %v232, 127
      %v240 = vpop.permute.xlu0 %239
      %241 = vrot.lane.b32.xlu0 %v233, 127
      %v242 = vpop.permute.xlu0 %241
      %vm243 = vcmask 1039360
      %v244 = vsel %vm243, %v238, %v240
      %v245 = vsel %vm243, %v240, %v242
      %249 = vrot.lane.b32.xlu0 %v231, 126
      %v250 = vpop.permute.xlu0 %249
      %251 = vrot.lane.b32.xlu0 %v232, 126
      %v252 = vpop.permute.xlu0 %251
      %253 = vrot.lane.b32.xlu0 %v233, 126
      %v254 = vpop.permute.xlu0 %253
      %vm255 = vcmask 1031168
      %v256 = vsel %vm255, %v250, %v252
      %v257 = vsel %vm255, %v252, %v254
      %261 = vrot.lane.b32.xlu0 %v231, 110
      %v262 = vpop.permute.xlu0 %261
      %263 = vrot.lane.b32.xlu0 %v232, 110
      %v264 = vpop.permute.xlu0 %263
      %265 = vrot.lane.b32.xlu0 %v233, 110
      %v266 = vpop.permute.xlu0 %265
      %vm267 = vcmask 900096
      %v268 = vsel %vm267, %v262, %v264
      %v269 = vsel %vm267, %v264, %v266
      %273 = vrot.lane.b32.xlu0 %v231, 109
      %v274 = vpop.permute.xlu0 %273
      %275 = vrot.lane.b32.xlu0 %v232, 109
      %v276 = vpop.permute.xlu0 %275
      %277 = vrot.lane.b32.xlu0 %v233, 109
      %v278 = vpop.permute.xlu0 %277
      %vm279 = vcmask 891904
      %v280 = vsel %vm279, %v274, %v276
      %v281 = vsel %vm279, %v276, %v278
      %285 = vrot.lane.b32.xlu0 %v231, 108
      %v286 = vpop.permute.xlu0 %285
      %287 = vrot.lane.b32.xlu0 %v232, 108
      %v288 = vpop.permute.xlu0 %287
      %289 = vrot.lane.b32.xlu0 %v233, 108
      %v290 = vpop.permute.xlu0 %289
      %vm291 = vcmask 883712
      %v292 = vsel %vm291, %v286, %v288
      %v293 = vsel %vm291, %v288, %v290
      %297 = vrot.lane.b32.xlu0 %v231, 92
      %v298 = vpop.permute.xlu0 %297
      %299 = vrot.lane.b32.xlu0 %v232, 92
      %v300 = vpop.permute.xlu0 %299
      %301 = vrot.lane.b32.xlu0 %v233, 92
      %v302 = vpop.permute.xlu0 %301
      %vm303 = vcmask 752640
      %v304 = vsel %vm303, %v298, %v300
      %v305 = vsel %vm303, %v300, %v302
      %309 = vrot.lane.b32.xlu0 %v231, 91
      %v310 = vpop.permute.xlu0 %309
      %311 = vrot.lane.b32.xlu0 %v232, 91
      %v312 = vpop.permute.xlu0 %311
      %313 = vrot.lane.b32.xlu0 %v233, 91
      %v314 = vpop.permute.xlu0 %313
      %vm315 = vcmask 744448
      %v316 = vsel %vm315, %v310, %v312
      %v317 = vsel %vm315, %v312, %v314
      %321 = vrot.lane.b32.xlu0 %v231, 90
      %v322 = vpop.permute.xlu0 %321
      %323 = vrot.lane.b32.xlu0 %v232, 90
      %v324 = vpop.permute.xlu0 %323
      %325 = vrot.lane.b32.xlu0 %v233, 90
      %v326 = vpop.permute.xlu0 %325
      %vm327 = vcmask 736256
      %v328 = vsel %vm327, %v322, %v324
      %v329 = vsel %vm327, %v324, %v326
      %v333 = vpack.c.bf16 %v244, %v231
      %v334 = vpack.c.bf16 %v245, %v232
      %v335 = vpack.c.bf16 %v242, %v233
      %v336 = vpack.c.bf16 %v268, %v256
      %v337 = vpack.c.bf16 %v269, %v257
      %v338 = vpack.c.bf16 %v266, %v254
      %v339 = vpack.c.bf16 %v292, %v280
      %v340 = vpack.c.bf16 %v293, %v281
      %v341 = vpack.c.bf16 %v290, %v278
      %v342 = vpack.c.bf16 %v316, %v304
      %v343 = vpack.c.bf16 %v317, %v305
      %v344 = vpack.c.bf16 %v314, %v302
      %v345 = vpack.c.bf16 %v328, %v328
      %v346 = vpack.c.bf16 %v329, %v329
      %v347 = vpack.c.bf16 %v326, %v326
      %v348 = vld [vmem:[%s1] sm:$0xf]
      %vm349 = vcmask 588800
      %v351 = vsel %vm349, %v348, 0
      %vm353 = vcmask 1043456
      %v355 = vsel %vm353, %v345, 0
      %v358 = vsel %vm353, %v346, 0
      %v361 = vsel %vm353, %v347, 0
      %363 = vmatprep.subr.bf16.mxu0 %v334
      %364 = vmatpush1.bf16.msra.mxu0 %v333
      %365 = vmatprep.subr.bf16.mxu0 %v337
      %366 = vmatpush1.bf16.msra.mxu0 %v336
      %367 = vmatprep.subr.bf16.mxu0 %v340
      %368 = vmatpush1.bf16.msra.mxu0 %v339
      %369 = vmatprep.subr.bf16.mxu0 %v343
      %370 = vmatpush1.bf16.msra.mxu0 %v342
      %371 = vmatprep.subr.bf16.mxu0 %v358
      %372 = vmatpush1.bf16.msra.mxu0 %v355
      %373 = vmatprep.subr.bf16.mxu0 0
      %374 = vmatpush1.bf16.msra.mxu0 0
      %375 = vmatprep.subr.bf16.mxu0 0
      %376 = vmatpush1.bf16.msra.mxu0 0
      %377 = vmatprep.subr.bf16.mxu0 0
      %378 = vmatpush1.bf16.msra.mxu0 0
      %379 = vmatprep.subr.bf16.mxu0 0
      %380 = vmatpush1.bf16.msra.mxu0 0
      %381 = vmatprep.subr.bf16.mxu0 0
      %382 = vmatpush1.bf16.msra.mxu0 0
      %383 = vmatprep.subr.bf16.mxu0 0
      %384 = vmatpush1.bf16.msra.mxu0 0
      %385 = vmatprep.subr.bf16.mxu0 0
      %386 = vmatpush1.bf16.msra.mxu0 0
      %387 = vmatprep.subr.bf16.mxu0 0
      %388 = vmatpush1.bf16.msra.mxu0 0
      %389 = vmatprep.subr.bf16.mxu0 0
      %390 = vmatpush1.bf16.msra.mxu0 0
      %391 = vmatprep.subr.bf16.mxu0 0
      %392 = vmatpush1.bf16.msra.mxu0 0
      %393 = vmatprep.subr.bf16.mxu0 0
      %394 = vmatpush1.bf16.msra.mxu0 0
      %395 = vmatprep.mubr.bf16.mxu0 0
      %396 = vmatmul.mubr.bf16.gmra.mrb[0].mxu0 %v351
      %v397 = vpop.f32.mrb[0].mxu0
      %v398 = vadd.f32 0.0, %v397
      %v399 = vpop.f32.mrb[0].mxu0
      %v400 = vadd.f32 0.0, %v399
      %v401 = vpop.f32.mrb[0].mxu0
      %v402 = vpop.f32.mrb[0].mxu0
      %403 = vdwg.mxu0
      %404 = vmatprep.subr.bf16.mxu0 0
      %405 = vmatpush1.bf16.msra.mxu0 %v335
      %406 = vmatprep.subr.bf16.mxu0 0
      %407 = vmatpush1.bf16.msra.mxu0 %v338
      %408 = vmatprep.subr.bf16.mxu0 0
      %409 = vmatpush1.bf16.msra.mxu0 %v341
      %410 = vmatprep.subr.bf16.mxu0 0
      %411 = vmatpush1.bf16.msra.mxu0 %v344
      %412 = vmatprep.subr.bf16.mxu0 0
      %413 = vmatpush1.bf16.msra.mxu0 %v361
      %414 = vmatprep.subr.bf16.mxu0 0
      %415 = vmatpush1.bf16.msra.mxu0 0
      %416 = vmatprep.subr.bf16.mxu0 0
      %417 = vmatpush1.bf16.msra.mxu0 0
      %418 = vmatprep.subr.bf16.mxu0 0
      %419 = vmatpush1.bf16.msra.mxu0 0
      %420 = vmatprep.subr.bf16.mxu0 0
      %421 = vmatpush1.bf16.msra.mxu0 0
      %422 = vmatprep.subr.bf16.mxu0 0
      %423 = vmatpush1.bf16.msra.mxu0 0
      %424 = vmatprep.subr.bf16.mxu0 0
      %425 = vmatpush1.bf16.msra.mxu0 0
      %426 = vmatprep.subr.bf16.mxu0 0
      %427 = vmatpush1.bf16.msra.mxu0 0
      %428 = vmatprep.subr.bf16.mxu0 0
      %429 = vmatpush1.bf16.msra.mxu0 0
      %430 = vmatprep.subr.bf16.mxu0 0
      %431 = vmatpush1.bf16.msra.mxu0 0
      %432 = vmatprep.subr.bf16.mxu0 0
      %433 = vmatpush1.bf16.msra.mxu0 0
      %434 = vmatprep.subr.bf16.mxu0 0
      %435 = vmatpush1.bf16.msra.mxu0 0
      %436 = vmatprep.mubr.bf16.mxu0 0
      %437 = vmatmul.mubr.bf16.gmra.mrb[0].mxu0 %v351
      %v438 = vpop.f32.mrb[0].mxu0
      %v439 = vadd.f32 0.0, %v438
      %v440 = vpop.f32.mrb[0].mxu0
      %v441 = vpop.f32.mrb[0].mxu0
      %v442 = vpop.f32.mrb[0].mxu0
      %443 = vdwg.mxu0
      %v444 = vmax.f32 %v398, 0.0
      %v445 = vmax.f32 %v400, 0.0
      %v446 = vmax.f32 %v439, 0.0
      %v447 = vlaneseq
      %v448 = vshrl.u32 %v447, 7
      %v449 = vadd.s32 %v448, 8
      %v450 = vlaneseq
      %v451 = vand.u32 %v450, 127
      %v452 = vmul.u32 %v451, 2
      %vm453 = vcmp.eq.s32.totalorder %v448, %v452
      %vm454 = vcmp.eq.s32.totalorder %v449, %v452
      %v455 = vsel %vm453, 1, 0
      %v456 = vsel %vm454, 1, 0
      %v457 = vcvt.s32.f32 %v455
      %v458 = vcvt.s32.f32 %v456
      %460 = vrot.lane.b32.xlu0 %v444, 110
      %v461 = vpop.permute.xlu0 %460
      %v463 = vmax.f32 %v444, %v461
      %465 = vrot.lane.b32.xlu0 %v463, 127
      %v466 = vpop.permute.xlu0 %465
      %v468 = vmax.f32 %v463, %v466
      %vm469 = vcmask 121856
      %v471 = vsel %vm469, %v468, 0
      %vm473 = vcmask 1046528
      %v475 = vsel %vm473, %v458, 0
      %477 = vmatprep.subr.mxu0 0.0
      %478 = vmatpush1.msra.mxu0 %v457
      %479 = vmatprep.subr.mxu0 0.0
      %480 = vmatpush1.msra.mxu0 %v475
      %481 = vmatprep.subr.mxu0 0.0
      %482 = vmatpush1.msra.mxu0 0.0
      %483 = vmatprep.subr.mxu0 0.0
      %484 = vmatpush1.msra.mxu0 0.0
      %485 = vmatprep.subr.mxu0 0.0
      %486 = vmatpush1.msra.mxu0 0.0
      %487 = vmatprep.subr.mxu0 0.0
      %488 = vmatpush1.msra.mxu0 0.0
      %489 = vmatprep.subr.mxu0 0.0
      %490 = vmatpush1.msra.mxu0 0.0
      %491 = vmatprep.subr.mxu0 0.0
      %492 = vmatpush1.msra.mxu0 0.0
      %493 = vmatprep.subr.mxu0 0.0
      %494 = vmatpush1.msra.mxu0 0.0
      %495 = vmatprep.subr.mxu0 0.0
      %496 = vmatpush1.msra.mxu0 0.0
      %497 = vmatprep.subr.mxu0 0.0
      %498 = vmatpush1.msra.mxu0 0.0
      %499 = vmatprep.subr.mxu0 0.0
      %500 = vmatpush1.msra.mxu0 0.0
      %501 = vmatprep.subr.mxu0 0.0
      %502 = vmatpush1.msra.mxu0 0.0
      %503 = vmatprep.subr.mxu0 0.0
      %504 = vmatpush1.msra.mxu0 0.0
      %505 = vmatprep.subr.mxu0 0.0
      %506 = vmatpush1.msra.mxu0 0.0
      %507 = vmatprep.subr.mxu0 0.0
      %508 = vmatpush1.msra.mxu0 0.0
      %509 = vmatprep.subr.mxu0 0.0
      %510 = vmatpush1.msra.mxu0 0.0
      %511 = vmatprep.subr.mxu0 0.0
      %512 = vmatpush1.msra.mxu0 0.0
      %513 = vmatprep.subr.mxu0 0.0
      %514 = vmatpush1.msra.mxu0 0.0
      %515 = vmatprep.subr.mxu0 0.0
      %516 = vmatpush1.msra.mxu0 0.0
      %517 = vmatprep.subr.mxu0 0.0
      %518 = vmatpush1.msra.mxu0 0.0
      %519 = vmatprep.subr.mxu0 0.0
      %520 = vmatpush1.msra.mxu0 0.0
      %521 = vmatprep.subr.mxu0 0.0
      %522 = vmatpush1.msra.mxu0 0.0
      %523 = vmatprep.subr.mxu0 0.0
      %524 = vmatpush1.msra.mxu0 0.0
      %525 = vmatprep.subr.mxu0 0.0
      %526 = vmatpush1.msra.mxu0 0.0
      %527 = vmatprep.subr.mxu0 0.0
      %528 = vmatpush1.msra.mxu0 0.0
      %529 = vmatprep.subr.mxu0 0.0
      %530 = vmatpush1.msra.mxu0 0.0
      %531 = vmatprep.subr.mxu0 0.0
      %532 = vmatpush1.msra.mxu0 0.0
      %533 = vmatprep.subr.mxu0 0.0
      %534 = vmatpush1.msra.mxu0 0.0
      %535 = vmatprep.subr.mxu0 0.0
      %536 = vmatpush1.msra.mxu0 0.0
      %537 = vmatprep.subr.mxu0 0.0
      %538 = vmatpush1.msra.mxu0 0.0
      %539 = vmatprep.subr.mxu0 0.0
      %540 = vmatpush1.msra.mxu0 0.0
      %541 = vmatprep.mubr.f32.mxu0 0.0
      %542 = vmatmul.mubr.f32.gmra.mrb[0].mxu0 %v471
      %v543 = vpop.f32.mrb[0].mxu0
      %v544 = vadd.f32 0.0, %v543
      %v545 = vpop.f32.mrb[0].mxu0
      %546 = vdwg.mxu0
      %548 = vrot.lane.b32.xlu0 %v544, 11
      %v549 = vpop.permute.xlu0 %548
      %vm551 = vcmask 154712
      %552 = vst.msk [vmem:[#allocation2] sm:$0xff] %vm551, %v549
      %553 = vrot.lane.b32.xlu0 %v468, 92
      %v554 = vpop.permute.xlu0 %553
      %v555 = vsel %vm469, %v554, 0
      %557 = vmatprep.subr.mxu0 0.0
      %558 = vmatpush1.msra.mxu0 %v457
      %559 = vmatprep.subr.mxu0 0.0
      %560 = vmatpush1.msra.mxu0 %v475
      %561 = vmatprep.subr.mxu0 0.0
      %562 = vmatpush1.msra.mxu0 0.0
      %563 = vmatprep.subr.mxu0 0.0
      %564 = vmatpush1.msra.mxu0 0.0
      %565 = vmatprep.subr.mxu0 0.0
      %566 = vmatpush1.msra.mxu0 0.0
      %567 = vmatprep.subr.mxu0 0.0
      %568 = vmatpush1.msra.mxu0 0.0
      %569 = vmatprep.subr.mxu0 0.0
      %570 = vmatpush1.msra.mxu0 0.0
      %571 = vmatprep.subr.mxu0 0.0
      %572 = vmatpush1.msra.mxu0 0.0
      %573 = vmatprep.subr.mxu0 0.0
      %574 = vmatpush1.msra.mxu0 0.0
      %575 = vmatprep.subr.mxu0 0.0
      %576 = vmatpush1.msra.mxu0 0.0
      %577 = vmatprep.subr.mxu0 0.0
      %578 = vmatpush1.msra.mxu0 0.0
      %579 = vmatprep.subr.mxu0 0.0
      %580 = vmatpush1.msra.mxu0 0.0
      %581 = vmatprep.subr.mxu0 0.0
      %582 = vmatpush1.msra.mxu0 0.0
      %583 = vmatprep.subr.mxu0 0.0
      %584 = vmatpush1.msra.mxu0 0.0
      %585 = vmatprep.subr.mxu0 0.0
      %586 = vmatpush1.msra.mxu0 0.0
      %587 = vmatprep.subr.mxu0 0.0
      %588 = vmatpush1.msra.mxu0 0.0
      %589 = vmatprep.subr.mxu0 0.0
      %590 = vmatpush1.msra.mxu0 0.0
      %591 = vmatprep.subr.mxu0 0.0
      %592 = vmatpush1.msra.mxu0 0.0
      %593 = vmatprep.subr.mxu0 0.0
      %594 = vmatpush1.msra.mxu0 0.0
      %595 = vmatprep.subr.mxu0 0.0
      %596 = vmatpush1.msra.mxu0 0.0
      %597 = vmatprep.subr.mxu0 0.0
      %598 = vmatpush1.msra.mxu0 0.0
      %599 = vmatprep.subr.mxu0 0.0
      %600 = vmatpush1.msra.mxu0 0.0
      %601 = vmatprep.subr.mxu0 0.0
      %602 = vmatpush1.msra.mxu0 0.0
      %603 = vmatprep.subr.mxu0 0.0
      %604 = vmatpush1.msra.mxu0 0.0
      %605 = vmatprep.subr.mxu0 0.0
      %606 = vmatpush1.msra.mxu0 0.0
      %607 = vmatprep.subr.mxu0 0.0
      %608 = vmatpush1.msra.mxu0 0.0
      %609 = vmatprep.subr.mxu0 0.0
      %610 = vmatpush1.msra.mxu0 0.0
      %611 = vmatprep.subr.mxu0 0.0
      %612 = vmatpush1.msra.mxu0 0.0
      %613 = vmatprep.subr.mxu0 0.0
      %614 = vmatpush1.msra.mxu0 0.0
      %615 = vmatprep.subr.mxu0 0.0
      %616 = vmatpush1.msra.mxu0 0.0
      %617 = vmatprep.subr.mxu0 0.0
      %618 = vmatpush1.msra.mxu0 0.0
      %619 = vmatprep.subr.mxu0 0.0
      %620 = vmatpush1.msra.mxu0 0.0
      %621 = vmatprep.mubr.f32.mxu0 0.0
      %622 = vmatmul.mubr.f32.gmra.mrb[0].mxu0 %v555
      %v623 = vpop.f32.mrb[0].mxu0
      %v624 = vadd.f32 0.0, %v623
      %v625 = vpop.f32.mrb[0].mxu0
      %626 = vdwg.mxu0
      %628 = vrot.lane.b32.xlu0 %v624, 21
      %v629 = vpop.permute.xlu0 %628
      %vm631 = vcmask 236712
      %632 = vst.msk [vmem:[#allocation2] sm:$0xff] %vm631, %v629
      %633 = vrot.lane.b32.xlu0 %v468, 56
      %v634 = vpop.permute.xlu0 %633
      %v635 = vsel %vm469, %v634, 0
      %637 = vmatprep.subr.mxu0 0.0
      %638 = vmatpush1.msra.mxu0 %v457
      %639 = vmatprep.subr.mxu0 0.0
      %640 = vmatpush1.msra.mxu0 %v475
      %641 = vmatprep.subr.mxu0 0.0
      %642 = vmatpush1.msra.mxu0 0.0
      %643 = vmatprep.subr.mxu0 0.0
      %644 = vmatpush1.msra.mxu0 0.0
      %645 = vmatprep.subr.mxu0 0.0
      %646 = vmatpush1.msra.mxu0 0.0
      %647 = vmatprep.subr.mxu0 0.0
      %648 = vmatpush1.msra.mxu0 0.0
      %649 = vmatprep.subr.mxu0 0.0
      %650 = vmatpush1.msra.mxu0 0.0
      %651 = vmatprep.subr.mxu0 0.0
      %652 = vmatpush1.msra.mxu0 0.0
      %653 = vmatprep.subr.mxu0 0.0
      %654 = vmatpush1.msra.mxu0 0.0
      %655 = vmatprep.subr.mxu0 0.0
      %656 = vmatpush1.msra.mxu0 0.0
      %657 = vmatprep.subr.mxu0 0.0
      %658 = vmatpush1.msra.mxu0 0.0
      %659 = vmatprep.subr.mxu0 0.0
      %660 = vmatpush1.msra.mxu0 0.0
      %661 = vmatprep.subr.mxu0 0.0
      %662 = vmatpush1.msra.mxu0 0.0
      %663 = vmatprep.subr.mxu0 0.0
      %664 = vmatpush1.msra.mxu0 0.0
      %665 = vmatprep.subr.mxu0 0.0
      %666 = vmatpush1.msra.mxu0 0.0
      %667 = vmatprep.subr.mxu0 0.0
      %668 = vmatpush1.msra.mxu0 0.0
      %669 = vmatprep.subr.mxu0 0.0
      %670 = vmatpush1.msra.mxu0 0.0
      %671 = vmatprep.subr.mxu0 0.0
      %672 = vmatpush1.msra.mxu0 0.0
      %673 = vmatprep.subr.mxu0 0.0
      %674 = vmatpush1.msra.mxu0 0.0
      %675 = vmatprep.subr.mxu0 0.0
      %676 = vmatpush1.msra.mxu0 0.0
      %677 = vmatprep.subr.mxu0 0.0
      %678 = vmatpush1.msra.mxu0 0.0
      %679 = vmatprep.subr.mxu0 0.0
      %680 = vmatpush1.msra.mxu0 0.0
      %681 = vmatprep.subr.mxu0 0.0
      %682 = vmatpush1.msra.mxu0 0.0
      %683 = vmatprep.subr.mxu0 0.0
      %684 = vmatpush1.msra.mxu0 0.0
      %685 = vmatprep.subr.mxu0 0.0
      %686 = vmatpush1.msra.mxu0 0.0
      %687 = vmatprep.subr.mxu0 0.0
      %688 = vmatpush1.msra.mxu0 0.0
      %689 = vmatprep.subr.mxu0 0.0
      %690 = vmatpush1.msra.mxu0 0.0
      %691 = vmatprep.subr.mxu0 0.0
      %692 = vmatpush1.msra.mxu0 0.0
      %693 = vmatprep.subr.mxu0 0.0
      %694 = vmatpush1.msra.mxu0 0.0
      %695 = vmatprep.subr.mxu0 0.0
      %696 = vmatpush1.msra.mxu0 0.0
      %697 = vmatprep.subr.mxu0 0.0
      %698 = vmatpush1.msra.mxu0 0.0
      %699 = vmatprep.subr.mxu0 0.0
      %700 = vmatpush1.msra.mxu0 0.0
      %701 = vmatprep.mubr.f32.mxu0 0.0
      %702 = vmatmul.mubr.f32.gmra.mrb[0].mxu0 %v635
      %v703 = vpop.f32.mrb[0].mxu0
      %v704 = vadd.f32 0.0, %v703
      %v705 = vpop.f32.mrb[0].mxu0
      %706 = vdwg.mxu0
      %708 = vrot.lane.b32.xlu0 %v704, 31
      %v709 = vpop.permute.xlu0 %708
      %vm711 = vcmask 318712
      %712 = vst.msk [vmem:[#allocation2] sm:$0xff] %vm711, %v709
      %714 = vrot.lane.b32.xlu0 %v445, 110
      %v715 = vpop.permute.xlu0 %714
      %v716 = vsel %vm267, %v461, %v715
      %v718 = vmax.f32 %v444, %v716
      %720 = vrot.lane.b32.xlu0 %v718, 127
      %v721 = vpop.permute.xlu0 %720
      %v723 = vmax.f32 %v718, %v721
      %725 = vrot.lane.b32.xlu0 %v723, 20
      %v726 = vpop.permute.xlu0 %725
      %v727 = vsel %vm469, %v726, 0
      %729 = vmatprep.subr.mxu0 0.0
      %730 = vmatpush1.msra.mxu0 %v457
      %731 = vmatprep.subr.mxu0 0.0
      %732 = vmatpush1.msra.mxu0 %v475
      %733 = vmatprep.subr.mxu0 0.0
      %734 = vmatpush1.msra.mxu0 0.0
      %735 = vmatprep.subr.mxu0 0.0
      %736 = vmatpush1.msra.mxu0 0.0
      %737 = vmatprep.subr.mxu0 0.0
      %738 = vmatpush1.msra.mxu0 0.0
      %739 = vmatprep.subr.mxu0 0.0
      %740 = vmatpush1.msra.mxu0 0.0
      %741 = vmatprep.subr.mxu0 0.0
      %742 = vmatpush1.msra.mxu0 0.0
      %743 = vmatprep.subr.mxu0 0.0
      %744 = vmatpush1.msra.mxu0 0.0
      %745 = vmatprep.subr.mxu0 0.0
      %746 = vmatpush1.msra.mxu0 0.0
      %747 = vmatprep.subr.mxu0 0.0
      %748 = vmatpush1.msra.mxu0 0.0
      %749 = vmatprep.subr.mxu0 0.0
      %750 = vmatpush1.msra.mxu0 0.0
      %751 = vmatprep.subr.mxu0 0.0
      %752 = vmatpush1.msra.mxu0 0.0
      %753 = vmatprep.subr.mxu0 0.0
      %754 = vmatpush1.msra.mxu0 0.0
      %755 = vmatprep.subr.mxu0 0.0
      %756 = vmatpush1.msra.mxu0 0.0
      %757 = vmatprep.subr.mxu0 0.0
      %758 = vmatpush1.msra.mxu0 0.0
      %759 = vmatprep.subr.mxu0 0.0
      %760 = vmatpush1.msra.mxu0 0.0
      %761 = vmatprep.subr.mxu0 0.0
      %762 = vmatpush1.msra.mxu0 0.0
      %763 = vmatprep.subr.mxu0 0.0
      %764 = vmatpush1.msra.mxu0 0.0
      %765 = vmatprep.subr.mxu0 0.0
      %766 = vmatpush1.msra.mxu0 0.0
      %767 = vmatprep.subr.mxu0 0.0
      %768 = vmatpush1.msra.mxu0 0.0
      %769 = vmatprep.subr.mxu0 0.0
      %770 = vmatpush1.msra.mxu0 0.0
      %771 = vmatprep.subr.mxu0 0.0
      %772 = vmatpush1.msra.mxu0 0.0
      %773 = vmatprep.subr.mxu0 0.0
      %774 = vmatpush1.msra.mxu0 0.0
      %775 = vmatprep.subr.mxu0 0.0
      %776 = vmatpush1.msra.mxu0 0.0
      %777 = vmatprep.subr.mxu0 0.0
      %778 = vmatpush1.msra.mxu0 0.0
      %779 = vmatprep.subr.mxu0 0.0
      %780 = vmatpush1.msra.mxu0 0.0
      %781 = vmatprep.subr.mxu0 0.0
      %782 = vmatpush1.msra.mxu0 0.0
      %783 = vmatprep.subr.mxu0 0.0
      %784 = vmatpush1.msra.mxu0 0.0
      %785 = vmatprep.subr.mxu0 0.0
      %786 = vmatpush1.msra.mxu0 0.0
      %787 = vmatprep.subr.mxu0 0.0
      %788 = vmatpush1.msra.mxu0 0.0
      %789 = vmatprep.subr.mxu0 0.0
      %790 = vmatpush1.msra.mxu0 0.0
      %791 = vmatprep.subr.mxu0 0.0
      %792 = vmatpush1.msra.mxu0 0.0
      %793 = vmatprep.mubr.f32.mxu0 0.0
      %794 = vmatmul.mubr.f32.gmra.mrb[0].mxu0 %v727
      %v795 = vpop.f32.mrb[0].mxu0
      %v796 = vadd.f32 0.0, %v795
      %v797 = vpop.f32.mrb[0].mxu0
      %798 = vdwg.mxu0
      %800 = vrot.lane.b32.xlu0 %v796, 41
      %v801 = vpop.permute.xlu0 %800
      %vm803 = vcmask 400712
      %804 = vst.msk [vmem:[#allocation2] sm:$0xff] %vm803, %v801
      %v806 = vmax.f32 %v445, %v715
      %808 = vrot.lane.b32.xlu0 %v806, 127
      %v809 = vpop.permute.xlu0 %808
      %v811 = vmax.f32 %v806, %v809
      %813 = vrot.lane.b32.xlu0 %v811, 112
      %v814 = vpop.permute.xlu0 %813
      %v815 = vsel %vm469, %v814, 0
      %817 = vmatprep.subr.mxu0 0.0
      %818 = vmatpush1.msra.mxu0 %v457
      %819 = vmatprep.subr.mxu0 0.0
      %820 = vmatpush1.msra.mxu0 %v475
      %821 = vmatprep.subr.mxu0 0.0
      %822 = vmatpush1.msra.mxu0 0.0
      %823 = vmatprep.subr.mxu0 0.0
      %824 = vmatpush1.msra.mxu0 0.0
      %825 = vmatprep.subr.mxu0 0.0
      %826 = vmatpush1.msra.mxu0 0.0
      %827 = vmatprep.subr.mxu0 0.0
      %828 = vmatpush1.msra.mxu0 0.0
      %829 = vmatprep.subr.mxu0 0.0
      %830 = vmatpush1.msra.mxu0 0.0
      %831 = vmatprep.subr.mxu0 0.0
      %832 = vmatpush1.msra.mxu0 0.0
      %833 = vmatprep.subr.mxu0 0.0
      %834 = vmatpush1.msra.mxu0 0.0
      %835 = vmatprep.subr.mxu0 0.0
      %836 = vmatpush1.msra.mxu0 0.0
      %837 = vmatprep.subr.mxu0 0.0
      %838 = vmatpush1.msra.mxu0 0.0
      %839 = vmatprep.subr.mxu0 0.0
      %840 = vmatpush1.msra.mxu0 0.0
      %841 = vmatprep.subr.mxu0 0.0
      %842 = vmatpush1.msra.mxu0 0.0
      %843 = vmatprep.subr.mxu0 0.0
      %844 = vmatpush1.msra.mxu0 0.0
      %845 = vmatprep.subr.mxu0 0.0
      %846 = vmatpush1.msra.mxu0 0.0
      %847 = vmatprep.subr.mxu0 0.0
      %848 = vmatpush1.msra.mxu0 0.0
      %849 = vmatprep.subr.mxu0 0.0
      %850 = vmatpush1.msra.mxu0 0.0
      %851 = vmatprep.subr.mxu0 0.0
      %852 = vmatpush1.msra.mxu0 0.0
      %853 = vmatprep.subr.mxu0 0.0
      %854 = vmatpush1.msra.mxu0 0.0
      %855 = vmatprep.subr.mxu0 0.0
      %856 = vmatpush1.msra.mxu0 0.0
      %857 = vmatprep.subr.mxu0 0.0
      %858 = vmatpush1.msra.mxu0 0.0
      %859 = vmatprep.subr.mxu0 0.0
      %860 = vmatpush1.msra.mxu0 0.0
      %861 = vmatprep.subr.mxu0 0.0
      %862 = vmatpush1.msra.mxu0 0.0
      %863 = vmatprep.subr.mxu0 0.0
      %864 = vmatpush1.msra.mxu0 0.0
      %865 = vmatprep.subr.mxu0 0.0
      %866 = vmatpush1.msra.mxu0 0.0
      %867 = vmatprep.subr.mxu0 0.0
      %868 = vmatpush1.msra.mxu0 0.0
      %869 = vmatprep.subr.mxu0 0.0
      %870 = vmatpush1.msra.mxu0 0.0
      %871 = vmatprep.subr.mxu0 0.0
      %872 = vmatpush1.msra.mxu0 0.0
      %873 = vmatprep.subr.mxu0 0.0
      %874 = vmatpush1.msra.mxu0 0.0
      %875 = vmatprep.subr.mxu0 0.0
      %876 = vmatpush1.msra.mxu0 0.0
      %877 = vmatprep.subr.mxu0 0.0
      %878 = vmatpush1.msra.mxu0 0.0
      %879 = vmatprep.subr.mxu0 0.0
      %880 = vmatpush1.msra.mxu0 0.0
      %881 = vmatprep.mubr.f32.mxu0 0.0
      %882 = vmatmul.mubr.f32.gmra.mrb[0].mxu0 %v815
      %v883 = vpop.f32.mrb[0].mxu0
      %v884 = vadd.f32 0.0, %v883
      %v885 = vpop.f32.mrb[0].mxu0
      %886 = vdwg.mxu0
      %888 = vrot.lane.b32.xlu0 %v884, 51
      %v889 = vpop.permute.xlu0 %888
      %vm891 = vcmask 482712
      %892 = vst.msk [vmem:[#allocation2] sm:$0xff] %vm891, %v889
      %893 = vrot.lane.b32.xlu0 %v811, 76
      %v894 = vpop.permute.xlu0 %893
      %v895 = vsel %vm469, %v894, 0
      %897 = vmatprep.subr.mxu0 0.0
      %898 = vmatpush1.msra.mxu0 %v457
      %899 = vmatprep.subr.mxu0 0.0
      %900 = vmatpush1.msra.mxu0 %v475
      %901 = vmatprep.subr.mxu0 0.0
      %902 = vmatpush1.msra.mxu0 0.0
      %903 = vmatprep.subr.mxu0 0.0
      %904 = vmatpush1.msra.mxu0 0.0
      %905 = vmatprep.subr.mxu0 0.0
      %906 = vmatpush1.msra.mxu0 0.0
      %907 = vmatprep.subr.mxu0 0.0
      %908 = vmatpush1.msra.mxu0 0.0
      %909 = vmatprep.subr.mxu0 0.0
      %910 = vmatpush1.msra.mxu0 0.0
      %911 = vmatprep.subr.mxu0 0.0
      %912 = vmatpush1.msra.mxu0 0.0
      %913 = vmatprep.subr.mxu0 0.0
      %914 = vmatpush1.msra.mxu0 0.0
      %915 = vmatprep.subr.mxu0 0.0
      %916 = vmatpush1.msra.mxu0 0.0
      %917 = vmatprep.subr.mxu0 0.0
      %918 = vmatpush1.msra.mxu0 0.0
      %919 = vmatprep.subr.mxu0 0.0
      %920 = vmatpush1.msra.mxu0 0.0
      %921 = vmatprep.subr.mxu0 0.0
      %922 = vmatpush1.msra.mxu0 0.0
      %923 = vmatprep.subr.mxu0 0.0
      %924 = vmatpush1.msra.mxu0 0.0
      %925 = vmatprep.subr.mxu0 0.0
      %926 = vmatpush1.msra.mxu0 0.0
      %927 = vmatprep.subr.mxu0 0.0
      %928 = vmatpush1.msra.mxu0 0.0
      %929 = vmatprep.subr.mxu0 0.0
      %930 = vmatpush1.msra.mxu0 0.0
      %931 = vmatprep.subr.mxu0 0.0
      %932 = vmatpush1.msra.mxu0 0.0
      %933 = vmatprep.subr.mxu0 0.0
      %934 = vmatpush1.msra.mxu0 0.0
      %935 = vmatprep.subr.mxu0 0.0
      %936 = vmatpush1.msra.mxu0 0.0
      %937 = vmatprep.subr.mxu0 0.0
      %938 = vmatpush1.msra.mxu0 0.0
      %939 = vmatprep.subr.mxu0 0.0
      %940 = vmatpush1.msra.mxu0 0.0
      %941 = vmatprep.subr.mxu0 0.0
      %942 = vmatpush1.msra.mxu0 0.0
      %943 = vmatprep.subr.mxu0 0.0
      %944 = vmatpush1.msra.mxu0 0.0
      %945 = vmatprep.subr.mxu0 0.0
      %946 = vmatpush1.msra.mxu0 0.0
      %947 = vmatprep.subr.mxu0 0.0
      %948 = vmatpush1.msra.mxu0 0.0
      %949 = vmatprep.subr.mxu0 0.0
      %950 = vmatpush1.msra.mxu0 0.0
      %951 = vmatprep.subr.mxu0 0.0
      %952 = vmatpush1.msra.mxu0 0.0
      %953 = vmatprep.subr.mxu0 0.0
      %954 = vmatpush1.msra.mxu0 0.0
      %955 = vmatprep.subr.mxu0 0.0
      %956 = vmatpush1.msra.mxu0 0.0
      %957 = vmatprep.subr.mxu0 0.0
      %958 = vmatpush1.msra.mxu0 0.0
      %959 = vmatprep.subr.mxu0 0.0
      %960 = vmatpush1.msra.mxu0 0.0
      %961 = vmatprep.mubr.f32.mxu0 0.0
      %962 = vmatmul.mubr.f32.gmra.mrb[0].mxu0 %v895
      %v963 = vpop.f32.mrb[0].mxu0
      %v964 = vadd.f32 0.0, %v963
      %v965 = vpop.f32.mrb[0].mxu0
      %966 = vdwg.mxu0
      %968 = vrot.lane.b32.xlu0 %v964, 61
      %v969 = vpop.permute.xlu0 %968
      %vm971 = vcmask 564712
      %972 = vst.msk [vmem:[#allocation2] sm:$0xff] %vm971, %v969
      %973 = vrot.lane.b32.xlu0 %v811, 40
      %v974 = vpop.permute.xlu0 %973
      %v975 = vsel %vm469, %v974, 0
      %977 = vmatprep.subr.mxu0 0.0
      %978 = vmatpush1.msra.mxu0 %v457
      %979 = vmatprep.subr.mxu0 0.0
      %980 = vmatpush1.msra.mxu0 %v475
      %981 = vmatprep.subr.mxu0 0.0
      %982 = vmatpush1.msra.mxu0 0.0
      %983 = vmatprep.subr.mxu0 0.0
      %984 = vmatpush1.msra.mxu0 0.0
      %985 = vmatprep.subr.mxu0 0.0
      %986 = vmatpush1.msra.mxu0 0.0
      %987 = vmatprep.subr.mxu0 0.0
      %988 = vmatpush1.msra.mxu0 0.0
      %989 = vmatprep.subr.mxu0 0.0
      %990 = vmatpush1.msra.mxu0 0.0
      %991 = vmatprep.subr.mxu0 0.0
      %992 = vmatpush1.msra.mxu0 0.0
      %993 = vmatprep.subr.mxu0 0.0
      %994 = vmatpush1.msra.mxu0 0.0
      %995 = vmatprep.subr.mxu0 0.0
      %996 = vmatpush1.msra.mxu0 0.0
      %997 = vmatprep.subr.mxu0 0.0
      %998 = vmatpush1.msra.mxu0 0.0
      %999 = vmatprep.subr.mxu0 0.0
      %1000 = vmatpush1.msra.mxu0 0.0
      %1001 = vmatprep.subr.mxu0 0.0
      %1002 = vmatpush1.msra.mxu0 0.0
      %1003 = vmatprep.subr.mxu0 0.0
      %1004 = vmatpush1.msra.mxu0 0.0
      %1005 = vmatprep.subr.mxu0 0.0
      %1006 = vmatpush1.msra.mxu0 0.0
      %1007 = vmatprep.subr.mxu0 0.0
      %1008 = vmatpush1.msra.mxu0 0.0
      %1009 = vmatprep.subr.mxu0 0.0
      %1010 = vmatpush1.msra.mxu0 0.0
      %1011 = vmatprep.subr.mxu0 0.0
      %1012 = vmatpush1.msra.mxu0 0.0
      %1013 = vmatprep.subr.mxu0 0.0
      %1014 = vmatpush1.msra.mxu0 0.0
      %1015 = vmatprep.subr.mxu0 0.0
      %1016 = vmatpush1.msra.mxu0 0.0
      %1017 = vmatprep.subr.mxu0 0.0
      %1018 = vmatpush1.msra.mxu0 0.0
      %1019 = vmatprep.subr.mxu0 0.0
      %1020 = vmatpush1.msra.mxu0 0.0
      %1021 = vmatprep.subr.mxu0 0.0
      %1022 = vmatpush1.msra.mxu0 0.0
      %1023 = vmatprep.subr.mxu0 0.0
      %1024 = vmatpush1.msra.mxu0 0.0
      %1025 = vmatprep.subr.mxu0 0.0
      %1026 = vmatpush1.msra.mxu0 0.0
      %1027 = vmatprep.subr.mxu0 0.0
      %1028 = vmatpush1.msra.mxu0 0.0
      %1029 = vmatprep.subr.mxu0 0.0
      %1030 = vmatpush1.msra.mxu0 0.0
      %1031 = vmatprep.subr.mxu0 0.0
      %1032 = vmatpush1.msra.mxu0 0.0
      %1033 = vmatprep.subr.mxu0 0.0
      %1034 = vmatpush1.msra.mxu0 0.0
      %1035 = vmatprep.subr.mxu0 0.0
      %1036 = vmatpush1.msra.mxu0 0.0
      %1037 = vmatprep.subr.mxu0 0.0
      %1038 = vmatpush1.msra.mxu0 0.0
      %1039 = vmatprep.subr.mxu0 0.0
      %1040 = vmatpush1.msra.mxu0 0.0
      %1041 = vmatprep.mubr.f32.mxu0 0.0
      %1042 = vmatmul.mubr.f32.gmra.mrb[0].mxu0 %v975
      %v1043 = vpop.f32.mrb[0].mxu0
      %v1044 = vadd.f32 0.0, %v1043
      %v1045 = vpop.f32.mrb[0].mxu0
      %1046 = vdwg.mxu0
      %1048 = vrot.lane.b32.xlu0 %v1044, 71
      %v1049 = vpop.permute.xlu0 %1048
      %vm1051 = vcmask 646712
      %1052 = vst.msk [vmem:[#allocation2] sm:$0xff] %vm1051, %v1049
      %1054 = vrot.lane.b32.xlu0 %v446, 110
      %v1055 = vpop.permute.xlu0 %1054
      %v1057 = vmax.f32 %v445, %v1055
      %v1058 = vmax.f32 %v446, %v1055
      %1061 = vrot.lane.b32.xlu0 %v1057, 127
      %v1062 = vpop.permute.xlu0 %1061
      %1063 = vrot.lane.b32.xlu0 %v1058, 127
      %v1064 = vpop.permute.xlu0 %1063
      %v1065 = vsel %vm243, %v1062, %v1064
      %v1068 = vmax.f32 %v1057, %v1065
      %v1069 = vmax.f32 %v1058, %v1064
      %1072 = vrot.lane.b32.xlu0 %v1068, 4
      %v1073 = vpop.permute.xlu0 %1072
      %1074 = vrot.lane.b32.xlu0 %v1069, 4
      %v1075 = vpop.permute.xlu0 %1074
      %vm1076 = vcmask 31744
      %v1077 = vsel %vm1076, %v1073, %v1075
      %v1078 = vsel %vm469, %v1077, 0
      %1080 = vmatprep.subr.mxu0 0.0
      %1081 = vmatpush1.msra.mxu0 %v457
      %1082 = vmatprep.subr.mxu0 0.0
      %1083 = vmatpush1.msra.mxu0 %v475
      %1084 = vmatprep.subr.mxu0 0.0
      %1085 = vmatpush1.msra.mxu0 0.0
      %1086 = vmatprep.subr.mxu0 0.0
      %1087 = vmatpush1.msra.mxu0 0.0
      %1088 = vmatprep.subr.mxu0 0.0
      %1089 = vmatpush1.msra.mxu0 0.0
      %1090 = vmatprep.subr.mxu0 0.0
      %1091 = vmatpush1.msra.mxu0 0.0
      %1092 = vmatprep.subr.mxu0 0.0
      %1093 = vmatpush1.msra.mxu0 0.0
      %1094 = vmatprep.subr.mxu0 0.0
      %1095 = vmatpush1.msra.mxu0 0.0
      %1096 = vmatprep.subr.mxu0 0.0
      %1097 = vmatpush1.msra.mxu0 0.0
      %1098 = vmatprep.subr.mxu0 0.0
      %1099 = vmatpush1.msra.mxu0 0.0
      %1100 = vmatprep.subr.mxu0 0.0
      %1101 = vmatpush1.msra.mxu0 0.0
      %1102 = vmatprep.subr.mxu0 0.0
      %1103 = vmatpush1.msra.mxu0 0.0
      %1104 = vmatprep.subr.mxu0 0.0
      %1105 = vmatpush1.msra.mxu0 0.0
      %1106 = vmatprep.subr.mxu0 0.0
      %1107 = vmatpush1.msra.mxu0 0.0
      %1108 = vmatprep.subr.mxu0 0.0
      %1109 = vmatpush1.msra.mxu0 0.0
      %1110 = vmatprep.subr.mxu0 0.0
      %1111 = vmatpush1.msra.mxu0 0.0
      %1112 = vmatprep.subr.mxu0 0.0
      %1113 = vmatpush1.msra.mxu0 0.0
      %1114 = vmatprep.subr.mxu0 0.0
      %1115 = vmatpush1.msra.mxu0 0.0
      %1116 = vmatprep.subr.mxu0 0.0
      %1117 = vmatpush1.msra.mxu0 0.0
      %1118 = vmatprep.subr.mxu0 0.0
      %1119 = vmatpush1.msra.mxu0 0.0
      %1120 = vmatprep.subr.mxu0 0.0
      %1121 = vmatpush1.msra.mxu0 0.0
      %1122 = vmatprep.subr.mxu0 0.0
      %1123 = vmatpush1.msra.mxu0 0.0
      %1124 = vmatprep.subr.mxu0 0.0
      %1125 = vmatpush1.msra.mxu0 0.0
      %1126 = vmatprep.subr.mxu0 0.0
      %1127 = vmatpush1.msra.mxu0 0.0
      %1128 = vmatprep.subr.mxu0 0.0
      %1129 = vmatpush1.msra.mxu0 0.0
      %1130 = vmatprep.subr.mxu0 0.0
      %1131 = vmatpush1.msra.mxu0 0.0
      %1132 = vmatprep.subr.mxu0 0.0
      %1133 = vmatpush1.msra.mxu0 0.0
      %1134 = vmatprep.subr.mxu0 0.0
      %1135 = vmatpush1.msra.mxu0 0.0
      %1136 = vmatprep.subr.mxu0 0.0
      %1137 = vmatpush1.msra.mxu0 0.0
      %1138 = vmatprep.subr.mxu0 0.0
      %1139 = vmatpush1.msra.mxu0 0.0
      %1140 = vmatprep.subr.mxu0 0.0
      %1141 = vmatpush1.msra.mxu0 0.0
      %1142 = vmatprep.subr.mxu0 0.0
      %1143 = vmatpush1.msra.mxu0 0.0
      %1144 = vmatprep.mubr.f32.mxu0 0.0
      %1145 = vmatmul.mubr.f32.gmra.mrb[0].mxu0 %v1078
      %v1146 = vpop.f32.mrb[0].mxu0
      %v1147 = vadd.f32 0.0, %v1146
      %v1148 = vpop.f32.mrb[0].mxu0
      %1149 = vdwg.mxu0
      %1151 = vrot.lane.b32.xlu0 %v1147, 81
      %v1152 = vpop.permute.xlu0 %1151
      %vm1154 = vcmask 728712
      %1155 = vst.msk [vmem:[#allocation2] sm:$0xff] %vm1154, %v1152
      %v1156 = vld [vmem:[#allocation2] sm:$0xff]
      %1158 = vrot.lane.b32.xlu0 %v1156, 127
      %v1159 = vpop.permute.xlu0 %1158
      %1161 = vrot.lane.b32.xlu0 %v1156, 126
      %v1162 = vpop.permute.xlu0 %1161
      %1164 = vrot.lane.b32.xlu0 %v1156, 118
      %v1165 = vpop.permute.xlu0 %1164
      %1167 = vrot.lane.b32.xlu0 %v1156, 117
      %v1168 = vpop.permute.xlu0 %1167
      %1170 = vrot.lane.b32.xlu0 %v1156, 116
      %v1171 = vpop.permute.xlu0 %1170
      %1173 = vrot.lane.b32.xlu0 %v1156, 108
      %v1174 = vpop.permute.xlu0 %1173
      %1176 = vrot.lane.b32.xlu0 %v1156, 107
      %v1177 = vpop.permute.xlu0 %1176
      %1179 = vrot.lane.b32.xlu0 %v1156, 106
      %v1180 = vpop.permute.xlu0 %1179
      %v1182 = vpack.c.bf16 %v1159, %v1156
      %v1183 = vpack.c.bf16 %v1165, %v1162
      %v1184 = vpack.c.bf16 %v1171, %v1168
      %v1185 = vpack.c.bf16 %v1177, %v1174
      %v1186 = vpack.c.bf16 %v1180, %v1180
      %s1187 = scalar_lea.vmem %s1, 4
      %v1188 = vld [vmem:[%s1187] sm:$0xf]
      %v1190 = vsel %vm349, %v1188, 0
      %v1193 = vsel %vm353, %v1186, 0
      %1195 = vmatprep.subr.bf16.mxu0 0
      %1196 = vmatpush1.bf16.msra.mxu0 %v1182
      %1197 = vmatprep.subr.bf16.mxu0 0
      %1198 = vmatpush1.bf16.msra.mxu0 %v1183
      %1199 = vmatprep.subr.bf16.mxu0 0
      %1200 = vmatpush1.bf16.msra.mxu0 %v1184
      %1201 = vmatprep.subr.bf16.mxu0 0
      %1202 = vmatpush1.bf16.msra.mxu0 %v1185
      %1203 = vmatprep.subr.bf16.mxu0 0
      %1204 = vmatpush1.bf16.msra.mxu0 %v1193
      %1205 = vmatprep.subr.bf16.mxu0 0
      %1206 = vmatpush1.bf16.msra.mxu0 0
      %1207 = vmatprep.subr.bf16.mxu0 0
      %1208 = vmatpush1.bf16.msra.mxu0 0
      %1209 = vmatprep.subr.bf16.mxu0 0
      %1210 = vmatpush1.bf16.msra.mxu0 0
      %1211 = vmatprep.subr.bf16.mxu0 0
      %1212 = vmatpush1.bf16.msra.mxu0 0
      %1213 = vmatprep.subr.bf16.mxu0 0
      %1214 = vmatpush1.bf16.msra.mxu0 0
      %1215 = vmatprep.subr.bf16.mxu0 0
      %1216 = vmatpush1.bf16.msra.mxu0 0
      %1217 = vmatprep.subr.bf16.mxu0 0
      %1218 = vmatpush1.bf16.msra.mxu0 0
      %1219 = vmatprep.subr.bf16.mxu0 0
      %1220 = vmatpush1.bf16.msra.mxu0 0
      %1221 = vmatprep.subr.bf16.mxu0 0
      %1222 = vmatpush1.bf16.msra.mxu0 0
      %1223 = vmatprep.subr.bf16.mxu0 0
      %1224 = vmatpush1.bf16.msra.mxu0 0
      %1225 = vmatprep.subr.bf16.mxu0 0
      %1226 = vmatpush1.bf16.msra.mxu0 0
      %1227 = vmatprep.mubr.bf16.mxu0 0
      %1228 = vmatmul.mubr.bf16.gmra.mrb[0].mxu0 %v1190
      %v1229 = vpop.f32.mrb[0].mxu0
      %v1230 = vadd.f32 0.0, %v1229
      %v1231 = vpop.f32.mrb[0].mxu0
      %v1232 = vpop.f32.mrb[0].mxu0
      %v1233 = vpop.f32.mrb[0].mxu0
      %1234 = vdwg.mxu0
      %v1235 = vmax.f32 %v1230, 0.0
      %1237 = vrot.lane.b32.xlu0 %v1235, 11
      %v1238 = vpop.permute.xlu0 %1237
      %1240 = vst.msk [vmem:[#allocation3] sm:$0xff] %vm551, %v1238
      %vm1241 = vcmask 62464
      %1242 = vst.msk [vmem:[%s214] sm:$0x3f] %vm1241, %v1235
      %1243 = vst.msk [vmem:[#allocation3] sm:$0xff] %vm631, %v1238
      %1244 = vrot.lane.b32.xlu0 %v1235, 126
      %v1245 = vpop.permute.xlu0 %1244
      %vm1247 = vcmask 128064
      %1248 = vst.msk [vmem:[%s214] sm:$0x3f] %vm1247, %v1245
      %1249 = vst.msk [vmem:[#allocation3] sm:$0xff] %vm711, %v1238
      %1250 = vrot.lane.b32.xlu0 %v1235, 124
      %v1251 = vpop.permute.xlu0 %1250
      %vm1253 = vcmask 193664
      %1254 = vst.msk [vmem:[%s214] sm:$0x3f] %vm1253, %v1251
      %1255 = vst.msk [vmem:[#allocation3] sm:$0xff] %vm803, %v1238
      %1256 = vrot.lane.b32.xlu0 %v1235, 122
      %v1257 = vpop.permute.xlu0 %1256
      %vm1259 = vcmask 259264
      %1260 = vst.msk [vmem:[%s214] sm:$0x3f] %vm1259, %v1257
      %1261 = vst.msk [vmem:[#allocation3] sm:$0xff] %vm891, %v1238
      %1262 = vrot.lane.b32.xlu0 %v1235, 120
      %v1263 = vpop.permute.xlu0 %1262
      %vm1265 = vcmask 324864
      %1266 = vst.msk [vmem:[%s214] sm:$0x3f] %vm1265, %v1263
      %1267 = vst.msk [vmem:[#allocation3] sm:$0xff] %vm971, %v1238
      %1268 = vrot.lane.b32.xlu0 %v1235, 118
      %v1269 = vpop.permute.xlu0 %1268
      %vm1271 = vcmask 390464
      %1272 = vst.msk [vmem:[%s214] sm:$0x3f] %vm1271, %v1269
      %1273 = vst.msk [vmem:[#allocation3] sm:$0xff] %vm1051, %v1238
      %1274 = vrot.lane.b32.xlu0 %v1235, 116
      %v1275 = vpop.permute.xlu0 %1274
      %vm1277 = vcmask 456064
      %1278 = vst.msk [vmem:[%s214] sm:$0x3f] %vm1277, %v1275
      %1279 = vst.msk [vmem:[#allocation3] sm:$0xff] %vm1154, %v1238
      %1280 = vrot.lane.b32.xlu0 %v1235, 114
      %v1281 = vpop.permute.xlu0 %1280
      %vm1283 = vcmask 521664
      %1284 = vst.msk [vmem:[%s214] sm:$0x3f] %vm1283, %v1281
      %v1285 = vld [vmem:[#allocation3] sm:$0xff]
      %1287 = vrot.lane.b32.xlu0 %v1285, 127
      %v1288 = vpop.permute.xlu0 %1287
      %1290 = vrot.lane.b32.xlu0 %v1285, 126
      %v1291 = vpop.permute.xlu0 %1290
      %1293 = vrot.lane.b32.xlu0 %v1285, 118
      %v1294 = vpop.permute.xlu0 %1293
      %1296 = vrot.lane.b32.xlu0 %v1285, 117
      %v1297 = vpop.permute.xlu0 %1296
      %1299 = vrot.lane.b32.xlu0 %v1285, 116
      %v1300 = vpop.permute.xlu0 %1299
      %1302 = vrot.lane.b32.xlu0 %v1285, 108
      %v1303 = vpop.permute.xlu0 %1302
      %1305 = vrot.lane.b32.xlu0 %v1285, 107
      %v1306 = vpop.permute.xlu0 %1305
      %1308 = vrot.lane.b32.xlu0 %v1285, 106
      %v1309 = vpop.permute.xlu0 %1308
      %v1311 = vpack.c.bf16 %v1288, %v1285
      %v1312 = vpack.c.bf16 %v1294, %v1291
      %v1313 = vpack.c.bf16 %v1300, %v1297
      %v1314 = vpack.c.bf16 %v1306, %v1303
      %v1315 = vpack.c.bf16 %v1309, %v1309
      %s1316 = scalar_lea.vmem %s1, 8
      %v1317 = vld [vmem:[%s1316] sm:$0xf]
      %v1319 = vsel %vm349, %v1317, 0
      %v1322 = vsel %vm353, %v1315, 0
      %1324 = vmatprep.subr.bf16.mxu0 0
      %1325 = vmatpush1.bf16.msra.mxu0 %v1311
      %1326 = vmatprep.subr.bf16.mxu0 0
      %1327 = vmatpush1.bf16.msra.mxu0 %v1312
      %1328 = vmatprep.subr.bf16.mxu0 0
      %1329 = vmatpush1.bf16.msra.mxu0 %v1313
      %1330 = vmatprep.subr.bf16.mxu0 0
      %1331 = vmatpush1.bf16.msra.mxu0 %v1314
      %1332 = vmatprep.subr.bf16.mxu0 0
      %1333 = vmatpush1.bf16.msra.mxu0 %v1322
      %1334 = vmatprep.subr.bf16.mxu0 0
      %1335 = vmatpush1.bf16.msra.mxu0 0
      %1336 = vmatprep.subr.bf16.mxu0 0
      %1337 = vmatpush1.bf16.msra.mxu0 0
      %1338 = vmatprep.subr.bf16.mxu0 0
      %1339 = vmatpush1.bf16.msra.mxu0 0
      %1340 = vmatprep.subr.bf16.mxu0 0
      %1341 = vmatpush1.bf16.msra.mxu0 0
      %1342 = vmatprep.subr.bf16.mxu0 0
      %1343 = vmatpush1.bf16.msra.mxu0 0
      %1344 = vmatprep.subr.bf16.mxu0 0
      %1345 = vmatpush1.bf16.msra.mxu0 0
      %1346 = vmatprep.subr.bf16.mxu0 0
      %1347 = vmatpush1.bf16.msra.mxu0 0
      %1348 = vmatprep.subr.bf16.mxu0 0
      %1349 = vmatpush1.bf16.msra.mxu0 0
      %1350 = vmatprep.subr.bf16.mxu0 0
      %1351 = vmatpush1.bf16.msra.mxu0 0
      %1352 = vmatprep.subr.bf16.mxu0 0
      %1353 = vmatpush1.bf16.msra.mxu0 0
      %1354 = vmatprep.subr.bf16.mxu0 0
      %1355 = vmatpush1.bf16.msra.mxu0 0
      %1356 = vmatprep.mubr.bf16.mxu0 0
      %1357 = vmatmul.mubr.bf16.gmra.mrb[0].mxu0 %v1319
      %v1358 = vpop.f32.mrb[0].mxu0
      %v1359 = vadd.f32 0.0, %v1358
      %v1360 = vpop.f32.mrb[0].mxu0
      %v1361 = vpop.f32.mrb[0].mxu0
      %v1362 = vpop.f32.mrb[0].mxu0
      %1363 = vdwg.mxu0
      %v1364 = vmax.f32 %v1359, 0.0
      %1366 = vrot.lane.b32.xlu0 %v1364, 118
      %v1367 = vpop.permute.xlu0 %1366
      %v1369 = vmax.f32 %v1364, %v1367
      %1371 = vrot.lane.b32.xlu0 %v1369, 127
      %v1372 = vpop.permute.xlu0 %1371
      %v1374 = vmax.f32 %v1369, %v1372
      %vm1375 = vcmask 56320
      %v1377 = vsel %vm1375, %v1374, 0
      %v1380 = vsel %vm473, %v457, 0
      %1382 = vmatprep.subr.mxu0 0.0
      %1383 = vmatpush1.msra.mxu0 %v1380
      %1384 = vmatprep.subr.mxu0 0.0
      %1385 = vmatpush1.msra.mxu0 0.0
      %1386 = vmatprep.subr.mxu0 0.0
      %1387 = vmatpush1.msra.mxu0 0.0
      %1388 = vmatprep.subr.mxu0 0.0
      %1389 = vmatpush1.msra.mxu0 0.0
      %1390 = vmatprep.subr.mxu0 0.0
      %1391 = vmatpush1.msra.mxu0 0.0
      %1392 = vmatprep.subr.mxu0 0.0
      %1393 = vmatpush1.msra.mxu0 0.0
      %1394 = vmatprep.subr.mxu0 0.0
      %1395 = vmatpush1.msra.mxu0 0.0
      %1396 = vmatprep.subr.mxu0 0.0
      %1397 = vmatpush1.msra.mxu0 0.0
      %1398 = vmatprep.subr.mxu0 0.0
      %1399 = vmatpush1.msra.mxu0 0.0
      %1400 = vmatprep.subr.mxu0 0.0
      %1401 = vmatpush1.msra.mxu0 0.0
      %1402 = vmatprep.subr.mxu0 0.0
      %1403 = vmatpush1.msra.mxu0 0.0
      %1404 = vmatprep.subr.mxu0 0.0
      %1405 = vmatpush1.msra.mxu0 0.0
      %1406 = vmatprep.subr.mxu0 0.0
      %1407 = vmatpush1.msra.mxu0 0.0
      %1408 = vmatprep.subr.mxu0 0.0
      %1409 = vmatpush1.msra.mxu0 0.0
      %1410 = vmatprep.subr.mxu0 0.0
      %1411 = vmatpush1.msra.mxu0 0.0
      %1412 = vmatprep.subr.mxu0 0.0
      %1413 = vmatpush1.msra.mxu0 0.0
      %1414 = vmatprep.subr.mxu0 0.0
      %1415 = vmatpush1.msra.mxu0 0.0
      %1416 = vmatprep.subr.mxu0 0.0
      %1417 = vmatpush1.msra.mxu0 0.0
      %1418 = vmatprep.subr.mxu0 0.0
      %1419 = vmatpush1.msra.mxu0 0.0
      %1420 = vmatprep.subr.mxu0 0.0
      %1421 = vmatpush1.msra.mxu0 0.0
      %1422 = vmatprep.subr.mxu0 0.0
      %1423 = vmatpush1.msra.mxu0 0.0
      %1424 = vmatprep.subr.mxu0 0.0
      %1425 = vmatpush1.msra.mxu0 0.0
      %1426 = vmatprep.subr.mxu0 0.0
      %1427 = vmatpush1.msra.mxu0 0.0
      %1428 = vmatprep.subr.mxu0 0.0
      %1429 = vmatpush1.msra.mxu0 0.0
      %1430 = vmatprep.subr.mxu0 0.0
      %1431 = vmatpush1.msra.mxu0 0.0
      %1432 = vmatprep.subr.mxu0 0.0
      %1433 = vmatpush1.msra.mxu0 0.0
      %1434 = vmatprep.subr.mxu0 0.0
      %1435 = vmatpush1.msra.mxu0 0.0
      %1436 = vmatprep.subr.mxu0 0.0
      %1437 = vmatpush1.msra.mxu0 0.0
      %1438 = vmatprep.subr.mxu0 0.0
      %1439 = vmatpush1.msra.mxu0 0.0
      %1440 = vmatprep.subr.mxu0 0.0
      %1441 = vmatpush1.msra.mxu0 0.0
      %1442 = vmatprep.subr.mxu0 0.0
      %1443 = vmatpush1.msra.mxu0 0.0
      %1444 = vmatprep.subr.mxu0 0.0
      %1445 = vmatpush1.msra.mxu0 0.0
      %1446 = vmatprep.mubr.f32.mxu0 0.0
      %1447 = vmatmul.mubr.f32.gmra.mrb[0].mxu0 %v1377
      %v1448 = vpop.f32.mrb[0].mxu0
      %v1449 = vadd.f32 0.0, %v1448
      %v1450 = vpop.f32.mrb[0].mxu0
      %1451 = vdwg.mxu0
      %1453 = vrot.lane.b32.xlu0 %v1449, 7
      %v1454 = vpop.permute.xlu0 %1453
      %vm1456 = vcmask 89144
      %1457 = vst.msk [vmem:[#allocation4] sm:$0xff] %vm1456, %v1454
      %1458 = vrot.lane.b32.xlu0 %v1374, 108
      %v1459 = vpop.permute.xlu0 %1458
      %v1460 = vsel %vm1375, %v1459, 0
      %1462 = vmatprep.subr.mxu0 0.0
      %1463 = vmatpush1.msra.mxu0 %v1380
      %1464 = vmatprep.subr.mxu0 0.0
      %1465 = vmatpush1.msra.mxu0 0.0
      %1466 = vmatprep.subr.mxu0 0.0
      %1467 = vmatpush1.msra.mxu0 0.0
      %1468 = vmatprep.subr.mxu0 0.0
      %1469 = vmatpush1.msra.mxu0 0.0
      %1470 = vmatprep.subr.mxu0 0.0
      %1471 = vmatpush1.msra.mxu0 0.0
      %1472 = vmatprep.subr.mxu0 0.0
      %1473 = vmatpush1.msra.mxu0 0.0
      %1474 = vmatprep.subr.mxu0 0.0
      %1475 = vmatpush1.msra.mxu0 0.0
      %1476 = vmatprep.subr.mxu0 0.0
      %1477 = vmatpush1.msra.mxu0 0.0
      %1478 = vmatprep.subr.mxu0 0.0
      %1479 = vmatpush1.msra.mxu0 0.0
      %1480 = vmatprep.subr.mxu0 0.0
      %1481 = vmatpush1.msra.mxu0 0.0
      %1482 = vmatprep.subr.mxu0 0.0
      %1483 = vmatpush1.msra.mxu0 0.0
      %1484 = vmatprep.subr.mxu0 0.0
      %1485 = vmatpush1.msra.mxu0 0.0
      %1486 = vmatprep.subr.mxu0 0.0
      %1487 = vmatpush1.msra.mxu0 0.0
      %1488 = vmatprep.subr.mxu0 0.0
      %1489 = vmatpush1.msra.mxu0 0.0
      %1490 = vmatprep.subr.mxu0 0.0
      %1491 = vmatpush1.msra.mxu0 0.0
      %1492 = vmatprep.subr.mxu0 0.0
      %1493 = vmatpush1.msra.mxu0 0.0
      %1494 = vmatprep.subr.mxu0 0.0
      %1495 = vmatpush1.msra.mxu0 0.0
      %1496 = vmatprep.subr.mxu0 0.0
      %1497 = vmatpush1.msra.mxu0 0.0
      %1498 = vmatprep.subr.mxu0 0.0
      %1499 = vmatpush1.msra.mxu0 0.0
      %1500 = vmatprep.subr.mxu0 0.0
      %1501 = vmatpush1.msra.mxu0 0.0
      %1502 = vmatprep.subr.mxu0 0.0
      %1503 = vmatpush1.msra.mxu0 0.0
      %1504 = vmatprep.subr.mxu0 0.0
      %1505 = vmatpush1.msra.mxu0 0.0
      %1506 = vmatprep.subr.mxu0 0.0
      %1507 = vmatpush1.msra.mxu0 0.0
      %1508 = vmatprep.subr.mxu0 0.0
      %1509 = vmatpush1.msra.mxu0 0.0
      %1510 = vmatprep.subr.mxu0 0.0
      %1511 = vmatpush1.msra.mxu0 0.0
      %1512 = vmatprep.subr.mxu0 0.0
      %1513 = vmatpush1.msra.mxu0 0.0
      %1514 = vmatprep.subr.mxu0 0.0
      %1515 = vmatpush1.msra.mxu0 0.0
      %1516 = vmatprep.subr.mxu0 0.0
      %1517 = vmatpush1.msra.mxu0 0.0
      %1518 = vmatprep.subr.mxu0 0.0
      %1519 = vmatpush1.msra.mxu0 0.0
      %1520 = vmatprep.subr.mxu0 0.0
      %1521 = vmatpush1.msra.mxu0 0.0
      %1522 = vmatprep.subr.mxu0 0.0
      %1523 = vmatpush1.msra.mxu0 0.0
      %1524 = vmatprep.subr.mxu0 0.0
      %1525 = vmatpush1.msra.mxu0 0.0
      %1526 = vmatprep.mubr.f32.mxu0 0.0
      %1527 = vmatmul.mubr.f32.gmra.mrb[0].mxu0 %v1460
      %v1528 = vpop.f32.mrb[0].mxu0
      %v1529 = vadd.f32 0.0, %v1528
      %v1530 = vpop.f32.mrb[0].mxu0
      %1531 = vdwg.mxu0
      %1533 = vrot.lane.b32.xlu0 %v1529, 13
      %v1534 = vpop.permute.xlu0 %1533
      %vm1536 = vcmask 138344
      %1537 = vst.msk [vmem:[#allocation4] sm:$0xff] %vm1536, %v1534
      %1538 = vrot.lane.b32.xlu0 %v1374, 88
      %v1539 = vpop.permute.xlu0 %1538
      %v1540 = vsel %vm1375, %v1539, 0
      %1542 = vmatprep.subr.mxu0 0.0
      %1543 = vmatpush1.msra.mxu0 %v1380
      %1544 = vmatprep.subr.mxu0 0.0
      %1545 = vmatpush1.msra.mxu0 0.0
      %1546 = vmatprep.subr.mxu0 0.0
      %1547 = vmatpush1.msra.mxu0 0.0
      %1548 = vmatprep.subr.mxu0 0.0
      %1549 = vmatpush1.msra.mxu0 0.0
      %1550 = vmatprep.subr.mxu0 0.0
      %1551 = vmatpush1.msra.mxu0 0.0
      %1552 = vmatprep.subr.mxu0 0.0
      %1553 = vmatpush1.msra.mxu0 0.0
      %1554 = vmatprep.subr.mxu0 0.0
      %1555 = vmatpush1.msra.mxu0 0.0
      %1556 = vmatprep.subr.mxu0 0.0
      %1557 = vmatpush1.msra.mxu0 0.0
      %1558 = vmatprep.subr.mxu0 0.0
      %1559 = vmatpush1.msra.mxu0 0.0
      %1560 = vmatprep.subr.mxu0 0.0
      %1561 = vmatpush1.msra.mxu0 0.0
      %1562 = vmatprep.subr.mxu0 0.0
      %1563 = vmatpush1.msra.mxu0 0.0
      %1564 = vmatprep.subr.mxu0 0.0
      %1565 = vmatpush1.msra.mxu0 0.0
      %1566 = vmatprep.subr.mxu0 0.0
      %1567 = vmatpush1.msra.mxu0 0.0
      %1568 = vmatprep.subr.mxu0 0.0
      %1569 = vmatpush1.msra.mxu0 0.0
      %1570 = vmatprep.subr.mxu0 0.0
      %1571 = vmatpush1.msra.mxu0 0.0
      %1572 = vmatprep.subr.mxu0 0.0
      %1573 = vmatpush1.msra.mxu0 0.0
      %1574 = vmatprep.subr.mxu0 0.0
      %1575 = vmatpush1.msra.mxu0 0.0
      %1576 = vmatprep.subr.mxu0 0.0
      %1577 = vmatpush1.msra.mxu0 0.0
      %1578 = vmatprep.subr.mxu0 0.0
      %1579 = vmatpush1.msra.mxu0 0.0
      %1580 = vmatprep.subr.mxu0 0.0
      %1581 = vmatpush1.msra.mxu0 0.0
      %1582 = vmatprep.subr.mxu0 0.0
      %1583 = vmatpush1.msra.mxu0 0.0
      %1584 = vmatprep.subr.mxu0 0.0
      %1585 = vmatpush1.msra.mxu0 0.0
      %1586 = vmatprep.subr.mxu0 0.0
      %1587 = vmatpush1.msra.mxu0 0.0
      %1588 = vmatprep.subr.mxu0 0.0
      %1589 = vmatpush1.msra.mxu0 0.0
      %1590 = vmatprep.subr.mxu0 0.0
      %1591 = vmatpush1.msra.mxu0 0.0
      %1592 = vmatprep.subr.mxu0 0.0
      %1593 = vmatpush1.msra.mxu0 0.0
      %1594 = vmatprep.subr.mxu0 0.0
      %1595 = vmatpush1.msra.mxu0 0.0
      %1596 = vmatprep.subr.mxu0 0.0
      %1597 = vmatpush1.msra.mxu0 0.0
      %1598 = vmatprep.subr.mxu0 0.0
      %1599 = vmatpush1.msra.mxu0 0.0
      %1600 = vmatprep.subr.mxu0 0.0
      %1601 = vmatpush1.msra.mxu0 0.0
      %1602 = vmatprep.subr.mxu0 0.0
      %1603 = vmatpush1.msra.mxu0 0.0
      %1604 = vmatprep.subr.mxu0 0.0
      %1605 = vmatpush1.msra.mxu0 0.0
      %1606 = vmatprep.mubr.f32.mxu0 0.0
      %1607 = vmatmul.mubr.f32.gmra.mrb[0].mxu0 %v1540
      %v1608 = vpop.f32.mrb[0].mxu0
      %v1609 = vadd.f32 0.0, %v1608
      %v1610 = vpop.f32.mrb[0].mxu0
      %1611 = vdwg.mxu0
      %1613 = vrot.lane.b32.xlu0 %v1609, 19
      %v1614 = vpop.permute.xlu0 %1613
      %vm1616 = vcmask 187544
      %1617 = vst.msk [vmem:[#allocation4] sm:$0xff] %vm1616, %v1614
      %1618 = vrot.lane.b32.xlu0 %v1374, 68
      %v1619 = vpop.permute.xlu0 %1618
      %v1620 = vsel %vm1375, %v1619, 0
      %1622 = vmatprep.subr.mxu0 0.0
      %1623 = vmatpush1.msra.mxu0 %v1380
      %1624 = vmatprep.subr.mxu0 0.0
      %1625 = vmatpush1.msra.mxu0 0.0
      %1626 = vmatprep.subr.mxu0 0.0
      %1627 = vmatpush1.msra.mxu0 0.0
      %1628 = vmatprep.subr.mxu0 0.0
      %1629 = vmatpush1.msra.mxu0 0.0
      %1630 = vmatprep.subr.mxu0 0.0
      %1631 = vmatpush1.msra.mxu0 0.0
      %1632 = vmatprep.subr.mxu0 0.0
      %1633 = vmatpush1.msra.mxu0 0.0
      %1634 = vmatprep.subr.mxu0 0.0
      %1635 = vmatpush1.msra.mxu0 0.0
      %1636 = vmatprep.subr.mxu0 0.0
      %1637 = vmatpush1.msra.mxu0 0.0
      %1638 = vmatprep.subr.mxu0 0.0
      %1639 = vmatpush1.msra.mxu0 0.0
      %1640 = vmatprep.subr.mxu0 0.0
      %1641 = vmatpush1.msra.mxu0 0.0
      %1642 = vmatprep.subr.mxu0 0.0
      %1643 = vmatpush1.msra.mxu0 0.0
      %1644 = vmatprep.subr.mxu0 0.0
      %1645 = vmatpush1.msra.mxu0 0.0
      %1646 = vmatprep.subr.mxu0 0.0
      %1647 = vmatpush1.msra.mxu0 0.0
      %1648 = vmatprep.subr.mxu0 0.0
      %1649 = vmatpush1.msra.mxu0 0.0
      %1650 = vmatprep.subr.mxu0 0.0
      %1651 = vmatpush1.msra.mxu0 0.0
      %1652 = vmatprep.subr.mxu0 0.0
      %1653 = vmatpush1.msra.mxu0 0.0
      %1654 = vmatprep.subr.mxu0 0.0
      %1655 = vmatpush1.msra.mxu0 0.0
      %1656 = vmatprep.subr.mxu0 0.0
      %1657 = vmatpush1.msra.mxu0 0.0
      %1658 = vmatprep.subr.mxu0 0.0
      %1659 = vmatpush1.msra.mxu0 0.0
      %1660 = vmatprep.subr.mxu0 0.0
      %1661 = vmatpush1.msra.mxu0 0.0
      %1662 = vmatprep.subr.mxu0 0.0
      %1663 = vmatpush1.msra.mxu0 0.0
      %1664 = vmatprep.subr.mxu0 0.0
      %1665 = vmatpush1.msra.mxu0 0.0
      %1666 = vmatprep.subr.mxu0 0.0
      %1667 = vmatpush1.msra.mxu0 0.0
      %1668 = vmatprep.subr.mxu0 0.0
      %1669 = vmatpush1.msra.mxu0 0.0
      %1670 = vmatprep.subr.mxu0 0.0
      %1671 = vmatpush1.msra.mxu0 0.0
      %1672 = vmatprep.subr.mxu0 0.0
      %1673 = vmatpush1.msra.mxu0 0.0
      %1674 = vmatprep.subr.mxu0 0.0
      %1675 = vmatpush1.msra.mxu0 0.0
      %1676 = vmatprep.subr.mxu0 0.0
      %1677 = vmatpush1.msra.mxu0 0.0
      %1678 = vmatprep.subr.mxu0 0.0
      %1679 = vmatpush1.msra.mxu0 0.0
      %1680 = vmatprep.subr.mxu0 0.0
      %1681 = vmatpush1.msra.mxu0 0.0
      %1682 = vmatprep.subr.mxu0 0.0
      %1683 = vmatpush1.msra.mxu0 0.0
      %1684 = vmatprep.subr.mxu0 0.0
      %1685 = vmatpush1.msra.mxu0 0.0
      %1686 = vmatprep.mubr.f32.mxu0 0.0
      %1687 = vmatmul.mubr.f32.gmra.mrb[0].mxu0 %v1620
      %v1688 = vpop.f32.mrb[0].mxu0
      %v1689 = vadd.f32 0.0, %v1688
      %v1690 = vpop.f32.mrb[0].mxu0
      %1691 = vdwg.mxu0
      %1693 = vrot.lane.b32.xlu0 %v1689, 25
      %v1694 = vpop.permute.xlu0 %1693
      %vm1696 = vcmask 236744
      %1697 = vst.msk [vmem:[#allocation4] sm:$0xff] %vm1696, %v1694
      %v1698 = vld [vmem:[#allocation4] sm:$0xff]
      %1700 = vrot.lane.b32.xlu0 %v1698, 127
      %v1701 = vpop.permute.xlu0 %1700
      %1703 = vrot.lane.b32.xlu0 %v1698, 126
      %v1704 = vpop.permute.xlu0 %1703
      %1706 = vrot.lane.b32.xlu0 %v1698, 122
      %v1707 = vpop.permute.xlu0 %1706
      %1709 = vrot.lane.b32.xlu0 %v1698, 121
      %v1710 = vpop.permute.xlu0 %1709
      %1712 = vrot.lane.b32.xlu0 %v1698, 120
      %v1713 = vpop.permute.xlu0 %1712
      %1715 = vrot.lane.b32.xlu0 %v1698, 116
      %v1716 = vpop.permute.xlu0 %1715
      %1718 = vrot.lane.b32.xlu0 %v1698, 115
      %v1719 = vpop.permute.xlu0 %1718
      %1721 = vrot.lane.b32.xlu0 %v1698, 114
      %v1722 = vpop.permute.xlu0 %1721
      %v1724 = vpack.c.bf16 %v1701, %v1698
      %v1725 = vpack.c.bf16 %v1707, %v1704
      %v1726 = vpack.c.bf16 %v1713, %v1710
      %v1727 = vpack.c.bf16 %v1719, %v1716
      %v1728 = vpack.c.bf16 %v1722, %v1722
      %s1729 = scalar_lea.vmem %s1, 12
      %v1730 = vld [vmem:[%s1729] sm:$0xf]
      %v1732 = vsel %vm349, %v1730, 0
      %v1735 = vsel %vm353, %v1728, 0
      %1737 = vmatprep.subr.bf16.mxu0 0
      %1738 = vmatpush1.bf16.msra.mxu0 %v1724
      %1739 = vmatprep.subr.bf16.mxu0 0
      %1740 = vmatpush1.bf16.msra.mxu0 %v1725
      %1741 = vmatprep.subr.bf16.mxu0 0
      %1742 = vmatpush1.bf16.msra.mxu0 %v1726
      %1743 = vmatprep.subr.bf16.mxu0 0
      %1744 = vmatpush1.bf16.msra.mxu0 %v1727
      %1745 = vmatprep.subr.bf16.mxu0 0
      %1746 = vmatpush1.bf16.msra.mxu0 %v1735
      %1747 = vmatprep.subr.bf16.mxu0 0
      %1748 = vmatpush1.bf16.msra.mxu0 0
      %1749 = vmatprep.subr.bf16.mxu0 0
      %1750 = vmatpush1.bf16.msra.mxu0 0
      %1751 = vmatprep.subr.bf16.mxu0 0
      %1752 = vmatpush1.bf16.msra.mxu0 0
      %1753 = vmatprep.subr.bf16.mxu0 0
      %1754 = vmatpush1.bf16.msra.mxu0 0
      %1755 = vmatprep.subr.bf16.mxu0 0
      %1756 = vmatpush1.bf16.msra.mxu0 0
      %1757 = vmatprep.subr.bf16.mxu0 0
      %1758 = vmatpush1.bf16.msra.mxu0 0
      %1759 = vmatprep.subr.bf16.mxu0 0
      %1760 = vmatpush1.bf16.msra.mxu0 0
      %1761 = vmatprep.subr.bf16.mxu0 0
      %1762 = vmatpush1.bf16.msra.mxu0 0
      %1763 = vmatprep.subr.bf16.mxu0 0
      %1764 = vmatpush1.bf16.msra.mxu0 0
      %1765 = vmatprep.subr.bf16.mxu0 0
      %1766 = vmatpush1.bf16.msra.mxu0 0
      %1767 = vmatprep.subr.bf16.mxu0 0
      %1768 = vmatpush1.bf16.msra.mxu0 0
      %1769 = vmatprep.mubr.bf16.mxu0 0
      %1770 = vmatmul.mubr.bf16.gmra.mrb[0].mxu0 %v1732
      %v1771 = vpop.f32.mrb[0].mxu0
      %v1772 = vadd.f32 0.0, %v1771
      %v1773 = vpop.f32.mrb[0].mxu0
      %v1774 = vpop.f32.mrb[0].mxu0
      %v1775 = vpop.f32.mrb[0].mxu0
      %1776 = vdwg.mxu0
      %v1777 = vmax.f32 %v1772, 0.0
      %v1778 = vmul.u32 %v448, 2
      %vm1779 = vcmp.eq.s32.totalorder %v451, %v1778
      %v1780 = vsel %vm1779, 1, 0
      %v1781 = vcvt.s32.f32 %v1780
      %v1783 = vsel %vm1076, %v1777, 0
      %v1786 = vsel %vm353, %v1781, 0
      %1788 = vmatprep.subr.mxu0 0.0
      %1789 = vmatpush1.msra.mxu0 %v1786
      %1790 = vmatprep.subr.mxu0 0.0
      %1791 = vmatpush1.msra.mxu0 0.0
      %1792 = vmatprep.subr.mxu0 0.0
      %1793 = vmatpush1.msra.mxu0 0.0
      %1794 = vmatprep.subr.mxu0 0.0
      %1795 = vmatpush1.msra.mxu0 0.0
      %1796 = vmatprep.subr.mxu0 0.0
      %1797 = vmatpush1.msra.mxu0 0.0
      %1798 = vmatprep.subr.mxu0 0.0
      %1799 = vmatpush1.msra.mxu0 0.0
      %1800 = vmatprep.subr.mxu0 0.0
      %1801 = vmatpush1.msra.mxu0 0.0
      %1802 = vmatprep.subr.mxu0 0.0
      %1803 = vmatpush1.msra.mxu0 0.0
      %1804 = vmatprep.subr.mxu0 0.0
      %1805 = vmatpush1.msra.mxu0 0.0
      %1806 = vmatprep.subr.mxu0 0.0
      %1807 = vmatpush1.msra.mxu0 0.0
      %1808 = vmatprep.subr.mxu0 0.0
      %1809 = vmatpush1.msra.mxu0 0.0
      %1810 = vmatprep.subr.mxu0 0.0
      %1811 = vmatpush1.msra.mxu0 0.0
      %1812 = vmatprep.subr.mxu0 0.0
      %1813 = vmatpush1.msra.mxu0 0.0
      %1814 = vmatprep.subr.mxu0 0.0
      %1815 = vmatpush1.msra.mxu0 0.0
      %1816 = vmatprep.subr.mxu0 0.0
      %1817 = vmatpush1.msra.mxu0 0.0
      %1818 = vmatprep.subr.mxu0 0.0
      %1819 = vmatpush1.msra.mxu0 0.0
      %1820 = vmatprep.subr.mxu0 0.0
      %1821 = vmatpush1.msra.mxu0 0.0
      %1822 = vmatprep.subr.mxu0 0.0
      %1823 = vmatpush1.msra.mxu0 0.0
      %1824 = vmatprep.subr.mxu0 0.0
      %1825 = vmatpush1.msra.mxu0 0.0
      %1826 = vmatprep.subr.mxu0 0.0
      %1827 = vmatpush1.msra.mxu0 0.0
      %1828 = vmatprep.subr.mxu0 0.0
      %1829 = vmatpush1.msra.mxu0 0.0
      %1830 = vmatprep.subr.mxu0 0.0
      %1831 = vmatpush1.msra.mxu0 0.0
      %1832 = vmatprep.subr.mxu0 0.0
      %1833 = vmatpush1.msra.mxu0 0.0
      %1834 = vmatprep.subr.mxu0 0.0
      %1835 = vmatpush1.msra.mxu0 0.0
      %1836 = vmatprep.subr.mxu0 0.0
      %1837 = vmatpush1.msra.mxu0 0.0
      %1838 = vmatprep.subr.mxu0 0.0
      %1839 = vmatpush1.msra.mxu0 0.0
      %1840 = vmatprep.subr.mxu0 0.0
      %1841 = vmatpush1.msra.mxu0 0.0
      %1842 = vmatprep.subr.mxu0 0.0
      %1843 = vmatpush1.msra.mxu0 0.0
      %1844 = vmatprep.subr.mxu0 0.0
      %1845 = vmatpush1.msra.mxu0 0.0
      %1846 = vmatprep.subr.mxu0 0.0
      %1847 = vmatpush1.msra.mxu0 0.0
      %1848 = vmatprep.subr.mxu0 0.0
      %1849 = vmatpush1.msra.mxu0 0.0
      %1850 = vmatprep.subr.mxu0 0.0
      %1851 = vmatpush1.msra.mxu0 0.0
      %1852 = vmatprep.mubr.f32.mxu0 0.0
      %1853 = vmatmul.mubr.f32.gmra.mrb[0].mxu0 %v1783
      %v1854 = vpop.f32.mrb[0].mxu0
      %v1855 = vadd.f32 0.0, %v1854
      %v1856 = vpop.f32.mrb[0].mxu0
      %1857 = vdwg.mxu0
      %1859 = vrot.lane.b32.xlu0 %v1855, 11
      %v1860 = vpop.permute.xlu0 %1859
      %1862 = vst.msk [vmem:[#allocation5] sm:$0xff] %vm551, %v1860
      %1863 = vrot.lane.b32.xlu0 %v1777, 122
      %v1864 = vpop.permute.xlu0 %1863
      %v1865 = vsel %vm1076, %v1864, 0
      %1867 = vmatprep.subr.mxu0 0.0
      %1868 = vmatpush1.msra.mxu0 %v1786
      %1869 = vmatprep.subr.mxu0 0.0
      %1870 = vmatpush1.msra.mxu0 0.0
      %1871 = vmatprep.subr.mxu0 0.0
      %1872 = vmatpush1.msra.mxu0 0.0
      %1873 = vmatprep.subr.mxu0 0.0
      %1874 = vmatpush1.msra.mxu0 0.0
      %1875 = vmatprep.subr.mxu0 0.0
      %1876 = vmatpush1.msra.mxu0 0.0
      %1877 = vmatprep.subr.mxu0 0.0
      %1878 = vmatpush1.msra.mxu0 0.0
      %1879 = vmatprep.subr.mxu0 0.0
      %1880 = vmatpush1.msra.mxu0 0.0
      %1881 = vmatprep.subr.mxu0 0.0
      %1882 = vmatpush1.msra.mxu0 0.0
      %1883 = vmatprep.subr.mxu0 0.0
      %1884 = vmatpush1.msra.mxu0 0.0
      %1885 = vmatprep.subr.mxu0 0.0
      %1886 = vmatpush1.msra.mxu0 0.0
      %1887 = vmatprep.subr.mxu0 0.0
      %1888 = vmatpush1.msra.mxu0 0.0
      %1889 = vmatprep.subr.mxu0 0.0
      %1890 = vmatpush1.msra.mxu0 0.0
      %1891 = vmatprep.subr.mxu0 0.0
      %1892 = vmatpush1.msra.mxu0 0.0
      %1893 = vmatprep.subr.mxu0 0.0
      %1894 = vmatpush1.msra.mxu0 0.0
      %1895 = vmatprep.subr.mxu0 0.0
      %1896 = vmatpush1.msra.mxu0 0.0
      %1897 = vmatprep.subr.mxu0 0.0
      %1898 = vmatpush1.msra.mxu0 0.0
      %1899 = vmatprep.subr.mxu0 0.0
      %1900 = vmatpush1.msra.mxu0 0.0
      %1901 = vmatprep.subr.mxu0 0.0
      %1902 = vmatpush1.msra.mxu0 0.0
      %1903 = vmatprep.subr.mxu0 0.0
      %1904 = vmatpush1.msra.mxu0 0.0
      %1905 = vmatprep.subr.mxu0 0.0
      %1906 = vmatpush1.msra.mxu0 0.0
      %1907 = vmatprep.subr.mxu0 0.0
      %1908 = vmatpush1.msra.mxu0 0.0
      %1909 = vmatprep.subr.mxu0 0.0
      %1910 = vmatpush1.msra.mxu0 0.0
      %1911 = vmatprep.subr.mxu0 0.0
      %1912 = vmatpush1.msra.mxu0 0.0
      %1913 = vmatprep.subr.mxu0 0.0
      %1914 = vmatpush1.msra.mxu0 0.0
      %1915 = vmatprep.subr.mxu0 0.0
      %1916 = vmatpush1.msra.mxu0 0.0
      %1917 = vmatprep.subr.mxu0 0.0
      %1918 = vmatpush1.msra.mxu0 0.0
      %1919 = vmatprep.subr.mxu0 0.0
      %1920 = vmatpush1.msra.mxu0 0.0
      %1921 = vmatprep.subr.mxu0 0.0
      %1922 = vmatpush1.msra.mxu0 0.0
      %1923 = vmatprep.subr.mxu0 0.0
      %1924 = vmatpush1.msra.mxu0 0.0
      %1925 = vmatprep.subr.mxu0 0.0
      %1926 = vmatpush1.msra.mxu0 0.0
      %1927 = vmatprep.subr.mxu0 0.0
      %1928 = vmatpush1.msra.mxu0 0.0
      %1929 = vmatprep.subr.mxu0 0.0
      %1930 = vmatpush1.msra.mxu0 0.0
      %1931 = vmatprep.mubr.f32.mxu0 0.0
      %1932 = vmatmul.mubr.f32.gmra.mrb[0].mxu0 %v1865
      %v1933 = vpop.f32.mrb[0].mxu0
      %v1934 = vadd.f32 0.0, %v1933
      %v1935 = vpop.f32.mrb[0].mxu0
      %1936 = vdwg.mxu0
      %1938 = vrot.lane.b32.xlu0 %v1934, 31
      %v1939 = vpop.permute.xlu0 %1938
      %1941 = vst.msk [vmem:[#allocation5] sm:$0xff] %vm711, %v1939
      %1942 = vrot.lane.b32.xlu0 %v1777, 116
      %v1943 = vpop.permute.xlu0 %1942
      %v1944 = vsel %vm1076, %v1943, 0
      %1946 = vmatprep.subr.mxu0 0.0
      %1947 = vmatpush1.msra.mxu0 %v1786
      %1948 = vmatprep.subr.mxu0 0.0
      %1949 = vmatpush1.msra.mxu0 0.0
      %1950 = vmatprep.subr.mxu0 0.0
      %1951 = vmatpush1.msra.mxu0 0.0
      %1952 = vmatprep.subr.mxu0 0.0
      %1953 = vmatpush1.msra.mxu0 0.0
      %1954 = vmatprep.subr.mxu0 0.0
      %1955 = vmatpush1.msra.mxu0 0.0
      %1956 = vmatprep.subr.mxu0 0.0
      %1957 = vmatpush1.msra.mxu0 0.0
      %1958 = vmatprep.subr.mxu0 0.0
      %1959 = vmatpush1.msra.mxu0 0.0
      %1960 = vmatprep.subr.mxu0 0.0
      %1961 = vmatpush1.msra.mxu0 0.0
      %1962 = vmatprep.subr.mxu0 0.0
      %1963 = vmatpush1.msra.mxu0 0.0
      %1964 = vmatprep.subr.mxu0 0.0
      %1965 = vmatpush1.msra.mxu0 0.0
      %1966 = vmatprep.subr.mxu0 0.0
      %1967 = vmatpush1.msra.mxu0 0.0
      %1968 = vmatprep.subr.mxu0 0.0
      %1969 = vmatpush1.msra.mxu0 0.0
      %1970 = vmatprep.subr.mxu0 0.0
      %1971 = vmatpush1.msra.mxu0 0.0
      %1972 = vmatprep.subr.mxu0 0.0
      %1973 = vmatpush1.msra.mxu0 0.0
      %1974 = vmatprep.subr.mxu0 0.0
      %1975 = vmatpush1.msra.mxu0 0.0
      %1976 = vmatprep.subr.mxu0 0.0
      %1977 = vmatpush1.msra.mxu0 0.0
      %1978 = vmatprep.subr.mxu0 0.0
      %1979 = vmatpush1.msra.mxu0 0.0
      %1980 = vmatprep.subr.mxu0 0.0
      %1981 = vmatpush1.msra.mxu0 0.0
      %1982 = vmatprep.subr.mxu0 0.0
      %1983 = vmatpush1.msra.mxu0 0.0
      %1984 = vmatprep.subr.mxu0 0.0
      %1985 = vmatpush1.msra.mxu0 0.0
      %1986 = vmatprep.subr.mxu0 0.0
      %1987 = vmatpush1.msra.mxu0 0.0
      %1988 = vmatprep.subr.mxu0 0.0
      %1989 = vmatpush1.msra.mxu0 0.0
      %1990 = vmatprep.subr.mxu0 0.0
      %1991 = vmatpush1.msra.mxu0 0.0
      %1992 = vmatprep.subr.mxu0 0.0
      %1993 = vmatpush1.msra.mxu0 0.0
      %1994 = vmatprep.subr.mxu0 0.0
      %1995 = vmatpush1.msra.mxu0 0.0
      %1996 = vmatprep.subr.mxu0 0.0
      %1997 = vmatpush1.msra.mxu0 0.0
      %1998 = vmatprep.subr.mxu0 0.0
      %1999 = vmatpush1.msra.mxu0 0.0
      %2000 = vmatprep.subr.mxu0 0.0
      %2001 = vmatpush1.msra.mxu0 0.0
      %2002 = vmatprep.subr.mxu0 0.0
      %2003 = vmatpush1.msra.mxu0 0.0
      %2004 = vmatprep.subr.mxu0 0.0
      %2005 = vmatpush1.msra.mxu0 0.0
      %2006 = vmatprep.subr.mxu0 0.0
      %2007 = vmatpush1.msra.mxu0 0.0
      %2008 = vmatprep.subr.mxu0 0.0
      %2009 = vmatpush1.msra.mxu0 0.0
      %2010 = vmatprep.mubr.f32.mxu0 0.0
      %2011 = vmatmul.mubr.f32.gmra.mrb[0].mxu0 %v1944
      %v2012 = vpop.f32.mrb[0].mxu0
      %v2013 = vadd.f32 0.0, %v2012
      %v2014 = vpop.f32.mrb[0].mxu0
      %2015 = vdwg.mxu0
      %2017 = vrot.lane.b32.xlu0 %v2013, 51
      %v2018 = vpop.permute.xlu0 %2017
      %2020 = vst.msk [vmem:[#allocation5] sm:$0xff] %vm891, %v2018
      %2021 = vrot.lane.b32.xlu0 %v1777, 110
      %v2022 = vpop.permute.xlu0 %2021
      %v2023 = vsel %vm1076, %v2022, 0
      %2025 = vmatprep.subr.mxu0 0.0
      %2026 = vmatpush1.msra.mxu0 %v1786
      %2027 = vmatprep.subr.mxu0 0.0
      %2028 = vmatpush1.msra.mxu0 0.0
      %2029 = vmatprep.subr.mxu0 0.0
      %2030 = vmatpush1.msra.mxu0 0.0
      %2031 = vmatprep.subr.mxu0 0.0
      %2032 = vmatpush1.msra.mxu0 0.0
      %2033 = vmatprep.subr.mxu0 0.0
      %2034 = vmatpush1.msra.mxu0 0.0
      %2035 = vmatprep.subr.mxu0 0.0
      %2036 = vmatpush1.msra.mxu0 0.0
      %2037 = vmatprep.subr.mxu0 0.0
      %2038 = vmatpush1.msra.mxu0 0.0
      %2039 = vmatprep.subr.mxu0 0.0
      %2040 = vmatpush1.msra.mxu0 0.0
      %2041 = vmatprep.subr.mxu0 0.0
      %2042 = vmatpush1.msra.mxu0 0.0
      %2043 = vmatprep.subr.mxu0 0.0
      %2044 = vmatpush1.msra.mxu0 0.0
      %2045 = vmatprep.subr.mxu0 0.0
      %2046 = vmatpush1.msra.mxu0 0.0
      %2047 = vmatprep.subr.mxu0 0.0
      %2048 = vmatpush1.msra.mxu0 0.0
      %2049 = vmatprep.subr.mxu0 0.0
      %2050 = vmatpush1.msra.mxu0 0.0
      %2051 = vmatprep.subr.mxu0 0.0
      %2052 = vmatpush1.msra.mxu0 0.0
      %2053 = vmatprep.subr.mxu0 0.0
      %2054 = vmatpush1.msra.mxu0 0.0
      %2055 = vmatprep.subr.mxu0 0.0
      %2056 = vmatpush1.msra.mxu0 0.0
      %2057 = vmatprep.subr.mxu0 0.0
      %2058 = vmatpush1.msra.mxu0 0.0
      %2059 = vmatprep.subr.mxu0 0.0
      %2060 = vmatpush1.msra.mxu0 0.0
      %2061 = vmatprep.subr.mxu0 0.0
      %2062 = vmatpush1.msra.mxu0 0.0
      %2063 = vmatprep.subr.mxu0 0.0
      %2064 = vmatpush1.msra.mxu0 0.0
      %2065 = vmatprep.subr.mxu0 0.0
      %2066 = vmatpush1.msra.mxu0 0.0
      %2067 = vmatprep.subr.mxu0 0.0
      %2068 = vmatpush1.msra.mxu0 0.0
      %2069 = vmatprep.subr.mxu0 0.0
      %2070 = vmatpush1.msra.mxu0 0.0
      %2071 = vmatprep.subr.mxu0 0.0
      %2072 = vmatpush1.msra.mxu0 0.0
      %2073 = vmatprep.subr.mxu0 0.0
      %2074 = vmatpush1.msra.mxu0 0.0
      %2075 = vmatprep.subr.mxu0 0.0
      %2076 = vmatpush1.msra.mxu0 0.0
      %2077 = vmatprep.subr.mxu0 0.0
      %2078 = vmatpush1.msra.mxu0 0.0
      %2079 = vmatprep.subr.mxu0 0.0
      %2080 = vmatpush1.msra.mxu0 0.0
      %2081 = vmatprep.subr.mxu0 0.0
      %2082 = vmatpush1.msra.mxu0 0.0
      %2083 = vmatprep.subr.mxu0 0.0
      %2084 = vmatpush1.msra.mxu0 0.0
      %2085 = vmatprep.subr.mxu0 0.0
      %2086 = vmatpush1.msra.mxu0 0.0
      %2087 = vmatprep.subr.mxu0 0.0
      %2088 = vmatpush1.msra.mxu0 0.0
      %2089 = vmatprep.mubr.f32.mxu0 0.0
      %2090 = vmatmul.mubr.f32.gmra.mrb[0].mxu0 %v2023
      %v2091 = vpop.f32.mrb[0].mxu0
      %v2092 = vadd.f32 0.0, %v2091
      %v2093 = vpop.f32.mrb[0].mxu0
      %2094 = vdwg.mxu0
      %2096 = vrot.lane.b32.xlu0 %v2092, 71
      %v2097 = vpop.permute.xlu0 %2096
      %2099 = vst.msk [vmem:[#allocation5] sm:$0xff] %vm1051, %v2097
      %v2100 = vld [vmem:[#allocation5] sm:$0xff]
      %2102 = vrot.lane.b32.xlu0 %v2100, 127
      %v2103 = vpop.permute.xlu0 %2102
      %2105 = vrot.lane.b32.xlu0 %v2100, 126
      %v2106 = vpop.permute.xlu0 %2105
      %2108 = vrot.lane.b32.xlu0 %v2100, 118
      %v2109 = vpop.permute.xlu0 %2108
      %2111 = vrot.lane.b32.xlu0 %v2100, 117
      %v2112 = vpop.permute.xlu0 %2111
      %2114 = vrot.lane.b32.xlu0 %v2100, 116
      %v2115 = vpop.permute.xlu0 %2114
      %2117 = vrot.lane.b32.xlu0 %v2100, 108
      %v2118 = vpop.permute.xlu0 %2117
      %2120 = vrot.lane.b32.xlu0 %v2100, 107
      %v2121 = vpop.permute.xlu0 %2120
      %2123 = vrot.lane.b32.xlu0 %v2100, 106
      %v2124 = vpop.permute.xlu0 %2123
      %v2126 = vpack.c.bf16 %v2103, %v2100
      %v2127 = vpack.c.bf16 %v2109, %v2106
      %v2128 = vpack.c.bf16 %v2115, %v2112
      %v2129 = vpack.c.bf16 %v2121, %v2118
      %v2130 = vpack.c.bf16 %v2124, %v2124
      %s2131 = scalar_lea.vmem %s1, 16
      %v2132 = vld [vmem:[%s2131] sm:$0xf]
      %v2134 = vsel %vm349, %v2132, 0
      %v2137 = vsel %vm353, %v2130, 0
      %2139 = vmatprep.subr.bf16.mxu0 0
      %2140 = vmatpush1.bf16.msra.mxu0 %v2126
      %2141 = vmatprep.subr.bf16.mxu0 0
      %2142 = vmatpush1.bf16.msra.mxu0 %v2127
      %2143 = vmatprep.subr.bf16.mxu0 0
      %2144 = vmatpush1.bf16.msra.mxu0 %v2128
      %2145 = vmatprep.subr.bf16.mxu0 0
      %2146 = vmatpush1.bf16.msra.mxu0 %v2129
      %2147 = vmatprep.subr.bf16.mxu0 0
      %2148 = vmatpush1.bf16.msra.mxu0 %v2137
      %2149 = vmatprep.subr.bf16.mxu0 0
      %2150 = vmatpush1.bf16.msra.mxu0 0
      %2151 = vmatprep.subr.bf16.mxu0 0
      %2152 = vmatpush1.bf16.msra.mxu0 0
      %2153 = vmatprep.subr.bf16.mxu0 0
      %2154 = vmatpush1.bf16.msra.mxu0 0
      %2155 = vmatprep.subr.bf16.mxu0 0
      %2156 = vmatpush1.bf16.msra.mxu0 0
      %2157 = vmatprep.subr.bf16.mxu0 0
      %2158 = vmatpush1.bf16.msra.mxu0 0
      %2159 = vmatprep.subr.bf16.mxu0 0
      %2160 = vmatpush1.bf16.msra.mxu0 0
      %2161 = vmatprep.subr.bf16.mxu0 0
      %2162 = vmatpush1.bf16.msra.mxu0 0
      %2163 = vmatprep.subr.bf16.mxu0 0
      %2164 = vmatpush1.bf16.msra.mxu0 0
      %2165 = vmatprep.subr.bf16.mxu0 0
      %2166 = vmatpush1.bf16.msra.mxu0 0
      %2167 = vmatprep.subr.bf16.mxu0 0
      %2168 = vmatpush1.bf16.msra.mxu0 0
      %2169 = vmatprep.subr.bf16.mxu0 0
      %2170 = vmatpush1.bf16.msra.mxu0 0
      %2171 = vmatprep.mubr.bf16.mxu0 0
      %2172 = vmatmul.mubr.bf16.gmra.mrb[0].mxu0 %v2134
      %v2173 = vpop.f32.mrb[0].mxu0
      %v2174 = vadd.f32 0.0, %v2173
      %v2175 = vpop.f32.mrb[0].mxu0
      %v2176 = vpop.f32.mrb[0].mxu0
      %v2177 = vpop.f32.mrb[0].mxu0
      %2178 = vdwg.mxu0
      %v2179 = vmax.f32 %v2174, 0.0
      %2181 = vrot.lane.b32.xlu0 %v2179, 11
      %v2182 = vpop.permute.xlu0 %2181
      %2184 = vst.msk [vmem:[#allocation6] sm:$0xff] %vm551, %v2182
      %2185 = vst.msk [vmem:[%s218] sm:$0x3f] %vm1241, %v2179
      %2186 = vst.msk [vmem:[#allocation6] sm:$0xff] %vm631, %v2182
      %2187 = vrot.lane.b32.xlu0 %v2179, 126
      %v2188 = vpop.permute.xlu0 %2187
      %2190 = vst.msk [vmem:[%s218] sm:$0x3f] %vm1247, %v2188
      %2191 = vst.msk [vmem:[#allocation6] sm:$0xff] %vm711, %v2182
      %2192 = vrot.lane.b32.xlu0 %v2179, 124
      %v2193 = vpop.permute.xlu0 %2192
      %2195 = vst.msk [vmem:[%s218] sm:$0x3f] %vm1253, %v2193
      %2196 = vst.msk [vmem:[#allocation6] sm:$0xff] %vm803, %v2182
      %2197 = vrot.lane.b32.xlu0 %v2179, 122
      %v2198 = vpop.permute.xlu0 %2197
      %2200 = vst.msk [vmem:[%s218] sm:$0x3f] %vm1259, %v2198
      %2201 = vst.msk [vmem:[#allocation6] sm:$0xff] %vm891, %v2182
      %2202 = vrot.lane.b32.xlu0 %v2179, 120
      %v2203 = vpop.permute.xlu0 %2202
      %2205 = vst.msk [vmem:[%s218] sm:$0x3f] %vm1265, %v2203
      %2206 = vst.msk [vmem:[#allocation6] sm:$0xff] %vm971, %v2182
      %2207 = vrot.lane.b32.xlu0 %v2179, 118
      %v2208 = vpop.permute.xlu0 %2207
      %2210 = vst.msk [vmem:[%s218] sm:$0x3f] %vm1271, %v2208
      %2211 = vst.msk [vmem:[#allocation6] sm:$0xff] %vm1051, %v2182
      %2212 = vrot.lane.b32.xlu0 %v2179, 116
      %v2213 = vpop.permute.xlu0 %2212
      %2215 = vst.msk [vmem:[%s218] sm:$0x3f] %vm1277, %v2213
      %2216 = vst.msk [vmem:[#allocation6] sm:$0xff] %vm1154, %v2182
      %2217 = vrot.lane.b32.xlu0 %v2179, 114
      %v2218 = vpop.permute.xlu0 %2217
      %2220 = vst.msk [vmem:[%s218] sm:$0x3f] %vm1283, %v2218
      %v2221 = vld [vmem:[#allocation6] sm:$0xff]
      %2223 = vrot.lane.b32.xlu0 %v2221, 127
      %v2224 = vpop.permute.xlu0 %2223
      %2226 = vrot.lane.b32.xlu0 %v2221, 126
      %v2227 = vpop.permute.xlu0 %2226
      %2229 = vrot.lane.b32.xlu0 %v2221, 118
      %v2230 = vpop.permute.xlu0 %2229
      %2232 = vrot.lane.b32.xlu0 %v2221, 117
      %v2233 = vpop.permute.xlu0 %2232
      %2235 = vrot.lane.b32.xlu0 %v2221, 116
      %v2236 = vpop.permute.xlu0 %2235
      %2238 = vrot.lane.b32.xlu0 %v2221, 108
      %v2239 = vpop.permute.xlu0 %2238
      %2241 = vrot.lane.b32.xlu0 %v2221, 107
      %v2242 = vpop.permute.xlu0 %2241
      %2244 = vrot.lane.b32.xlu0 %v2221, 106
      %v2245 = vpop.permute.xlu0 %2244
      %v2247 = vpack.c.bf16 %v2224, %v2221
      %v2248 = vpack.c.bf16 %v2230, %v2227
      %v2249 = vpack.c.bf16 %v2236, %v2233
      %v2250 = vpack.c.bf16 %v2242, %v2239
      %v2251 = vpack.c.bf16 %v2245, %v2245
      %s2252 = scalar_lea.vmem %s1, 20
      %v2253 = vld [vmem:[%s2252] sm:$0xf]
      %v2255 = vsel %vm349, %v2253, 0
      %v2258 = vsel %vm353, %v2251, 0
      %2260 = vmatprep.subr.bf16.mxu0 0
      %2261 = vmatpush1.bf16.msra.mxu0 %v2247
      %2262 = vmatprep.subr.bf16.mxu0 0
      %2263 = vmatpush1.bf16.msra.mxu0 %v2248
      %2264 = vmatprep.subr.bf16.mxu0 0
      %2265 = vmatpush1.bf16.msra.mxu0 %v2249
      %2266 = vmatprep.subr.bf16.mxu0 0
      %2267 = vmatpush1.bf16.msra.mxu0 %v2250
      %2268 = vmatprep.subr.bf16.mxu0 0
      %2269 = vmatpush1.bf16.msra.mxu0 %v2258
      %2270 = vmatprep.subr.bf16.mxu0 0
      %2271 = vmatpush1.bf16.msra.mxu0 0
      %2272 = vmatprep.subr.bf16.mxu0 0
      %2273 = vmatpush1.bf16.msra.mxu0 0
      %2274 = vmatprep.subr.bf16.mxu0 0
      %2275 = vmatpush1.bf16.msra.mxu0 0
      %2276 = vmatprep.subr.bf16.mxu0 0
      %2277 = vmatpush1.bf16.msra.mxu0 0
      %2278 = vmatprep.subr.bf16.mxu0 0
      %2279 = vmatpush1.bf16.msra.mxu0 0
      %2280 = vmatprep.subr.bf16.mxu0 0
      %2281 = vmatpush1.bf16.msra.mxu0 0
      %2282 = vmatprep.subr.bf16.mxu0 0
      %2283 = vmatpush1.bf16.msra.mxu0 0
      %2284 = vmatprep.subr.bf16.mxu0 0
      %2285 = vmatpush1.bf16.msra.mxu0 0
      %2286 = vmatprep.subr.bf16.mxu0 0
      %2287 = vmatpush1.bf16.msra.mxu0 0
      %2288 = vmatprep.subr.bf16.mxu0 0
      %2289 = vmatpush1.bf16.msra.mxu0 0
      %2290 = vmatprep.subr.bf16.mxu0 0
      %2291 = vmatpush1.bf16.msra.mxu0 0
      %2292 = vmatprep.mubr.bf16.mxu0 0
      %2293 = vmatmul.mubr.bf16.gmra.mrb[0].mxu0 %v2255
      %v2294 = vpop.f32.mrb[0].mxu0
      %v2295 = vadd.f32 0.0, %v2294
      %v2296 = vpop.f32.mrb[0].mxu0
      %v2297 = vpop.f32.mrb[0].mxu0
      %v2298 = vpop.f32.mrb[0].mxu0
      %2299 = vdwg.mxu0
      %v2300 = vmax.f32 %v2295, 0.0
      %vm2301 = vcmask 64512
      %v2303 = vsel %vm2301, %v2300, 0
      %2305 = vmatprep.subr.mxu0 0.0
      %2306 = vmatpush1.msra.mxu0 %v1781
      %2307 = vmatprep.subr.mxu0 0.0
      %2308 = vmatpush1.msra.mxu0 0.0
      %2309 = vmatprep.subr.mxu0 0.0
      %2310 = vmatpush1.msra.mxu0 0.0
      %2311 = vmatprep.subr.mxu0 0.0
      %2312 = vmatpush1.msra.mxu0 0.0
      %2313 = vmatprep.subr.mxu0 0.0
      %2314 = vmatpush1.msra.mxu0 0.0
      %2315 = vmatprep.subr.mxu0 0.0
      %2316 = vmatpush1.msra.mxu0 0.0
      %2317 = vmatprep.subr.mxu0 0.0
      %2318 = vmatpush1.msra.mxu0 0.0
      %2319 = vmatprep.subr.mxu0 0.0
      %2320 = vmatpush1.msra.mxu0 0.0
      %2321 = vmatprep.subr.mxu0 0.0
      %2322 = vmatpush1.msra.mxu0 0.0
      %2323 = vmatprep.subr.mxu0 0.0
      %2324 = vmatpush1.msra.mxu0 0.0
      %2325 = vmatprep.subr.mxu0 0.0
      %2326 = vmatpush1.msra.mxu0 0.0
      %2327 = vmatprep.subr.mxu0 0.0
      %2328 = vmatpush1.msra.mxu0 0.0
      %2329 = vmatprep.subr.mxu0 0.0
      %2330 = vmatpush1.msra.mxu0 0.0
      %2331 = vmatprep.subr.mxu0 0.0
      %2332 = vmatpush1.msra.mxu0 0.0
      %2333 = vmatprep.subr.mxu0 0.0
      %2334 = vmatpush1.msra.mxu0 0.0
      %2335 = vmatprep.subr.mxu0 0.0
      %2336 = vmatpush1.msra.mxu0 0.0
      %2337 = vmatprep.subr.mxu0 0.0
      %2338 = vmatpush1.msra.mxu0 0.0
      %2339 = vmatprep.subr.mxu0 0.0
      %2340 = vmatpush1.msra.mxu0 0.0
      %2341 = vmatprep.subr.mxu0 0.0
      %2342 = vmatpush1.msra.mxu0 0.0
      %2343 = vmatprep.subr.mxu0 0.0
      %2344 = vmatpush1.msra.mxu0 0.0
      %2345 = vmatprep.subr.mxu0 0.0
      %2346 = vmatpush1.msra.mxu0 0.0
      %2347 = vmatprep.subr.mxu0 0.0
      %2348 = vmatpush1.msra.mxu0 0.0
      %2349 = vmatprep.subr.mxu0 0.0
      %2350 = vmatpush1.msra.mxu0 0.0
      %2351 = vmatprep.subr.mxu0 0.0
      %2352 = vmatpush1.msra.mxu0 0.0
      %2353 = vmatprep.subr.mxu0 0.0
      %2354 = vmatpush1.msra.mxu0 0.0
      %2355 = vmatprep.subr.mxu0 0.0
      %2356 = vmatpush1.msra.mxu0 0.0
      %2357 = vmatprep.subr.mxu0 0.0
      %2358 = vmatpush1.msra.mxu0 0.0
      %2359 = vmatprep.subr.mxu0 0.0
      %2360 = vmatpush1.msra.mxu0 0.0
      %2361 = vmatprep.subr.mxu0 0.0
      %2362 = vmatpush1.msra.mxu0 0.0
      %2363 = vmatprep.subr.mxu0 0.0
      %2364 = vmatpush1.msra.mxu0 0.0
      %2365 = vmatprep.subr.mxu0 0.0
      %2366 = vmatpush1.msra.mxu0 0.0
      %2367 = vmatprep.subr.mxu0 0.0
      %2368 = vmatpush1.msra.mxu0 0.0
      %2369 = vmatprep.mubr.f32.mxu0 0.0
      %2370 = vmatmul.mubr.f32.gmra.mrb[0].mxu0 %v2303
      %v2371 = vpop.f32.mrb[0].mxu0
      %v2372 = vadd.f32 0.0, %v2371
      %v2373 = vpop.f32.mrb[0].mxu0
      %2374 = vdwg.mxu0
      %2376 = vrot.lane.b32.xlu0 %v2372, 19
      %v2377 = vpop.permute.xlu0 %2376
      %vm2379 = vcmask 285848
      %2380 = vst.msk [vmem:[#allocation7] sm:$0xff] %vm2379, %v2377
      %2381 = vrot.lane.b32.xlu0 %v2300, 118
      %v2382 = vpop.permute.xlu0 %2381
      %v2383 = vsel %vm2301, %v2382, 0
      %2385 = vmatprep.subr.mxu0 0.0
      %2386 = vmatpush1.msra.mxu0 %v1781
      %2387 = vmatprep.subr.mxu0 0.0
      %2388 = vmatpush1.msra.mxu0 0.0
      %2389 = vmatprep.subr.mxu0 0.0
      %2390 = vmatpush1.msra.mxu0 0.0
      %2391 = vmatprep.subr.mxu0 0.0
      %2392 = vmatpush1.msra.mxu0 0.0
      %2393 = vmatprep.subr.mxu0 0.0
      %2394 = vmatpush1.msra.mxu0 0.0
      %2395 = vmatprep.subr.mxu0 0.0
      %2396 = vmatpush1.msra.mxu0 0.0
      %2397 = vmatprep.subr.mxu0 0.0
      %2398 = vmatpush1.msra.mxu0 0.0
      %2399 = vmatprep.subr.mxu0 0.0
      %2400 = vmatpush1.msra.mxu0 0.0
      %2401 = vmatprep.subr.mxu0 0.0
      %2402 = vmatpush1.msra.mxu0 0.0
      %2403 = vmatprep.subr.mxu0 0.0
      %2404 = vmatpush1.msra.mxu0 0.0
      %2405 = vmatprep.subr.mxu0 0.0
      %2406 = vmatpush1.msra.mxu0 0.0
      %2407 = vmatprep.subr.mxu0 0.0
      %2408 = vmatpush1.msra.mxu0 0.0
      %2409 = vmatprep.subr.mxu0 0.0
      %2410 = vmatpush1.msra.mxu0 0.0
      %2411 = vmatprep.subr.mxu0 0.0
      %2412 = vmatpush1.msra.mxu0 0.0
      %2413 = vmatprep.subr.mxu0 0.0
      %2414 = vmatpush1.msra.mxu0 0.0
      %2415 = vmatprep.subr.mxu0 0.0
      %2416 = vmatpush1.msra.mxu0 0.0
      %2417 = vmatprep.subr.mxu0 0.0
      %2418 = vmatpush1.msra.mxu0 0.0
      %2419 = vmatprep.subr.mxu0 0.0
      %2420 = vmatpush1.msra.mxu0 0.0
      %2421 = vmatprep.subr.mxu0 0.0
      %2422 = vmatpush1.msra.mxu0 0.0
      %2423 = vmatprep.subr.mxu0 0.0
      %2424 = vmatpush1.msra.mxu0 0.0
      %2425 = vmatprep.subr.mxu0 0.0
      %2426 = vmatpush1.msra.mxu0 0.0
      %2427 = vmatprep.subr.mxu0 0.0
      %2428 = vmatpush1.msra.mxu0 0.0
      %2429 = vmatprep.subr.mxu0 0.0
      %2430 = vmatpush1.msra.mxu0 0.0
      %2431 = vmatprep.subr.mxu0 0.0
      %2432 = vmatpush1.msra.mxu0 0.0
      %2433 = vmatprep.subr.mxu0 0.0
      %2434 = vmatpush1.msra.mxu0 0.0
      %2435 = vmatprep.subr.mxu0 0.0
      %2436 = vmatpush1.msra.mxu0 0.0
      %2437 = vmatprep.subr.mxu0 0.0
      %2438 = vmatpush1.msra.mxu0 0.0
      %2439 = vmatprep.subr.mxu0 0.0
      %2440 = vmatpush1.msra.mxu0 0.0
      %2441 = vmatprep.subr.mxu0 0.0
      %2442 = vmatpush1.msra.mxu0 0.0
      %2443 = vmatprep.subr.mxu0 0.0
      %2444 = vmatpush1.msra.mxu0 0.0
      %2445 = vmatprep.subr.mxu0 0.0
      %2446 = vmatpush1.msra.mxu0 0.0
      %2447 = vmatprep.subr.mxu0 0.0
      %2448 = vmatpush1.msra.mxu0 0.0
      %2449 = vmatprep.mubr.f32.mxu0 0.0
      %2450 = vmatmul.mubr.f32.gmra.mrb[0].mxu0 %v2383
      %v2451 = vpop.f32.mrb[0].mxu0
      %v2452 = vadd.f32 0.0, %v2451
      %v2453 = vpop.f32.mrb[0].mxu0
      %2454 = vdwg.mxu0
      %2456 = vrot.lane.b32.xlu0 %v2452, 55
      %v2457 = vpop.permute.xlu0 %2456
      %vm2459 = vcmask 581048
      %2460 = vst.msk [vmem:[#allocation7] sm:$0xff] %vm2459, %v2457
      %2461 = vrot.lane.b32.xlu0 %v2300, 108
      %v2462 = vpop.permute.xlu0 %2461
      %v2463 = vsel %vm2301, %v2462, 0
      %2465 = vmatprep.subr.mxu0 0.0
      %2466 = vmatpush1.msra.mxu0 %v1781
      %2467 = vmatprep.subr.mxu0 0.0
      %2468 = vmatpush1.msra.mxu0 0.0
      %2469 = vmatprep.subr.mxu0 0.0
      %2470 = vmatpush1.msra.mxu0 0.0
      %2471 = vmatprep.subr.mxu0 0.0
      %2472 = vmatpush1.msra.mxu0 0.0
      %2473 = vmatprep.subr.mxu0 0.0
      %2474 = vmatpush1.msra.mxu0 0.0
      %2475 = vmatprep.subr.mxu0 0.0
      %2476 = vmatpush1.msra.mxu0 0.0
      %2477 = vmatprep.subr.mxu0 0.0
      %2478 = vmatpush1.msra.mxu0 0.0
      %2479 = vmatprep.subr.mxu0 0.0
      %2480 = vmatpush1.msra.mxu0 0.0
      %2481 = vmatprep.subr.mxu0 0.0
      %2482 = vmatpush1.msra.mxu0 0.0
      %2483 = vmatprep.subr.mxu0 0.0
      %2484 = vmatpush1.msra.mxu0 0.0
      %2485 = vmatprep.subr.mxu0 0.0
      %2486 = vmatpush1.msra.mxu0 0.0
      %2487 = vmatprep.subr.mxu0 0.0
      %2488 = vmatpush1.msra.mxu0 0.0
      %2489 = vmatprep.subr.mxu0 0.0
      %2490 = vmatpush1.msra.mxu0 0.0
      %2491 = vmatprep.subr.mxu0 0.0
      %2492 = vmatpush1.msra.mxu0 0.0
      %2493 = vmatprep.subr.mxu0 0.0
      %2494 = vmatpush1.msra.mxu0 0.0
      %2495 = vmatprep.subr.mxu0 0.0
      %2496 = vmatpush1.msra.mxu0 0.0
      %2497 = vmatprep.subr.mxu0 0.0
      %2498 = vmatpush1.msra.mxu0 0.0
      %2499 = vmatprep.subr.mxu0 0.0
      %2500 = vmatpush1.msra.mxu0 0.0
      %2501 = vmatprep.subr.mxu0 0.0
      %2502 = vmatpush1.msra.mxu0 0.0
      %2503 = vmatprep.subr.mxu0 0.0
      %2504 = vmatpush1.msra.mxu0 0.0
      %2505 = vmatprep.subr.mxu0 0.0
      %2506 = vmatpush1.msra.mxu0 0.0
      %2507 = vmatprep.subr.mxu0 0.0
      %2508 = vmatpush1.msra.mxu0 0.0
      %2509 = vmatprep.subr.mxu0 0.0
      %2510 = vmatpush1.msra.mxu0 0.0
      %2511 = vmatprep.subr.mxu0 0.0
      %2512 = vmatpush1.msra.mxu0 0.0
      %2513 = vmatprep.subr.mxu0 0.0
      %2514 = vmatpush1.msra.mxu0 0.0
      %2515 = vmatprep.subr.mxu0 0.0
      %2516 = vmatpush1.msra.mxu0 0.0
      %2517 = vmatprep.subr.mxu0 0.0
      %2518 = vmatpush1.msra.mxu0 0.0
      %2519 = vmatprep.subr.mxu0 0.0
      %2520 = vmatpush1.msra.mxu0 0.0
      %2521 = vmatprep.subr.mxu0 0.0
      %2522 = vmatpush1.msra.mxu0 0.0
      %2523 = vmatprep.subr.mxu0 0.0
      %2524 = vmatpush1.msra.mxu0 0.0
      %2525 = vmatprep.subr.mxu0 0.0
      %2526 = vmatpush1.msra.mxu0 0.0
      %2527 = vmatprep.subr.mxu0 0.0
      %2528 = vmatpush1.msra.mxu0 0.0
      %2529 = vmatprep.mubr.f32.mxu0 0.0
      %2530 = vmatmul.mubr.f32.gmra.mrb[0].mxu0 %v2463
      %v2531 = vpop.f32.mrb[0].mxu0
      %v2532 = vadd.f32 0.0, %v2531
      %v2533 = vpop.f32.mrb[0].mxu0
      %2534 = vdwg.mxu0
      %2536 = vrot.lane.b32.xlu0 %v2532, 91
      %v2537 = vpop.permute.xlu0 %2536
      %vm2539 = vcmask 876248
      %2540 = vst.msk [vmem:[#allocation7] sm:$0xff] %vm2539, %v2537
      %2541 = vrot.lane.b32.xlu0 %v2300, 98
      %v2542 = vpop.permute.xlu0 %2541
      %v2543 = vsel %vm2301, %v2542, 0
      %2545 = vmatprep.subr.mxu0 0.0
      %2546 = vmatpush1.msra.mxu0 %v1781
      %2547 = vmatprep.subr.mxu0 0.0
      %2548 = vmatpush1.msra.mxu0 0.0
      %2549 = vmatprep.subr.mxu0 0.0
      %2550 = vmatpush1.msra.mxu0 0.0
      %2551 = vmatprep.subr.mxu0 0.0
      %2552 = vmatpush1.msra.mxu0 0.0
      %2553 = vmatprep.subr.mxu0 0.0
      %2554 = vmatpush1.msra.mxu0 0.0
      %2555 = vmatprep.subr.mxu0 0.0
      %2556 = vmatpush1.msra.mxu0 0.0
      %2557 = vmatprep.subr.mxu0 0.0
      %2558 = vmatpush1.msra.mxu0 0.0
      %2559 = vmatprep.subr.mxu0 0.0
      %2560 = vmatpush1.msra.mxu0 0.0
      %2561 = vmatprep.subr.mxu0 0.0
      %2562 = vmatpush1.msra.mxu0 0.0
      %2563 = vmatprep.subr.mxu0 0.0
      %2564 = vmatpush1.msra.mxu0 0.0
      %2565 = vmatprep.subr.mxu0 0.0
      %2566 = vmatpush1.msra.mxu0 0.0
      %2567 = vmatprep.subr.mxu0 0.0
      %2568 = vmatpush1.msra.mxu0 0.0
      %2569 = vmatprep.subr.mxu0 0.0
      %2570 = vmatpush1.msra.mxu0 0.0
      %2571 = vmatprep.subr.mxu0 0.0
      %2572 = vmatpush1.msra.mxu0 0.0
      %2573 = vmatprep.subr.mxu0 0.0
      %2574 = vmatpush1.msra.mxu0 0.0
      %2575 = vmatprep.subr.mxu0 0.0
      %2576 = vmatpush1.msra.mxu0 0.0
      %2577 = vmatprep.subr.mxu0 0.0
      %2578 = vmatpush1.msra.mxu0 0.0
      %2579 = vmatprep.subr.mxu0 0.0
      %2580 = vmatpush1.msra.mxu0 0.0
      %2581 = vmatprep.subr.mxu0 0.0
      %2582 = vmatpush1.msra.mxu0 0.0
      %2583 = vmatprep.subr.mxu0 0.0
      %2584 = vmatpush1.msra.mxu0 0.0
      %2585 = vmatprep.subr.mxu0 0.0
      %2586 = vmatpush1.msra.mxu0 0.0
      %2587 = vmatprep.subr.mxu0 0.0
      %2588 = vmatpush1.msra.mxu0 0.0
      %2589 = vmatprep.subr.mxu0 0.0
      %2590 = vmatpush1.msra.mxu0 0.0
      %2591 = vmatprep.subr.mxu0 0.0
      %2592 = vmatpush1.msra.mxu0 0.0
      %2593 = vmatprep.subr.mxu0 0.0
      %2594 = vmatpush1.msra.mxu0 0.0
      %2595 = vmatprep.subr.mxu0 0.0
      %2596 = vmatpush1.msra.mxu0 0.0
      %2597 = vmatprep.subr.mxu0 0.0
      %2598 = vmatpush1.msra.mxu0 0.0
      %2599 = vmatprep.subr.mxu0 0.0
      %2600 = vmatpush1.msra.mxu0 0.0
      %2601 = vmatprep.subr.mxu0 0.0
      %2602 = vmatpush1.msra.mxu0 0.0
      %2603 = vmatprep.subr.mxu0 0.0
      %2604 = vmatpush1.msra.mxu0 0.0
      %2605 = vmatprep.subr.mxu0 0.0
      %2606 = vmatpush1.msra.mxu0 0.0
      %2607 = vmatprep.subr.mxu0 0.0
      %2608 = vmatpush1.msra.mxu0 0.0
      %2609 = vmatprep.mubr.f32.mxu0 0.0
      %2610 = vmatmul.mubr.f32.gmra.mrb[0].mxu0 %v2543
      %v2611 = vpop.f32.mrb[0].mxu0
      %v2612 = vadd.f32 0.0, %v2611
      %v2613 = vpop.f32.mrb[0].mxu0
      %2614 = vdwg.mxu0
      %2616 = vrot.lane.b32.xlu0 %v2612, 127
      %v2617 = vpop.permute.xlu0 %2616
      %vm2619 = vcmask 1048568
      %2620 = vst.msk [vmem:[#allocation7] sm:$0xff] %vm2619, %v2617
      %2621 = vst.msk [vmem:[#allocation7 + $0x8] sm:$0xff] %vm469, %v2617
      %2622 = vrot.lane.b32.xlu0 %v2300, 88
      %v2623 = vpop.permute.xlu0 %2622
      %v2624 = vsel %vm2301, %v2623, 0
      %2626 = vmatprep.subr.mxu0 0.0
      %2627 = vmatpush1.msra.mxu0 %v1781
      %2628 = vmatprep.subr.mxu0 0.0
      %2629 = vmatpush1.msra.mxu0 0.0
      %2630 = vmatprep.subr.mxu0 0.0
      %2631 = vmatpush1.msra.mxu0 0.0
      %2632 = vmatprep.subr.mxu0 0.0
      %2633 = vmatpush1.msra.mxu0 0.0
      %2634 = vmatprep.subr.mxu0 0.0
      %2635 = vmatpush1.msra.mxu0 0.0
      %2636 = vmatprep.subr.mxu0 0.0
      %2637 = vmatpush1.msra.mxu0 0.0
      %2638 = vmatprep.subr.mxu0 0.0
      %2639 = vmatpush1.msra.mxu0 0.0
      %2640 = vmatprep.subr.mxu0 0.0
      %2641 = vmatpush1.msra.mxu0 0.0
      %2642 = vmatprep.subr.mxu0 0.0
      %2643 = vmatpush1.msra.mxu0 0.0
      %2644 = vmatprep.subr.mxu0 0.0
      %2645 = vmatpush1.msra.mxu0 0.0
      %2646 = vmatprep.subr.mxu0 0.0
      %2647 = vmatpush1.msra.mxu0 0.0
      %2648 = vmatprep.subr.mxu0 0.0
      %2649 = vmatpush1.msra.mxu0 0.0
      %2650 = vmatprep.subr.mxu0 0.0
      %2651 = vmatpush1.msra.mxu0 0.0
      %2652 = vmatprep.subr.mxu0 0.0
      %2653 = vmatpush1.msra.mxu0 0.0
      %2654 = vmatprep.subr.mxu0 0.0
      %2655 = vmatpush1.msra.mxu0 0.0
      %2656 = vmatprep.subr.mxu0 0.0
      %2657 = vmatpush1.msra.mxu0 0.0
      %2658 = vmatprep.subr.mxu0 0.0
      %2659 = vmatpush1.msra.mxu0 0.0
      %2660 = vmatprep.subr.mxu0 0.0
      %2661 = vmatpush1.msra.mxu0 0.0
      %2662 = vmatprep.subr.mxu0 0.0
      %2663 = vmatpush1.msra.mxu0 0.0
      %2664 = vmatprep.subr.mxu0 0.0
      %2665 = vmatpush1.msra.mxu0 0.0
      %2666 = vmatprep.subr.mxu0 0.0
      %2667 = vmatpush1.msra.mxu0 0.0
      %2668 = vmatprep.subr.mxu0 0.0
      %2669 = vmatpush1.msra.mxu0 0.0
      %2670 = vmatprep.subr.mxu0 0.0
      %2671 = vmatpush1.msra.mxu0 0.0
      %2672 = vmatprep.subr.mxu0 0.0
      %2673 = vmatpush1.msra.mxu0 0.0
      %2674 = vmatprep.subr.mxu0 0.0
      %2675 = vmatpush1.msra.mxu0 0.0
      %2676 = vmatprep.subr.mxu0 0.0
      %2677 = vmatpush1.msra.mxu0 0.0
      %2678 = vmatprep.subr.mxu0 0.0
      %2679 = vmatpush1.msra.mxu0 0.0
      %2680 = vmatprep.subr.mxu0 0.0
      %2681 = vmatpush1.msra.mxu0 0.0
      %2682 = vmatprep.subr.mxu0 0.0
      %2683 = vmatpush1.msra.mxu0 0.0
      %2684 = vmatprep.subr.mxu0 0.0
      %2685 = vmatpush1.msra.mxu0 0.0
      %2686 = vmatprep.subr.mxu0 0.0
      %2687 = vmatpush1.msra.mxu0 0.0
      %2688 = vmatprep.subr.mxu0 0.0
      %2689 = vmatpush1.msra.mxu0 0.0
      %2690 = vmatprep.mubr.f32.mxu0 0.0
      %2691 = vmatmul.mubr.f32.gmra.mrb[0].mxu0 %v2624
      %v2692 = vpop.f32.mrb[0].mxu0
      %v2693 = vadd.f32 0.0, %v2692
      %v2694 = vpop.f32.mrb[0].mxu0
      %2695 = vdwg.mxu0
      %2697 = vrot.lane.b32.xlu0 %v2693, 35
      %v2698 = vpop.permute.xlu0 %2697
      %vm2700 = vcmask 417048
      %2701 = vst.msk [vmem:[#allocation7 + $0x8] sm:$0xff] %vm2700, %v2698
      %2702 = vrot.lane.b32.xlu0 %v2300, 78
      %v2703 = vpop.permute.xlu0 %2702
      %v2704 = vsel %vm2301, %v2703, 0
      %2706 = vmatprep.subr.mxu0 0.0
      %2707 = vmatpush1.msra.mxu0 %v1781
      %2708 = vmatprep.subr.mxu0 0.0
      %2709 = vmatpush1.msra.mxu0 0.0
      %2710 = vmatprep.subr.mxu0 0.0
      %2711 = vmatpush1.msra.mxu0 0.0
      %2712 = vmatprep.subr.mxu0 0.0
      %2713 = vmatpush1.msra.mxu0 0.0
      %2714 = vmatprep.subr.mxu0 0.0
      %2715 = vmatpush1.msra.mxu0 0.0
      %2716 = vmatprep.subr.mxu0 0.0
      %2717 = vmatpush1.msra.mxu0 0.0
      %2718 = vmatprep.subr.mxu0 0.0
      %2719 = vmatpush1.msra.mxu0 0.0
      %2720 = vmatprep.subr.mxu0 0.0
      %2721 = vmatpush1.msra.mxu0 0.0
      %2722 = vmatprep.subr.mxu0 0.0
      %2723 = vmatpush1.msra.mxu0 0.0
      %2724 = vmatprep.subr.mxu0 0.0
      %2725 = vmatpush1.msra.mxu0 0.0
      %2726 = vmatprep.subr.mxu0 0.0
      %2727 = vmatpush1.msra.mxu0 0.0
      %2728 = vmatprep.subr.mxu0 0.0
      %2729 = vmatpush1.msra.mxu0 0.0
      %2730 = vmatprep.subr.mxu0 0.0
      %2731 = vmatpush1.msra.mxu0 0.0
      %2732 = vmatprep.subr.mxu0 0.0
      %2733 = vmatpush1.msra.mxu0 0.0
      %2734 = vmatprep.subr.mxu0 0.0
      %2735 = vmatpush1.msra.mxu0 0.0
      %2736 = vmatprep.subr.mxu0 0.0
      %2737 = vmatpush1.msra.mxu0 0.0
      %2738 = vmatprep.subr.mxu0 0.0
      %2739 = vmatpush1.msra.mxu0 0.0
      %2740 = vmatprep.subr.mxu0 0.0
      %2741 = vmatpush1.msra.mxu0 0.0
      %2742 = vmatprep.subr.mxu0 0.0
      %2743 = vmatpush1.msra.mxu0 0.0
      %2744 = vmatprep.subr.mxu0 0.0
      %2745 = vmatpush1.msra.mxu0 0.0
      %2746 = vmatprep.subr.mxu0 0.0
      %2747 = vmatpush1.msra.mxu0 0.0
      %2748 = vmatprep.subr.mxu0 0.0
      %2749 = vmatpush1.msra.mxu0 0.0
      %2750 = vmatprep.subr.mxu0 0.0
      %2751 = vmatpush1.msra.mxu0 0.0
      %2752 = vmatprep.subr.mxu0 0.0
      %2753 = vmatpush1.msra.mxu0 0.0
      %2754 = vmatprep.subr.mxu0 0.0
      %2755 = vmatpush1.msra.mxu0 0.0
      %2756 = vmatprep.subr.mxu0 0.0
      %2757 = vmatpush1.msra.mxu0 0.0
      %2758 = vmatprep.subr.mxu0 0.0
      %2759 = vmatpush1.msra.mxu0 0.0
      %2760 = vmatprep.subr.mxu0 0.0
      %2761 = vmatpush1.msra.mxu0 0.0
      %2762 = vmatprep.subr.mxu0 0.0
      %2763 = vmatpush1.msra.mxu0 0.0
      %2764 = vmatprep.subr.mxu0 0.0
      %2765 = vmatpush1.msra.mxu0 0.0
      %2766 = vmatprep.subr.mxu0 0.0
      %2767 = vmatpush1.msra.mxu0 0.0
      %2768 = vmatprep.subr.mxu0 0.0
      %2769 = vmatpush1.msra.mxu0 0.0
      %2770 = vmatprep.mubr.f32.mxu0 0.0
      %2771 = vmatmul.mubr.f32.gmra.mrb[0].mxu0 %v2704
      %v2772 = vpop.f32.mrb[0].mxu0
      %v2773 = vadd.f32 0.0, %v2772
      %v2774 = vpop.f32.mrb[0].mxu0
      %2775 = vdwg.mxu0
      %2777 = vrot.lane.b32.xlu0 %v2773, 71
      %v2778 = vpop.permute.xlu0 %2777
      %vm2780 = vcmask 712248
      %2781 = vst.msk [vmem:[#allocation7 + $0x8] sm:$0xff] %vm2780, %v2778
      %2782 = vrot.lane.b32.xlu0 %v2300, 68
      %v2783 = vpop.permute.xlu0 %2782
      %v2784 = vsel %vm2301, %v2783, 0
      %2786 = vmatprep.subr.mxu0 0.0
      %2787 = vmatpush1.msra.mxu0 %v1781
      %2788 = vmatprep.subr.mxu0 0.0
      %2789 = vmatpush1.msra.mxu0 0.0
      %2790 = vmatprep.subr.mxu0 0.0
      %2791 = vmatpush1.msra.mxu0 0.0
      %2792 = vmatprep.subr.mxu0 0.0
      %2793 = vmatpush1.msra.mxu0 0.0
      %2794 = vmatprep.subr.mxu0 0.0
      %2795 = vmatpush1.msra.mxu0 0.0
      %2796 = vmatprep.subr.mxu0 0.0
      %2797 = vmatpush1.msra.mxu0 0.0
      %2798 = vmatprep.subr.mxu0 0.0
      %2799 = vmatpush1.msra.mxu0 0.0
      %2800 = vmatprep.subr.mxu0 0.0
      %2801 = vmatpush1.msra.mxu0 0.0
      %2802 = vmatprep.subr.mxu0 0.0
      %2803 = vmatpush1.msra.mxu0 0.0
      %2804 = vmatprep.subr.mxu0 0.0
      %2805 = vmatpush1.msra.mxu0 0.0
      %2806 = vmatprep.subr.mxu0 0.0
      %2807 = vmatpush1.msra.mxu0 0.0
      %2808 = vmatprep.subr.mxu0 0.0
      %2809 = vmatpush1.msra.mxu0 0.0
      %2810 = vmatprep.subr.mxu0 0.0
      %2811 = vmatpush1.msra.mxu0 0.0
      %2812 = vmatprep.subr.mxu0 0.0
      %2813 = vmatpush1.msra.mxu0 0.0
      %2814 = vmatprep.subr.mxu0 0.0
      %2815 = vmatpush1.msra.mxu0 0.0
      %2816 = vmatprep.subr.mxu0 0.0
      %2817 = vmatpush1.msra.mxu0 0.0
      %2818 = vmatprep.subr.mxu0 0.0
      %2819 = vmatpush1.msra.mxu0 0.0
      %2820 = vmatprep.subr.mxu0 0.0
      %2821 = vmatpush1.msra.mxu0 0.0
      %2822 = vmatprep.subr.mxu0 0.0
      %2823 = vmatpush1.msra.mxu0 0.0
      %2824 = vmatprep.subr.mxu0 0.0
      %2825 = vmatpush1.msra.mxu0 0.0
      %2826 = vmatprep.subr.mxu0 0.0
      %2827 = vmatpush1.msra.mxu0 0.0
      %2828 = vmatprep.subr.mxu0 0.0
      %2829 = vmatpush1.msra.mxu0 0.0
      %2830 = vmatprep.subr.mxu0 0.0
      %2831 = vmatpush1.msra.mxu0 0.0
      %2832 = vmatprep.subr.mxu0 0.0
      %2833 = vmatpush1.msra.mxu0 0.0
      %2834 = vmatprep.subr.mxu0 0.0
      %2835 = vmatpush1.msra.mxu0 0.0
      %2836 = vmatprep.subr.mxu0 0.0
      %2837 = vmatpush1.msra.mxu0 0.0
      %2838 = vmatprep.subr.mxu0 0.0
      %2839 = vmatpush1.msra.mxu0 0.0
      %2840 = vmatprep.subr.mxu0 0.0
      %2841 = vmatpush1.msra.mxu0 0.0
      %2842 = vmatprep.subr.mxu0 0.0
      %2843 = vmatpush1.msra.mxu0 0.0
      %2844 = vmatprep.subr.mxu0 0.0
      %2845 = vmatpush1.msra.mxu0 0.0
      %2846 = vmatprep.subr.mxu0 0.0
      %2847 = vmatpush1.msra.mxu0 0.0
      %2848 = vmatprep.subr.mxu0 0.0
      %2849 = vmatpush1.msra.mxu0 0.0
      %2850 = vmatprep.mubr.f32.mxu0 0.0
      %2851 = vmatmul.mubr.f32.gmra.mrb[0].mxu0 %v2784
      %v2852 = vpop.f32.mrb[0].mxu0
      %v2853 = vadd.f32 0.0, %v2852
      %v2854 = vpop.f32.mrb[0].mxu0
      %2855 = vdwg.mxu0
      %2857 = vrot.lane.b32.xlu0 %v2853, 107
      %v2858 = vpop.permute.xlu0 %2857
      %vm2860 = vcmask 1007448
      %2861 = vst.msk [vmem:[#allocation7 + $0x8] sm:$0xff] %vm2860, %v2858
      %2862 = vrot.lane.b32.xlu0 %v2300, 58
      %v2863 = vpop.permute.xlu0 %2862
      %v2864 = vsel %vm2301, %v2863, 0
      %2866 = vmatprep.subr.mxu0 0.0
      %2867 = vmatpush1.msra.mxu0 %v1781
      %2868 = vmatprep.subr.mxu0 0.0
      %2869 = vmatpush1.msra.mxu0 0.0
      %2870 = vmatprep.subr.mxu0 0.0
      %2871 = vmatpush1.msra.mxu0 0.0
      %2872 = vmatprep.subr.mxu0 0.0
      %2873 = vmatpush1.msra.mxu0 0.0
      %2874 = vmatprep.subr.mxu0 0.0
      %2875 = vmatpush1.msra.mxu0 0.0
      %2876 = vmatprep.subr.mxu0 0.0
      %2877 = vmatpush1.msra.mxu0 0.0
      %2878 = vmatprep.subr.mxu0 0.0
      %2879 = vmatpush1.msra.mxu0 0.0
      %2880 = vmatprep.subr.mxu0 0.0
      %2881 = vmatpush1.msra.mxu0 0.0
      %2882 = vmatprep.subr.mxu0 0.0
      %2883 = vmatpush1.msra.mxu0 0.0
      %2884 = vmatprep.subr.mxu0 0.0
      %2885 = vmatpush1.msra.mxu0 0.0
      %2886 = vmatprep.subr.mxu0 0.0
      %2887 = vmatpush1.msra.mxu0 0.0
      %2888 = vmatprep.subr.mxu0 0.0
      %2889 = vmatpush1.msra.mxu0 0.0
      %2890 = vmatprep.subr.mxu0 0.0
      %2891 = vmatpush1.msra.mxu0 0.0
      %2892 = vmatprep.subr.mxu0 0.0
      %2893 = vmatpush1.msra.mxu0 0.0
      %2894 = vmatprep.subr.mxu0 0.0
      %2895 = vmatpush1.msra.mxu0 0.0
      %2896 = vmatprep.subr.mxu0 0.0
      %2897 = vmatpush1.msra.mxu0 0.0
      %2898 = vmatprep.subr.mxu0 0.0
      %2899 = vmatpush1.msra.mxu0 0.0
      %2900 = vmatprep.subr.mxu0 0.0
      %2901 = vmatpush1.msra.mxu0 0.0
      %2902 = vmatprep.subr.mxu0 0.0
      %2903 = vmatpush1.msra.mxu0 0.0
      %2904 = vmatprep.subr.mxu0 0.0
      %2905 = vmatpush1.msra.mxu0 0.0
      %2906 = vmatprep.subr.mxu0 0.0
      %2907 = vmatpush1.msra.mxu0 0.0
      %2908 = vmatprep.subr.mxu0 0.0
      %2909 = vmatpush1.msra.mxu0 0.0
      %2910 = vmatprep.subr.mxu0 0.0
      %2911 = vmatpush1.msra.mxu0 0.0
      %2912 = vmatprep.subr.mxu0 0.0
      %2913 = vmatpush1.msra.mxu0 0.0
      %2914 = vmatprep.subr.mxu0 0.0
      %2915 = vmatpush1.msra.mxu0 0.0
      %2916 = vmatprep.subr.mxu0 0.0
      %2917 = vmatpush1.msra.mxu0 0.0
      %2918 = vmatprep.subr.mxu0 0.0
      %2919 = vmatpush1.msra.mxu0 0.0
      %2920 = vmatprep.subr.mxu0 0.0
      %2921 = vmatpush1.msra.mxu0 0.0
      %2922 = vmatprep.subr.mxu0 0.0
      %2923 = vmatpush1.msra.mxu0 0.0
      %2924 = vmatprep.subr.mxu0 0.0
      %2925 = vmatpush1.msra.mxu0 0.0
      %2926 = vmatprep.subr.mxu0 0.0
      %2927 = vmatpush1.msra.mxu0 0.0
      %2928 = vmatprep.subr.mxu0 0.0
      %2929 = vmatpush1.msra.mxu0 0.0
      %2930 = vmatprep.mubr.f32.mxu0 0.0
      %2931 = vmatmul.mubr.f32.gmra.mrb[0].mxu0 %v2864
      %v2932 = vpop.f32.mrb[0].mxu0
      %v2933 = vadd.f32 0.0, %v2932
      %v2934 = vpop.f32.mrb[0].mxu0
      %2935 = vdwg.mxu0
      %2937 = vrot.lane.b32.xlu0 %v2933, 15
      %v2938 = vpop.permute.xlu0 %2937
      %vm2940 = vcmask 253048
      %2941 = vst.msk [vmem:[#allocation7 + $0x10] sm:$0xff] %vm2940, %v2938
      %v2942 = vld [vmem:[#allocation7] sm:$0xff]
      %v2943 = vld [vmem:[#allocation7 + $0x8] sm:$0xff]
      %v2944 = vld [vmem:[#allocation7 + $0x10] sm:$0xff]
      %2948 = vrot.lane.b32.xlu0 %v2942, 127
      %v2949 = vpop.permute.xlu0 %2948
      %2950 = vrot.lane.b32.xlu0 %v2943, 127
      %v2951 = vpop.permute.xlu0 %2950
      %2952 = vrot.lane.b32.xlu0 %v2944, 127
      %v2953 = vpop.permute.xlu0 %2952
      %v2954 = vsel %vm243, %v2949, %v2951
      %v2955 = vsel %vm243, %v2951, %v2953
      %2959 = vrot.lane.b32.xlu0 %v2942, 126
      %v2960 = vpop.permute.xlu0 %2959
      %2961 = vrot.lane.b32.xlu0 %v2943, 126
      %v2962 = vpop.permute.xlu0 %2961
      %2963 = vrot.lane.b32.xlu0 %v2944, 126
      %v2964 = vpop.permute.xlu0 %2963
      %v2965 = vsel %vm255, %v2960, %v2962
      %v2966 = vsel %vm255, %v2962, %v2964
      %2970 = vrot.lane.b32.xlu0 %v2942, 110
      %v2971 = vpop.permute.xlu0 %2970
      %2972 = vrot.lane.b32.xlu0 %v2943, 110
      %v2973 = vpop.permute.xlu0 %2972
      %2974 = vrot.lane.b32.xlu0 %v2944, 110
      %v2975 = vpop.permute.xlu0 %2974
      %v2976 = vsel %vm267, %v2971, %v2973
      %v2977 = vsel %vm267, %v2973, %v2975
      %2981 = vrot.lane.b32.xlu0 %v2942, 109
      %v2982 = vpop.permute.xlu0 %2981
      %2983 = vrot.lane.b32.xlu0 %v2943, 109
      %v2984 = vpop.permute.xlu0 %2983
      %2985 = vrot.lane.b32.xlu0 %v2944, 109
      %v2986 = vpop.permute.xlu0 %2985
      %v2987 = vsel %vm279, %v2982, %v2984
      %v2988 = vsel %vm279, %v2984, %v2986
      %2992 = vrot.lane.b32.xlu0 %v2942, 108
      %v2993 = vpop.permute.xlu0 %2992
      %2994 = vrot.lane.b32.xlu0 %v2943, 108
      %v2995 = vpop.permute.xlu0 %2994
      %2996 = vrot.lane.b32.xlu0 %v2944, 108
      %v2997 = vpop.permute.xlu0 %2996
      %v2998 = vsel %vm291, %v2993, %v2995
      %v2999 = vsel %vm291, %v2995, %v2997
      %3003 = vrot.lane.b32.xlu0 %v2942, 92
      %v3004 = vpop.permute.xlu0 %3003
      %3005 = vrot.lane.b32.xlu0 %v2943, 92
      %v3006 = vpop.permute.xlu0 %3005
      %3007 = vrot.lane.b32.xlu0 %v2944, 92
      %v3008 = vpop.permute.xlu0 %3007
      %v3009 = vsel %vm303, %v3004, %v3006
      %v3010 = vsel %vm303, %v3006, %v3008
      %3014 = vrot.lane.b32.xlu0 %v2942, 91
      %v3015 = vpop.permute.xlu0 %3014
      %3016 = vrot.lane.b32.xlu0 %v2943, 91
      %v3017 = vpop.permute.xlu0 %3016
      %3018 = vrot.lane.b32.xlu0 %v2944, 91
      %v3019 = vpop.permute.xlu0 %3018
      %v3020 = vsel %vm315, %v3015, %v3017
      %v3021 = vsel %vm315, %v3017, %v3019
      %3025 = vrot.lane.b32.xlu0 %v2942, 90
      %v3026 = vpop.permute.xlu0 %3025
      %3027 = vrot.lane.b32.xlu0 %v2943, 90
      %v3028 = vpop.permute.xlu0 %3027
      %3029 = vrot.lane.b32.xlu0 %v2944, 90
      %v3030 = vpop.permute.xlu0 %3029
      %v3031 = vsel %vm327, %v3026, %v3028
      %v3032 = vsel %vm327, %v3028, %v3030
      %v3036 = vpack.c.bf16 %v2954, %v2942
      %v3037 = vpack.c.bf16 %v2955, %v2943
      %v3038 = vpack.c.bf16 %v2953, %v2944
      %v3039 = vpack.c.bf16 %v2976, %v2965
      %v3040 = vpack.c.bf16 %v2977, %v2966
      %v3041 = vpack.c.bf16 %v2975, %v2964
      %v3042 = vpack.c.bf16 %v2998, %v2987
      %v3043 = vpack.c.bf16 %v2999, %v2988
      %v3044 = vpack.c.bf16 %v2997, %v2986
      %v3045 = vpack.c.bf16 %v3020, %v3009
      %v3046 = vpack.c.bf16 %v3021, %v3010
      %v3047 = vpack.c.bf16 %v3019, %v3008
      %v3048 = vpack.c.bf16 %v3031, %v3031
      %v3049 = vpack.c.bf16 %v3032, %v3032
      %v3050 = vpack.c.bf16 %v3030, %v3030
      %s3051 = scalar_lea.vmem %s1, 24
      %v3052 = vld [vmem:[%s3051] sm:$0xf]
      %v3054 = vsel %vm349, %v3052, 0
      %v3057 = vsel %vm353, %v3048, 0
      %v3060 = vsel %vm353, %v3049, 0
      %v3063 = vsel %vm353, %v3050, 0
      %3065 = vmatprep.subr.bf16.mxu0 %v3037
      %3066 = vmatpush1.bf16.msra.mxu0 %v3036
      %3067 = vmatprep.subr.bf16.mxu0 %v3040
      %3068 = vmatpush1.bf16.msra.mxu0 %v3039
      %3069 = vmatprep.subr.bf16.mxu0 %v3043
      %3070 = vmatpush1.bf16.msra.mxu0 %v3042
      %3071 = vmatprep.subr.bf16.mxu0 %v3046
      %3072 = vmatpush1.bf16.msra.mxu0 %v3045
      %3073 = vmatprep.subr.bf16.mxu0 %v3060
      %3074 = vmatpush1.bf16.msra.mxu0 %v3057
      %3075 = vmatprep.subr.bf16.mxu0 0
      %3076 = vmatpush1.bf16.msra.mxu0 0
      %3077 = vmatprep.subr.bf16.mxu0 0
      %3078 = vmatpush1.bf16.msra.mxu0 0
      %3079 = vmatprep.subr.bf16.mxu0 0
      %3080 = vmatpush1.bf16.msra.mxu0 0
      %3081 = vmatprep.subr.bf16.mxu0 0
      %3082 = vmatpush1.bf16.msra.mxu0 0
      %3083 = vmatprep.subr.bf16.mxu0 0
      %3084 = vmatpush1.bf16.msra.mxu0 0
      %3085 = vmatprep.subr.bf16.mxu0 0
      %3086 = vmatpush1.bf16.msra.mxu0 0
      %3087 = vmatprep.subr.bf16.mxu0 0
      %3088 = vmatpush1.bf16.msra.mxu0 0
      %3089 = vmatprep.subr.bf16.mxu0 0
      %3090 = vmatpush1.bf16.msra.mxu0 0
      %3091 = vmatprep.subr.bf16.mxu0 0
      %3092 = vmatpush1.bf16.msra.mxu0 0
      %3093 = vmatprep.subr.bf16.mxu0 0
      %3094 = vmatpush1.bf16.msra.mxu0 0
      %3095 = vmatprep.subr.bf16.mxu0 0
      %3096 = vmatpush1.bf16.msra.mxu0 0
      %3097 = vmatprep.mubr.bf16.mxu0 0
      %3098 = vmatmul.mubr.bf16.gmra.mrb[0].mxu0 %v3054
      %v3099 = vpop.f32.mrb[0].mxu0
      %v3100 = vadd.f32 0.0, %v3099
      %v3101 = vpop.f32.mrb[0].mxu0
      %v3102 = vadd.f32 0.0, %v3101
      %v3103 = vpop.f32.mrb[0].mxu0
      %v3104 = vpop.f32.mrb[0].mxu0
      %3105 = vdwg.mxu0
      %3106 = vmatprep.subr.bf16.mxu0 0
      %3107 = vmatpush1.bf16.msra.mxu0 %v3038
      %3108 = vmatprep.subr.bf16.mxu0 0
      %3109 = vmatpush1.bf16.msra.mxu0 %v3041
      %3110 = vmatprep.subr.bf16.mxu0 0
      %3111 = vmatpush1.bf16.msra.mxu0 %v3044
      %3112 = vmatprep.subr.bf16.mxu0 0
      %3113 = vmatpush1.bf16.msra.mxu0 %v3047
      %3114 = vmatprep.subr.bf16.mxu0 0
      %3115 = vmatpush1.bf16.msra.mxu0 %v3063
      %3116 = vmatprep.subr.bf16.mxu0 0
      %3117 = vmatpush1.bf16.msra.mxu0 0
      %3118 = vmatprep.subr.bf16.mxu0 0
      %3119 = vmatpush1.bf16.msra.mxu0 0
      %3120 = vmatprep.subr.bf16.mxu0 0
      %3121 = vmatpush1.bf16.msra.mxu0 0
      %3122 = vmatprep.subr.bf16.mxu0 0
      %3123 = vmatpush1.bf16.msra.mxu0 0
      %3124 = vmatprep.subr.bf16.mxu0 0
      %3125 = vmatpush1.bf16.msra.mxu0 0
      %3126 = vmatprep.subr.bf16.mxu0 0
      %3127 = vmatpush1.bf16.msra.mxu0 0
      %3128 = vmatprep.subr.bf16.mxu0 0
      %3129 = vmatpush1.bf16.msra.mxu0 0
      %3130 = vmatprep.subr.bf16.mxu0 0
      %3131 = vmatpush1.bf16.msra.mxu0 0
      %3132 = vmatprep.subr.bf16.mxu0 0
      %3133 = vmatpush1.bf16.msra.mxu0 0
      %3134 = vmatprep.subr.bf16.mxu0 0
      %3135 = vmatpush1.bf16.msra.mxu0 0
      %3136 = vmatprep.subr.bf16.mxu0 0
      %3137 = vmatpush1.bf16.msra.mxu0 0
      %3138 = vmatprep.mubr.bf16.mxu0 0
      %3139 = vmatmul.mubr.bf16.gmra.mrb[0].mxu0 %v3054
      %v3140 = vpop.f32.mrb[0].mxu0
      %v3141 = vadd.f32 0.0, %v3140
      %v3142 = vpop.f32.mrb[0].mxu0
      %v3143 = vpop.f32.mrb[0].mxu0
      %v3144 = vpop.f32.mrb[0].mxu0
      %3145 = vdwg.mxu0
      %vm3146 = vcmask 130048
      %3147 = vst.msk [vmem:[%s210] sm:$0xff] %vm3146, %v3100
      %3149 = vrot.lane.b32.xlu0 %v3100, 126
      %v3150 = vpop.permute.xlu0 %3149
      %vm3152 = vcmask 261248
      %3153 = vst.msk [vmem:[%s210] sm:$0xff] %vm3152, %v3150
      %3154 = vrot.lane.b32.xlu0 %v3100, 124
      %v3155 = vpop.permute.xlu0 %3154
      %vm3157 = vcmask 392448
      %3158 = vst.msk [vmem:[%s210] sm:$0xff] %vm3157, %v3155
      %3159 = vrot.lane.b32.xlu0 %v3100, 122
      %v3160 = vpop.permute.xlu0 %3159
      %vm3162 = vcmask 523648
      %3163 = vst.msk [vmem:[%s210] sm:$0xff] %vm3162, %v3160
      %3164 = vrot.lane.b32.xlu0 %v3100, 120
      %v3165 = vpop.permute.xlu0 %3164
      %vm3167 = vcmask 654848
      %3168 = vst.msk [vmem:[%s210] sm:$0xff] %vm3167, %v3165
      %3169 = vrot.lane.b32.xlu0 %v3100, 118
      %v3170 = vpop.permute.xlu0 %3169
      %vm3172 = vcmask 786048
      %3173 = vst.msk [vmem:[%s210] sm:$0xff] %vm3172, %v3170
      %3174 = vrot.lane.b32.xlu0 %v3100, 116
      %v3175 = vpop.permute.xlu0 %3174
      %vm3177 = vcmask 917248
      %3178 = vst.msk [vmem:[%s210] sm:$0xff] %vm3177, %v3175
      %3180 = vrot.lane.b32.xlu0 %v3100, 114
      %v3181 = vpop.permute.xlu0 %3180
      %3182 = vrot.lane.b32.xlu0 %v3102, 114
      %v3183 = vpop.permute.xlu0 %3182
      %vm3184 = vcmask 932864
      %v3185 = vsel %vm3184, %v3181, %v3183
      %vm3187 = vcmask 1048448
      %3188 = vst.msk [vmem:[%s210] sm:$0xff] %vm3187, %v3185
      %3189 = vrot.lane.b32.xlu0 %v3102, 112
      %v3190 = vpop.permute.xlu0 %3189
      %3192 = vst.msk [vmem:[%s210 + $0x8] sm:$0xff] %vm3146, %v3190
      %3193 = vrot.lane.b32.xlu0 %v3102, 110
      %v3194 = vpop.permute.xlu0 %3193
      %3196 = vst.msk [vmem:[%s210 + $0x8] sm:$0xff] %vm3152, %v3194
      %3197 = vrot.lane.b32.xlu0 %v3102, 108
      %v3198 = vpop.permute.xlu0 %3197
      %3200 = vst.msk [vmem:[%s210 + $0x8] sm:$0xff] %vm3157, %v3198
      %3201 = vrot.lane.b32.xlu0 %v3102, 106
      %v3202 = vpop.permute.xlu0 %3201
      %3204 = vst.msk [vmem:[%s210 + $0x8] sm:$0xff] %vm3162, %v3202
      %3205 = vrot.lane.b32.xlu0 %v3102, 104
      %v3206 = vpop.permute.xlu0 %3205
      %3208 = vst.msk [vmem:[%s210 + $0x8] sm:$0xff] %vm3167, %v3206
      %3209 = vrot.lane.b32.xlu0 %v3102, 102
      %v3210 = vpop.permute.xlu0 %3209
      %3212 = vst.msk [vmem:[%s210 + $0x8] sm:$0xff] %vm3172, %v3210
      %3214 = vrot.lane.b32.xlu0 %v3102, 100
      %v3215 = vpop.permute.xlu0 %3214
      %3216 = vrot.lane.b32.xlu0 %v3141, 100
      %v3217 = vpop.permute.xlu0 %3216
      %v3218 = vsel %vm220, %v3215, %v3217
      %3220 = vst.msk [vmem:[%s210 + $0x8] sm:$0xff] %vm3177, %v3218
      %3221 = vrot.lane.b32.xlu0 %v3141, 98
      %v3222 = vpop.permute.xlu0 %3221
      %3224 = vst.msk [vmem:[%s210 + $0x8] sm:$0xff] %vm3187, %v3222
      %p3225 = scmp.lt.s32.totalorder %s16, 1
      %s3226 = scalar_select %p3225, %s16, 1
      %s3227 = smul.addr %s3226, 2
      %s3228 = smul.addr %s3227, 8
      %s3229 = scalar_lea.vmem %s2, %s3228
      %p3230 = scmp.lt.s32.totalorder %s16, 1
      %s3231 = scalar_select %p3230, %s16, 1
      %s3232 = smul.addr %s3231, 8
      %s3233 = scalar_lea.vmem %s3, %s3232
      %p3234 = scmp.lt.s32.totalorder %s16, 1
      %s3235 = scalar_select %p3234, %s16, 1
      %s3236 = smul.addr %s3235, 8
      %s3237 = scalar_lea.vmem %s4, %s3236
      // Predicated region
      $region29: #{radar_ae2_forward.1} parent=27 // pred_check
        %p3238 = pneg %p81
      $region30: #{radar_ae2_forward.1} parent=27 // pred_check_branch
        %3240 = sbr.rel (%p3238) target = $region32
      $region31: #{radar_ae2_forward.1} parent=27 // pred_region
        _
      $region32: #{radar_ae2_forward.1} parent=27 // pred_fallthru
        _
      // Predicated region
      $region33: #{radar_ae2_forward.1} parent=27 // pred_check
        %p3241 = pneg %p107
      $region34: #{radar_ae2_forward.1} parent=27 // pred_check_branch
        %3243 = sbr.rel (%p3241) target = $region36
      $region35: #{radar_ae2_forward.1} parent=27 // pred_region
        _
      $region36: #{radar_ae2_forward.1} parent=27 // pred_fallthru
        _
      // Predicated region
      $region37: #{radar_ae2_forward.1} parent=27 // pred_check
        %p3244 = pneg %p133
      $region38: #{radar_ae2_forward.1} parent=27 // pred_check_branch
        %3246 = sbr.rel (%p3244) target = $region40
      $region39: #{radar_ae2_forward.1} parent=27 // pred_region
        _
      $region40: #{radar_ae2_forward.1} parent=27 // pred_fallthru
        _
    $region28: #{radar_ae2_forward.1} parent=5 // pred_fallthru
      _
    %p3247 = scmp.le.s32.totalorder 2, %s11
    // Predicated region
    $region41: #{radar_ae2_forward.1} parent=5 // pred_check
      %p3248 = pneg %p3247
    $region42: #{radar_ae2_forward.1} parent=5 // pred_check_branch
      %3250 = sbr.rel (%p3248) target = $region44
    $region43: #{radar_ae2_forward.1} parent=5 // pred_region
      %s3251 = ssub.s32 %s11, 2
      // Predicated region
      $region45: #{radar_ae2_forward.1} parent=43 // pred_check
        %p3252 = pneg %p87
      $region46: #{radar_ae2_forward.1} parent=43 // pred_check_branch
        %3254 = sbr.rel (%p3252) target = $region48
      $region47: #{radar_ae2_forward.1} parent=43 // pred_region
        %p3255 = scmp.lt.s32.totalorder %s17, 1
        %s3256 = scalar_select %p3255, %s17, 1
        %s3257 = smul.addr %s3256, 2
        %s3258 = smul.addr %s3257, 8
        %s3259 = scalar_lea.vmem %s2, %s3258
      $region48: #{radar_ae2_forward.1} parent=43 // pred_fallthru
        _
      // Predicated region
      $region49: #{radar_ae2_forward.1} parent=43 // pred_check
        %p3260 = pneg %p113
      $region50: #{radar_ae2_forward.1} parent=43 // pred_check_branch
        %3262 = sbr.rel (%p3260) target = $region52
      $region51: #{radar_ae2_forward.1} parent=43 // pred_region
        %p3263 = scmp.lt.s32.totalorder %s17, 1
        %s3264 = scalar_select %p3263, %s17, 1
        %s3265 = smul.addr %s3264, 8
        %s3266 = scalar_lea.vmem %s3, %s3265
      $region52: #{radar_ae2_forward.1} parent=43 // pred_fallthru
        _
      // Predicated region
      $region53: #{radar_ae2_forward.1} parent=43 // pred_check
        %p3267 = pneg %p139
      $region54: #{radar_ae2_forward.1} parent=43 // pred_check_branch
        %3269 = sbr.rel (%p3267) target = $region56
      $region55: #{radar_ae2_forward.1} parent=43 // pred_region
        %p3270 = scmp.lt.s32.totalorder %s17, 1
        %s3271 = scalar_select %p3270, %s17, 1
        %s3272 = smul.addr %s3271, 8
        %s3273 = scalar_lea.vmem %s4, %s3272
      $region56: #{radar_ae2_forward.1} parent=43 // pred_fallthru
        _
    $region44: #{radar_ae2_forward.1} parent=5 // pred_fallthru
      _
  $region6: #{radar_ae2_forward.1} parent=0 // loop_footer
    %s15 = sadd.s32 1, %s11
  $region7: #{radar_ae2_forward.1} parent=0 // loop_footer_branch
    %10 = sbr.rel target = $region3
  $region8: #{radar_ae2_forward.1} parent=0 // loop_exit
    _

</llo_original>
